<compile_context>
chip_gen: v7x
topology: tpu7x:2x2x1
jax: 0.10.0
libtpu: 0.0.40
codegen_flags: <defaults>
</compile_context>

<pallas_src>
import functools

import jax
import jax.numpy as jnp
from jax.experimental import pallas as pl
from jax.experimental.pallas import tpu as pltpu


def _attn_temporal_kernel(x_ref, wqkv_ref, wproj_ref, bproj_ref, o_ref,
                          qkv_ref, acc_ref, *, num_heads, head_dim):
    TB, T, C = x_ref.shape
    M = TB * T

    # ---- fused QKV projection: one tall MXU matmul, bf16 operands, f32 acc.
    # Result is cast to bf16 and parked in VMEM scratch right away so the f32
    # (M, 3C) value does not stay live across the head loop.
    xf = x_ref[...].reshape(M, C)                       # already bf16
    qkv_ref[...] = jnp.dot(
        xf, wqkv_ref[...], preferred_element_type=jnp.float32).astype(jnp.bfloat16)

    # ---- output accumulator, initialised with the projection bias.
    acc_ref[...] = jnp.broadcast_to(bproj_ref[...].astype(jnp.float32), (M, C))

    # ---- per-head attention + fused output projection.
    # num_heads is small and static; all slices below have static offsets.
    # The 1/sqrt(head_dim) scale is already folded into the q columns of Wqkv.
    for h in range(num_heads):
        lo = h * head_dim
        hi = lo + head_dim
        q_h = qkv_ref[:, lo:hi].reshape(TB, T, head_dim)
        k_h = qkv_ref[:, C + lo:C + hi].reshape(TB, T, head_dim)
        v_h = qkv_ref[:, 2 * C + lo:2 * C + hi].reshape(TB, T, head_dim)

        # Batched over the TB batch tile: (TB, T, T) scores in f32.
        s = jnp.einsum("bqd,bkd->bqk", q_h, k_h,
                       preferred_element_type=jnp.float32)
        s = s - jnp.max(s, axis=-1, keepdims=True)
        p = jnp.exp(s)
        p = p * pl.reciprocal(jnp.sum(p, axis=-1, keepdims=True), approx=True)
        # TODO(synk): attn_drop omitted (p=0.0 -> identity in forward).

        ctx_h = jnp.einsum("bqk,bkd->bqd", p.astype(jnp.bfloat16), v_h,
                           preferred_element_type=jnp.float32)        # (TB, T, hd)

        # Fused output projection: accumulate this head's contribution.
        acc_ref[...] += jnp.dot(
            ctx_h.reshape(M, head_dim).astype(jnp.bfloat16),
            wproj_ref[lo:hi, :],
            preferred_element_type=jnp.float32)

    # TODO(synk): proj_drop omitted (p=0.0 -> identity in forward).
    o_ref[...] = acc_ref[...].reshape(TB, T, C).astype(o_ref.dtype)


def _vmem_estimate_bytes(tb, t, c):
    m = tb * t
    return (2 * m * c * 2          # x tile (bf16), double-buffered
            + 2 * m * c * 4        # out tile (f32), double-buffered
            + 2 * c * 3 * c * 2    # Wqkv (bf16), double-buffered
            + 2 * c * c * 2        # Wproj (bf16), double-buffered
            + m * 3 * c * 2        # qkv scratch (bf16)
            + m * c * 4)           # fused-projection accumulator (f32)


def _pick_block_b(bk, t, c, *, target=256, budget_bytes=20 << 20):
    """Largest divisor of bk that is <= target, fits the VMEM budget, and (when
    possible) keeps the grid length >= 2 (v7x megacore sharding)."""
    best = 1
    for tb in range(1, bk + 1):
        if bk % tb or tb > target:
            continue
        if _vmem_estimate_bytes(tb, t, c) > budget_bytes:
            continue
        if bk >= 2 and tb == bk:
            continue   # keep at least two grid steps
        best = tb
    return best


def attention_temporal(x, params, *, num_heads, block_b=None):
    """x: (B*K, T, C).  params = (w_qkv (C, 3C), w_proj (C, C), b_proj (1, C)).
    Weights are stored (in, out) so the kernel computes x @ W (PyTorch nn.Linear
    stores (out, in) and computes x @ W.T)."""
    BK, T, C = x.shape
    assert C % num_heads == 0
    head_dim = C // num_heads
    scale = head_dim ** (-0.5)

    w_qkv, w_proj, b_proj = params
    assert w_qkv.shape == (C, 3 * C)
    assert w_proj.shape == (C, C)
    assert b_proj.shape == (1, C)

    if block_b is None:
        block_b = _pick_block_b(BK, T, C)
    assert BK % block_b == 0, "batch*K must be divisible by the batch tile"
    grid = (BK // block_b,)
    M = block_b * T

    # Fold the attention scale into the q columns of Wqkv and pre-cast the MXU
    # weights to bf16 once (outside the grid loop).  Bias stays f32.
    col_scale = jnp.concatenate(
        [jnp.full((C,), scale, jnp.float32), jnp.ones((2 * C,), jnp.float32)])
    w_qkv_b = (w_qkv.astype(jnp.float32) * col_scale[None, :]).astype(jnp.bfloat16)
    w_proj_b = w_proj.astype(jnp.bfloat16)
    b_proj_f = b_proj.astype(jnp.float32)

    out_dtype = x.dtype
    x_b = x.astype(jnp.bfloat16)     # MXU path is bf16; halve input DMA bytes.

    kernel = functools.partial(
        _attn_temporal_kernel, num_heads=num_heads, head_dim=head_dim)

    cost = pl.CostEstimate(
        flops=int(2 * BK * T * C * 3 * C                       # qkv projection
                  + 4 * BK * num_heads * T * T * head_dim      # scores + attn @ v
                  + 2 * BK * T * C * C),                       # output projection
        transcendentals=int(BK * num_heads * T * T),
        bytes_accessed=int(x_b.nbytes
                           + BK * T * C * jnp.dtype(out_dtype).itemsize
                           + w_qkv_b.nbytes + w_proj_b.nbytes + b_proj_f.nbytes))

    vmem_limit = int(min(max(2 * _vmem_estimate_bytes(block_b, T, C) + (8 << 20),
                             32 << 20), 48 << 20))

    return pl.pallas_call(
        kernel,
        out_shape=jax.ShapeDtypeStruct((BK, T, C), out_dtype),
        grid_spec=pltpu.PrefetchScalarGridSpec(
            num_scalar_prefetch=0,
            grid=grid,
            in_specs=[
                pl.BlockSpec((block_b, T, C), lambda b: (b, 0, 0)),   # x tile (bf16)
                # Constant index_map -> same weight block reused every step.
                pl.BlockSpec((C, 3 * C), lambda b: (0, 0)),           # Wqkv (bf16)
                pl.BlockSpec((C, C), lambda b: (0, 0)),               # Wproj (bf16)
                pl.BlockSpec((1, C), lambda b: (0, 0)),               # proj bias (f32)
            ],
            out_specs=pl.BlockSpec((block_b, T, C), lambda b: (b, 0, 0)),
            scratch_shapes=[
                pltpu.VMEM((M, 3 * C), jnp.bfloat16),   # qkv parked in bf16
                pltpu.VMEM((M, C), jnp.float32),        # fused-projection acc
            ],
        ),
        compiler_params=pltpu.CompilerParams(
            dimension_semantics=("parallel",),
            vmem_limit_bytes=vmem_limit),
        cost_estimate=cost,
    )(x_b, w_qkv_b, w_proj_b, b_proj_f)


def _reference(x, params, *, num_heads):
    """Pure-JAX (f32) reference mirroring the PyTorch forward."""
    w_qkv, w_proj, b_proj = params
    BK, T, C = x.shape
    hd = C // num_heads
    scale = hd ** (-0.5)
    qkv = x @ w_qkv                                            # (BK, T, 3C)
    qkv = qkv.reshape(BK, T, 3, num_heads, hd).transpose(2, 0, 3, 1, 4)
    q, k, v = qkv[0], qkv[1], qkv[2]                           # (BK, H, T, hd)
    attn = jnp.einsum("bhqd,bhkd->bhqk", q, k) * scale
    attn = jax.nn.softmax(attn, axis=-1)
    y = jnp.einsum("bhqk,bhkd->bhqd", attn, v)
    y = y.transpose(0, 2, 1, 3).reshape(BK, T, C)
    return y @ w_proj + b_proj[0]


if __name__ == "__main__":
    # Small shapes consistent with the module: x is (B*K, T, C).
    B, K = 2, 8
    BK = B * K            # 16
    T = 8                 # temporal length (frames)
    C = 64
    num_heads = 4         # head_dim = 16

    key = jax.random.PRNGKey(0)
    k_x, k_w1, k_w2, k_b = jax.random.split(key, 4)

    x = jax.random.normal(k_x, (BK, T, C), dtype=jnp.float32)

    std = C ** (-0.5)
    w_qkv = jax.random.normal(k_w1, (C, 3 * C), dtype=jnp.float32) * std
    w_proj = jax.random.normal(k_w2, (C, C), dtype=jnp.float32) * std
    b_proj = jax.random.normal(k_b, (1, C), dtype=jnp.float32) * 0.01
    params = (w_qkv, w_proj, b_proj)

    out = attention_temporal(x, params, num_heads=num_heads)   # auto block_b=8, grid=(2,)
    out = jax.block_until_ready(out)

    ref = _reference(x, params, num_heads=num_heads)
    assert out.shape == (BK, T, C)
    # bf16 MXU operands with f32 accumulation -> loose-ish tolerance.
    assert jnp.allclose(out, ref, atol=5e-2, rtol=5e-2), "mismatch vs reference"

    print("KERNEL_OK")
</pallas_src>

<mosaic_0001>
module attributes {stable_mosaic.version = 11 : i64} {
  func.func @_attn_temporal_kernel(%arg0: i32, %arg1: memref<8x8x64xbf16, #tpu.memory_space<vmem>>, %arg2: memref<64x192xbf16, #tpu.memory_space<vmem>>, %arg3: memref<64x64xbf16, #tpu.memory_space<vmem>>, %arg4: memref<1x64xf32, #tpu.memory_space<vmem>>, %arg5: memref<8x8x64xf32, #tpu.memory_space<vmem>>, %arg6: memref<64x192xbf16, #tpu.memory_space<vmem>>, %arg7: memref<64x64xf32, #tpu.memory_space<vmem>>) attributes {dimension_semantics = [#tpu.dimension_semantics<parallel>], iteration_bounds = array<i64: 2>, scalar_prefetch = 0 : i64, scratch_operands = 2 : i64, tpu.core_type = #tpu.core_type<tc>, window_params = [{transform_indices = @transform_0, window_bounds = array<i64: 8, 8, 64>}, {pipeline_mode = #tpu.pipeline_mode<synchronous>, transform_indices = @transform_1, window_bounds = array<i64: 64, 192>}, {pipeline_mode = #tpu.pipeline_mode<synchronous>, transform_indices = @transform_2, window_bounds = array<i64: 64, 64>}, {pipeline_mode = #tpu.pipeline_mode<synchronous>, transform_indices = @transform_3, window_bounds = array<i64: 1, 64>}, {transform_indices = @transform_4, window_bounds = array<i64: 8, 8, 64>}]} {
    %c0 = arith.constant 0 : index
    %c0_0 = arith.constant 0 : index
    %c0_1 = arith.constant 0 : index
    %0 = vector.load %arg1[%c0, %c0_0, %c0_1] : memref<8x8x64xbf16, #tpu.memory_space<vmem>>, vector<8x8x64xbf16>
    %1 = vector.shape_cast %0 : vector<8x8x64xbf16> to vector<64x64xbf16>
    %c0_2 = arith.constant 0 : index
    %c0_3 = arith.constant 0 : index
    %2 = vector.load %arg2[%c0_2, %c0_3] : memref<64x192xbf16, #tpu.memory_space<vmem>>, vector<64x192xbf16>
    %cst = arith.constant dense<0.000000e+00> : vector<64x192xf32>
    %3 = tpu.matmul %1, %2, %cst {dimension_numbers = #tpu.dot_dimension_numbers<[1], [0], [0], [1], [0, 0, 1, 1], [], []>} : vector<64x64xbf16>, vector<64x192xbf16>, vector<64x192xf32> -> vector<64x192xf32>
    %4 = arith.truncf %3 : vector<64x192xf32> to vector<64x192xbf16>
    %c0_4 = arith.constant 0 : index
    %c0_5 = arith.constant 0 : index
    %5 = vector.load %arg6[%c0_4, %c0_5] : memref<64x192xbf16, #tpu.memory_space<vmem>>, vector<64x192xbf16>
    tpu.vector_store %arg6[%c0_4, %c0_5], %4 {strides = array<i32>} : memref<64x192xbf16, #tpu.memory_space<vmem>>, vector<64x192xbf16>,
    %c0_6 = arith.constant 0 : index
    %c0_7 = arith.constant 0 : index
    %6 = vector.load %arg4[%c0_6, %c0_7] : memref<1x64xf32, #tpu.memory_space<vmem>>, vector<1x64xf32>
    %7 = vector.shape_cast %6 : vector<1x64xf32> to vector<1x64xf32>
    %8 = vector.broadcast %7 : vector<1x64xf32> to vector<64x64xf32>
    %c0_8 = arith.constant 0 : index
    %c0_9 = arith.constant 0 : index
    %9 = vector.load %arg7[%c0_8, %c0_9] : memref<64x64xf32, #tpu.memory_space<vmem>>, vector<64x64xf32>
    tpu.vector_store %arg7[%c0_8, %c0_9], %8 {strides = array<i32>} : memref<64x64xf32, #tpu.memory_space<vmem>>, vector<64x64xf32>,
    %c0_10 = arith.constant 0 : index
    %c0_11 = arith.constant 0 : index
    %10 = vector.load %arg6[%c0_10, %c0_11] : memref<64x192xbf16, #tpu.memory_space<vmem>>, vector<64x16xbf16>
    %11 = vector.shape_cast %10 : vector<64x16xbf16> to vector<8x8x16xbf16>
    %c0_12 = arith.constant 0 : index
    %c64 = arith.constant 64 : index
    %12 = vector.load %arg6[%c0_12, %c64] : memref<64x192xbf16, #tpu.memory_space<vmem>>, vector<64x16xbf16>
    %13 = vector.shape_cast %12 : vector<64x16xbf16> to vector<8x8x16xbf16>
    %c0_13 = arith.constant 0 : index
    %c128 = arith.constant 128 : index
    %14 = vector.load %arg6[%c0_13, %c128] : memref<64x192xbf16, #tpu.memory_space<vmem>>, vector<64x16xbf16>
    %15 = vector.shape_cast %14 : vector<64x16xbf16> to vector<8x8x16xbf16>
    "tpu.trace_start"() <{level = 10 : i32, message = "bqd,bkd->bqk"}> : () -> ()
    %cst_14 = arith.constant dense<0.000000e+00> : vector<8x8x8xf32>
    %16 = tpu.matmul %11, %13, %cst_14 {dimension_numbers = #tpu.dot_dimension_numbers<[2], [2], [1], [1], [0, 0, 0, 1, 1, 1], [0], [0]>} : vector<8x8x16xbf16>, vector<8x8x16xbf16>, vector<8x8x8xf32> -> vector<8x8x8xf32>
    "tpu.trace_stop"() : () -> ()
    %cst_15 = arith.constant dense<0xFF800000> : vector<8x8xf32>
    %17 = vector.multi_reduction <maximumf>, %16, %cst_15 [2] : vector<8x8x8xf32> to vector<8x8xf32>
    %18 = vector.shape_cast %17 : vector<8x8xf32> to vector<8x8x1xf32>
    %19 = vector.broadcast %18 : vector<8x8x1xf32> to vector<8x8x8xf32>
    %20 = arith.subf %16, %19 : vector<8x8x8xf32>
    %21 = math.exp %20 : vector<8x8x8xf32>
    %cst_16 = arith.constant dense<0.000000e+00> : vector<8x8xf32>
    %22 = vector.multi_reduction <add>, %21, %cst_16 [2] : vector<8x8x8xf32> to vector<8x8xf32>
    %23 = vector.shape_cast %22 : vector<8x8xf32> to vector<8x8x1xf32>
    %24 = tpu.reciprocal %23 {approx = true} : vector<8x8x1xf32> -> vector<8x8x1xf32>
    %25 = vector.broadcast %24 : vector<8x8x1xf32> to vector<8x8x8xf32>
    %26 = arith.mulf %21, %25 : vector<8x8x8xf32>
    %27 = arith.truncf %26 : vector<8x8x8xf32> to vector<8x8x8xbf16>
    "tpu.trace_start"() <{level = 10 : i32, message = "bqk,bkd->bqd"}> : () -> ()
    %cst_17 = arith.constant dense<0.000000e+00> : vector<8x8x16xf32>
    %28 = tpu.matmul %27, %15, %cst_17 {dimension_numbers = #tpu.dot_dimension_numbers<[2], [1], [1], [2], [0, 0, 0, 1, 1, 2], [0], [0]>} : vector<8x8x8xbf16>, vector<8x8x16xbf16>, vector<8x8x16xf32> -> vector<8x8x16xf32>
    "tpu.trace_stop"() : () -> ()
    %c0_18 = arith.constant 0 : index
    %c0_19 = arith.constant 0 : index
    %29 = vector.load %arg7[%c0_18, %c0_19] : memref<64x64xf32, #tpu.memory_space<vmem>>, vector<64x64xf32>
    %30 = vector.shape_cast %28 : vector<8x8x16xf32> to vector<64x16xf32>
    %31 = arith.truncf %30 : vector<64x16xf32> to vector<64x16xbf16>
    %c0_20 = arith.constant 0 : index
    %c0_21 = arith.constant 0 : index
    %32 = vector.load %arg3[%c0_20, %c0_21] : memref<64x64xbf16, #tpu.memory_space<vmem>>, vector<16x64xbf16>
    %cst_22 = arith.constant dense<0.000000e+00> : vector<64x64xf32>
    %33 = tpu.matmul %31, %32, %cst_22 {dimension_numbers = #tpu.dot_dimension_numbers<[1], [0], [0], [1], [0, 0, 1, 1], [], []>} : vector<64x16xbf16>, vector<16x64xbf16>, vector<64x64xf32> -> vector<64x64xf32>
    %34 = arith.addf %29, %33 : vector<64x64xf32>
    %c0_23 = arith.constant 0 : index
    %c0_24 = arith.constant 0 : index
    %35 = vector.load %arg7[%c0_23, %c0_24] : memref<64x64xf32, #tpu.memory_space<vmem>>, vector<64x64xf32>
    tpu.vector_store %arg7[%c0_23, %c0_24], %34 {strides = array<i32>} : memref<64x64xf32, #tpu.memory_space<vmem>>, vector<64x64xf32>,
    %c0_25 = arith.constant 0 : index
    %c16 = arith.constant 16 : index
    %36 = vector.load %arg6[%c0_25, %c16] : memref<64x192xbf16, #tpu.memory_space<vmem>>, vector<64x16xbf16>
    %37 = vector.shape_cast %36 : vector<64x16xbf16> to vector<8x8x16xbf16>
    %c0_26 = arith.constant 0 : index
    %c80 = arith.constant 80 : index
    %38 = vector.load %arg6[%c0_26, %c80] : memref<64x192xbf16, #tpu.memory_space<vmem>>, vector<64x16xbf16>
    %39 = vector.shape_cast %38 : vector<64x16xbf16> to vector<8x8x16xbf16>
    %c0_27 = arith.constant 0 : index
    %c144 = arith.constant 144 : index
    %40 = vector.load %arg6[%c0_27, %c144] : memref<64x192xbf16, #tpu.memory_space<vmem>>, vector<64x16xbf16>
    %41 = vector.shape_cast %40 : vector<64x16xbf16> to vector<8x8x16xbf16>
    "tpu.trace_start"() <{level = 10 : i32, message = "bqd,bkd->bqk"}> : () -> ()
    %cst_28 = arith.constant dense<0.000000e+00> : vector<8x8x8xf32>
    %42 = tpu.matmul %37, %39, %cst_28 {dimension_numbers = #tpu.dot_dimension_numbers<[2], [2], [1], [1], [0, 0, 0, 1, 1, 1], [0], [0]>} : vector<8x8x16xbf16>, vector<8x8x16xbf16>, vector<8x8x8xf32> -> vector<8x8x8xf32>
    "tpu.trace_stop"() : () -> ()
    %cst_29 = arith.constant dense<0xFF800000> : vector<8x8xf32>
    %43 = vector.multi_reduction <maximumf>, %42, %cst_29 [2] : vector<8x8x8xf32> to vector<8x8xf32>
    %44 = vector.shape_cast %43 : vector<8x8xf32> to vector<8x8x1xf32>
    %45 = vector.broadcast %44 : vector<8x8x1xf32> to vector<8x8x8xf32>
    %46 = arith.subf %42, %45 : vector<8x8x8xf32>
    %47 = math.exp %46 : vector<8x8x8xf32>
    %cst_30 = arith.constant dense<0.000000e+00> : vector<8x8xf32>
    %48 = vector.multi_reduction <add>, %47, %cst_30 [2] : vector<8x8x8xf32> to vector<8x8xf32>
    %49 = vector.shape_cast %48 : vector<8x8xf32> to vector<8x8x1xf32>
    %50 = tpu.reciprocal %49 {approx = true} : vector<8x8x1xf32> -> vector<8x8x1xf32>
    %51 = vector.broadcast %50 : vector<8x8x1xf32> to vector<8x8x8xf32>
    %52 = arith.mulf %47, %51 : vector<8x8x8xf32>
    %53 = arith.truncf %52 : vector<8x8x8xf32> to vector<8x8x8xbf16>
    "tpu.trace_start"() <{level = 10 : i32, message = "bqk,bkd->bqd"}> : () -> ()
    %cst_31 = arith.constant dense<0.000000e+00> : vector<8x8x16xf32>
    %54 = tpu.matmul %53, %41, %cst_31 {dimension_numbers = #tpu.dot_dimension_numbers<[2], [1], [1], [2], [0, 0, 0, 1, 1, 2], [0], [0]>} : vector<8x8x8xbf16>, vector<8x8x16xbf16>, vector<8x8x16xf32> -> vector<8x8x16xf32>
    "tpu.trace_stop"() : () -> ()
    %c0_32 = arith.constant 0 : index
    %c0_33 = arith.constant 0 : index
    %55 = vector.load %arg7[%c0_32, %c0_33] : memref<64x64xf32, #tpu.memory_space<vmem>>, vector<64x64xf32>
    %56 = vector.shape_cast %54 : vector<8x8x16xf32> to vector<64x16xf32>
    %57 = arith.truncf %56 : vector<64x16xf32> to vector<64x16xbf16>
    %c16_34 = arith.constant 16 : index
    %c0_35 = arith.constant 0 : index
    %58 = vector.load %arg3[%c16_34, %c0_35] : memref<64x64xbf16, #tpu.memory_space<vmem>>, vector<16x64xbf16>
    %cst_36 = arith.constant dense<0.000000e+00> : vector<64x64xf32>
    %59 = tpu.matmul %57, %58, %cst_36 {dimension_numbers = #tpu.dot_dimension_numbers<[1], [0], [0], [1], [0, 0, 1, 1], [], []>} : vector<64x16xbf16>, vector<16x64xbf16>, vector<64x64xf32> -> vector<64x64xf32>
    %60 = arith.addf %55, %59 : vector<64x64xf32>
    %c0_37 = arith.constant 0 : index
    %c0_38 = arith.constant 0 : index
    %61 = vector.load %arg7[%c0_37, %c0_38] : memref<64x64xf32, #tpu.memory_space<vmem>>, vector<64x64xf32>
    tpu.vector_store %arg7[%c0_37, %c0_38], %60 {strides = array<i32>} : memref<64x64xf32, #tpu.memory_space<vmem>>, vector<64x64xf32>,
    %c0_39 = arith.constant 0 : index
    %c32 = arith.constant 32 : index
    %62 = vector.load %arg6[%c0_39, %c32] : memref<64x192xbf16, #tpu.memory_space<vmem>>, vector<64x16xbf16>
    %63 = vector.shape_cast %62 : vector<64x16xbf16> to vector<8x8x16xbf16>
    %c0_40 = arith.constant 0 : index
    %c96 = arith.constant 96 : index
    %64 = vector.load %arg6[%c0_40, %c96] : memref<64x192xbf16, #tpu.memory_space<vmem>>, vector<64x16xbf16>
    %65 = vector.shape_cast %64 : vector<64x16xbf16> to vector<8x8x16xbf16>
    %c0_41 = arith.constant 0 : index
    %c160 = arith.constant 160 : index
    %66 = vector.load %arg6[%c0_41, %c160] : memref<64x192xbf16, #tpu.memory_space<vmem>>, vector<64x16xbf16>
    %67 = vector.shape_cast %66 : vector<64x16xbf16> to vector<8x8x16xbf16>
    "tpu.trace_start"() <{level = 10 : i32, message = "bqd,bkd->bqk"}> : () -> ()
    %cst_42 = arith.constant dense<0.000000e+00> : vector<8x8x8xf32>
    %68 = tpu.matmul %63, %65, %cst_42 {dimension_numbers = #tpu.dot_dimension_numbers<[2], [2], [1], [1], [0, 0, 0, 1, 1, 1], [0], [0]>} : vector<8x8x16xbf16>, vector<8x8x16xbf16>, vector<8x8x8xf32> -> vector<8x8x8xf32>
    "tpu.trace_stop"() : () -> ()
    %cst_43 = arith.constant dense<0xFF800000> : vector<8x8xf32>
    %69 = vector.multi_reduction <maximumf>, %68, %cst_43 [2] : vector<8x8x8xf32> to vector<8x8xf32>
    %70 = vector.shape_cast %69 : vector<8x8xf32> to vector<8x8x1xf32>
    %71 = vector.broadcast %70 : vector<8x8x1xf32> to vector<8x8x8xf32>
    %72 = arith.subf %68, %71 : vector<8x8x8xf32>
    %73 = math.exp %72 : vector<8x8x8xf32>
    %cst_44 = arith.constant dense<0.000000e+00> : vector<8x8xf32>
    %74 = vector.multi_reduction <add>, %73, %cst_44 [2] : vector<8x8x8xf32> to vector<8x8xf32>
    %75 = vector.shape_cast %74 : vector<8x8xf32> to vector<8x8x1xf32>
    %76 = tpu.reciprocal %75 {approx = true} : vector<8x8x1xf32> -> vector<8x8x1xf32>
    %77 = vector.broadcast %76 : vector<8x8x1xf32> to vector<8x8x8xf32>
    %78 = arith.mulf %73, %77 : vector<8x8x8xf32>
    %79 = arith.truncf %78 : vector<8x8x8xf32> to vector<8x8x8xbf16>
    "tpu.trace_start"() <{level = 10 : i32, message = "bqk,bkd->bqd"}> : () -> ()
    %cst_45 = arith.constant dense<0.000000e+00> : vector<8x8x16xf32>
    %80 = tpu.matmul %79, %67, %cst_45 {dimension_numbers = #tpu.dot_dimension_numbers<[2], [1], [1], [2], [0, 0, 0, 1, 1, 2], [0], [0]>} : vector<8x8x8xbf16>, vector<8x8x16xbf16>, vector<8x8x16xf32> -> vector<8x8x16xf32>
    "tpu.trace_stop"() : () -> ()
    %c0_46 = arith.constant 0 : index
    %c0_47 = arith.constant 0 : index
    %81 = vector.load %arg7[%c0_46, %c0_47] : memref<64x64xf32, #tpu.memory_space<vmem>>, vector<64x64xf32>
    %82 = vector.shape_cast %80 : vector<8x8x16xf32> to vector<64x16xf32>
    %83 = arith.truncf %82 : vector<64x16xf32> to vector<64x16xbf16>
    %c32_48 = arith.constant 32 : index
    %c0_49 = arith.constant 0 : index
    %84 = vector.load %arg3[%c32_48, %c0_49] : memref<64x64xbf16, #tpu.memory_space<vmem>>, vector<16x64xbf16>
    %cst_50 = arith.constant dense<0.000000e+00> : vector<64x64xf32>
    %85 = tpu.matmul %83, %84, %cst_50 {dimension_numbers = #tpu.dot_dimension_numbers<[1], [0], [0], [1], [0, 0, 1, 1], [], []>} : vector<64x16xbf16>, vector<16x64xbf16>, vector<64x64xf32> -> vector<64x64xf32>
    %86 = arith.addf %81, %85 : vector<64x64xf32>
    %c0_51 = arith.constant 0 : index
    %c0_52 = arith.constant 0 : index
    %87 = vector.load %arg7[%c0_51, %c0_52] : memref<64x64xf32, #tpu.memory_space<vmem>>, vector<64x64xf32>
    tpu.vector_store %arg7[%c0_51, %c0_52], %86 {strides = array<i32>} : memref<64x64xf32, #tpu.memory_space<vmem>>, vector<64x64xf32>,
    %c0_53 = arith.constant 0 : index
    %c48 = arith.constant 48 : index
    %88 = vector.load %arg6[%c0_53, %c48] : memref<64x192xbf16, #tpu.memory_space<vmem>>, vector<64x16xbf16>
    %89 = vector.shape_cast %88 : vector<64x16xbf16> to vector<8x8x16xbf16>
    %c0_54 = arith.constant 0 : index
    %c112 = arith.constant 112 : index
    %90 = vector.load %arg6[%c0_54, %c112] : memref<64x192xbf16, #tpu.memory_space<vmem>>, vector<64x16xbf16>
    %91 = vector.shape_cast %90 : vector<64x16xbf16> to vector<8x8x16xbf16>
    %c0_55 = arith.constant 0 : index
    %c176 = arith.constant 176 : index
    %92 = vector.load %arg6[%c0_55, %c176] : memref<64x192xbf16, #tpu.memory_space<vmem>>, vector<64x16xbf16>
    %93 = vector.shape_cast %92 : vector<64x16xbf16> to vector<8x8x16xbf16>
    "tpu.trace_start"() <{level = 10 : i32, message = "bqd,bkd->bqk"}> : () -> ()
    %cst_56 = arith.constant dense<0.000000e+00> : vector<8x8x8xf32>
    %94 = tpu.matmul %89, %91, %cst_56 {dimension_numbers = #tpu.dot_dimension_numbers<[2], [2], [1], [1], [0, 0, 0, 1, 1, 1], [0], [0]>} : vector<8x8x16xbf16>, vector<8x8x16xbf16>, vector<8x8x8xf32> -> vector<8x8x8xf32>
    "tpu.trace_stop"() : () -> ()
    %cst_57 = arith.constant dense<0xFF800000> : vector<8x8xf32>
    %95 = vector.multi_reduction <maximumf>, %94, %cst_57 [2] : vector<8x8x8xf32> to vector<8x8xf32>
    %96 = vector.shape_cast %95 : vector<8x8xf32> to vector<8x8x1xf32>
    %97 = vector.broadcast %96 : vector<8x8x1xf32> to vector<8x8x8xf32>
    %98 = arith.subf %94, %97 : vector<8x8x8xf32>
    %99 = math.exp %98 : vector<8x8x8xf32>
    %cst_58 = arith.constant dense<0.000000e+00> : vector<8x8xf32>
    %100 = vector.multi_reduction <add>, %99, %cst_58 [2] : vector<8x8x8xf32> to vector<8x8xf32>
    %101 = vector.shape_cast %100 : vector<8x8xf32> to vector<8x8x1xf32>
    %102 = tpu.reciprocal %101 {approx = true} : vector<8x8x1xf32> -> vector<8x8x1xf32>
    %103 = vector.broadcast %102 : vector<8x8x1xf32> to vector<8x8x8xf32>
    %104 = arith.mulf %99, %103 : vector<8x8x8xf32>
    %105 = arith.truncf %104 : vector<8x8x8xf32> to vector<8x8x8xbf16>
    "tpu.trace_start"() <{level = 10 : i32, message = "bqk,bkd->bqd"}> : () -> ()
    %cst_59 = arith.constant dense<0.000000e+00> : vector<8x8x16xf32>
    %106 = tpu.matmul %105, %93, %cst_59 {dimension_numbers = #tpu.dot_dimension_numbers<[2], [1], [1], [2], [0, 0, 0, 1, 1, 2], [0], [0]>} : vector<8x8x8xbf16>, vector<8x8x16xbf16>, vector<8x8x16xf32> -> vector<8x8x16xf32>
    "tpu.trace_stop"() : () -> ()
    %c0_60 = arith.constant 0 : index
    %c0_61 = arith.constant 0 : index
    %107 = vector.load %arg7[%c0_60, %c0_61] : memref<64x64xf32, #tpu.memory_space<vmem>>, vector<64x64xf32>
    %108 = vector.shape_cast %106 : vector<8x8x16xf32> to vector<64x16xf32>
    %109 = arith.truncf %108 : vector<64x16xf32> to vector<64x16xbf16>
    %c48_62 = arith.constant 48 : index
    %c0_63 = arith.constant 0 : index
    %110 = vector.load %arg3[%c48_62, %c0_63] : memref<64x64xbf16, #tpu.memory_space<vmem>>, vector<16x64xbf16>
    %cst_64 = arith.constant dense<0.000000e+00> : vector<64x64xf32>
    %111 = tpu.matmul %109, %110, %cst_64 {dimension_numbers = #tpu.dot_dimension_numbers<[1], [0], [0], [1], [0, 0, 1, 1], [], []>} : vector<64x16xbf16>, vector<16x64xbf16>, vector<64x64xf32> -> vector<64x64xf32>
    %112 = arith.addf %107, %111 : vector<64x64xf32>
    %c0_65 = arith.constant 0 : index
    %c0_66 = arith.constant 0 : index
    %113 = vector.load %arg7[%c0_65, %c0_66] : memref<64x64xf32, #tpu.memory_space<vmem>>, vector<64x64xf32>
    tpu.vector_store %arg7[%c0_65, %c0_66], %112 {strides = array<i32>} : memref<64x64xf32, #tpu.memory_space<vmem>>, vector<64x64xf32>,
    %c0_67 = arith.constant 0 : index
    %c0_68 = arith.constant 0 : index
    %114 = vector.load %arg7[%c0_67, %c0_68] : memref<64x64xf32, #tpu.memory_space<vmem>>, vector<64x64xf32>
    %115 = vector.shape_cast %114 : vector<64x64xf32> to vector<8x8x64xf32>
    %c0_69 = arith.constant 0 : index
    %c0_70 = arith.constant 0 : index
    %c0_71 = arith.constant 0 : index
    %116 = vector.load %arg5[%c0_69, %c0_70, %c0_71] : memref<8x8x64xf32, #tpu.memory_space<vmem>>, vector<8x8x64xf32>
    tpu.vector_store %arg5[%c0_69, %c0_70, %c0_71], %115 {strides = array<i32>} : memref<8x8x64xf32, #tpu.memory_space<vmem>>, vector<8x8x64xf32>,
    return
  }
  func.func @transform_0(%arg0: i32) -> (i32, i32, i32) {
    %c0_i32 = arith.constant 0 : i32
    %c0_i32_0 = arith.constant 0 : i32
    %c0_i32_1 = arith.constant 0 : i32
    return %arg0, %c0_i32, %c0_i32_0 : i32, i32, i32
  }
  func.func @transform_1(%arg0: i32) -> (i32, i32) {
    %c0_i32 = arith.constant 0 : i32
    %c0_i32_0 = arith.constant 0 : i32
    %c0_i32_1 = arith.constant 0 : i32
    return %c0_i32, %c0_i32_0 : i32, i32
  }
  func.func @transform_2(%arg0: i32) -> (i32, i32) {
    %c0_i32 = arith.constant 0 : i32
    %c0_i32_0 = arith.constant 0 : i32
    %c0_i32_1 = arith.constant 0 : i32
    return %c0_i32, %c0_i32_0 : i32, i32
  }
  func.func @transform_3(%arg0: i32) -> (i32, i32) {
    %c0_i32 = arith.constant 0 : i32
    %c0_i32_0 = arith.constant 0 : i32
    %c0_i32_1 = arith.constant 0 : i32
    return %c0_i32, %c0_i32_0 : i32, i32
  }
  func.func @transform_4(%arg0: i32) -> (i32, i32, i32) {
    %c0_i32 = arith.constant 0 : i32
    %c0_i32_0 = arith.constant 0 : i32
    %c0_i32_1 = arith.constant 0 : i32
    return %arg0, %c0_i32, %c0_i32_0 : i32, i32, i32
  }
}

</mosaic_0001>

<llo_original>
// kernel: tpu_custom_call.1
$region0: #{tpu_custom_call.1}
  #allocation0 [shape = 'u32[]', space=smem, size = 0x4, offset = 0x4, fixed_abs, tag = 'smem constant byte address 0x4 - core index']
  #allocation1 [shape = 'u32[144,128]{1,0:T(1,128)}', space=vmem, size = 0x12000, scoped, tag = 'internal scratch']
  #allocation2 [shape = 'bf16[64,192]{1,0:T(16,128)(2,1)}', space=vmem, size = 0x8000, scoped, tag = 'scratch operand']
  #allocation3 [shape = 'f32[64,64]{1,0:T(8,128)}', space=vmem, size = 0x8000, scoped, tag = 'scratch operand']
  %s0 = inlined_call_operand.hbm [shape: bf16[16,8,64], index: 0, kind: input, shape index: {}]
  %s1 = inlined_call_operand.hbm [shape: bf16[64,192], index: 1, kind: input, shape index: {}]
  %s2 = inlined_call_operand.hbm [shape: bf16[64,64], index: 2, kind: input, shape index: {}]
  %s3 = inlined_call_operand.vmem [shape: f32[1,64], index: 3, kind: input, shape index: {}]
  %s4 = inlined_call_operand.hbm [shape: f32[16,8,64], index: 4, kind: output, shape index: {}]
  %s5 = sld [smem:[#allocation0]]
  $region61: #{tpu_custom_call.1} parent=0
    _
  %s7 = ssub.s32 1, %s5
  %s8 = scalar_select 0, %s7, %s5
  $region1: #{tpu_custom_call.1} parent=0
    #allocation4 [shape = 'u8[32768]{0}', space=vmem, size = 0x8000, scoped, tag = 'input window, operand 0']
    #allocation5 [shape = 's32[2]{0}', space=sflag, size = 0x8, scoped, tag = 'scoped memory for tpu_custom_call.1']
    #allocation6 [shape = 's32[2]{0}', space=sflag, size = 0x8, scoped, tag = 'scoped memory for tpu_custom_call.1']
    #allocation7 [shape = 'u8[32768]{0}', space=vmem, size = 0x8000, scoped, tag = 'input window, operand 1, single buffered']
    #allocation8 [shape = 's32[1]{0}', space=sflag, size = 0x4, scoped, tag = 'scoped memory for tpu_custom_call.1']
    #allocation9 [shape = 'u8[16384]{0}', space=vmem, size = 0x4000, scoped, tag = 'input window, operand 2, single buffered']
    #allocation10 [shape = 'u8[65536]{0}', space=vmem, size = 0x10000, scoped, tag = 'output window, operand 0']
    %9 = vsyncpa [#allocation5], 0
    %s10 = scalar_lea.sflag [#allocation5], 1
    %11 = vsyncpa %s10, 0
    %12 = vsyncpa [#allocation8], 0
    %13 = vsyncpa [#allocation6], 0
    %s14 = scalar_lea.sflag [#allocation6], 1
    %15 = vsyncpa %s14, 0
    loop: start=0, step=1, limit=4
    $region2: #{tpu_custom_call.1} parent=1 // loop_pre_header
      _
    $region3: #{tpu_custom_call.1} parent=1 // loop_header
      %s17 = sphi 0, %s21
      %p18 = scmp.ge.s32.totalorder %s17, 4
      %s27 = sphi 0, %s29
      %s30 = sphi 0, %s27
      %s31 = sphi 0, %s30
      %s47 = sphi 0, %s31
      %s51 = sphi 0, %s51
      %s53 = sphi 0, %s51
      %s54 = sphi 0, %s53
      %s68 = sphi 0, %s54
      %s72 = sphi 0, %s72
      %s74 = sphi 0, %s72
      %s75 = sphi 0, %s74
      %s89 = sphi 0, %s75
      %s93 = sphi 0, %s93
      %s95 = sphi 0, %s93
      %s96 = sphi 0, %s95
      %s110 = sphi 0, %s96
      %s116 = sphi 0, %s118
      %s119 = sphi 0, %s116
      %s120 = sphi 0, %s119
      %s136 = sphi 0, %s120
    $region4: #{tpu_custom_call.1} parent=1 // loop_header_branch
      %20 = sbr.rel (%p18) target = $region8
    $region5: #{tpu_custom_call.1} parent=1 // loop_body
      %s22 = ssub.s32 %s17, 1
      %s23 = ssub.s32 %s17, 2
      %s24 = sadd.s32 %s17, 1
      %s25 = ssub.s32 %s17, %s24
      %p26 = scmp.eq.s32.totalorder %s25, 0
      %s28 = sadd.s32 %s27, 1
      %s29 = scalar_select %p26, %s27, %s28
      %p32 = pneg %p26
      %p33 = scmp.eq.s32.totalorder %s17, 1
      %p34 = por %p32, %p33
      %p35 = scmp.ne.s32.totalorder %s27, %s30
      %p36 = scmp.eq.s32.totalorder %s17, 0
      %p37 = por %p35, %p36
      %p38 = scmp.ne.s32.totalorder %s27, %s30
      %p39 = scmp.eq.s32.totalorder %s22, 1
      %p40 = por %p38, %p39
      %p41 = scmp.ne.s32.totalorder %s30, %s31
      %p42 = scmp.eq.s32.totalorder %s22, 0
      %p43 = por %p41, %p42
      %p44 = scmp.ne.s32.totalorder %s30, %s31
      %p45 = scmp.eq.s32.totalorder %s23, 1
      %p46 = por %p44, %p45
      %p48 = scmp.ne.s32.totalorder %s31, %s47
      %p49 = scmp.eq.s32.totalorder %s23, 0
      %p50 = por %p48, %p49
      %s52 = sadd.s32 %s51, 1
      %p55 = scmp.eq.s32.totalorder %s17, 1
      %p56 = scmp.ne.s32.totalorder %s51, %s53
      %p57 = scmp.eq.s32.totalorder %s17, 0
      %p58 = por %p56, %p57
      %p59 = scmp.ne.s32.totalorder %s51, %s53
      %p60 = scmp.eq.s32.totalorder %s22, 1
      %p61 = por %p59, %p60
      %p62 = scmp.ne.s32.totalorder %s53, %s54
      %p63 = scmp.eq.s32.totalorder %s22, 0
      %p64 = por %p62, %p63
      %p65 = scmp.ne.s32.totalorder %s53, %s54
      %p66 = scmp.eq.s32.totalorder %s23, 1
      %p67 = por %p65, %p66
      %p69 = scmp.ne.s32.totalorder %s54, %s68
      %p70 = scmp.eq.s32.totalorder %s23, 0
      %p71 = por %p69, %p70
      %s73 = sadd.s32 %s72, 1
      %p76 = scmp.eq.s32.totalorder %s17, 1
      %p77 = scmp.ne.s32.totalorder %s72, %s74
      %p78 = scmp.eq.s32.totalorder %s17, 0
      %p79 = por %p77, %p78
      %p80 = scmp.ne.s32.totalorder %s72, %s74
      %p81 = scmp.eq.s32.totalorder %s22, 1
      %p82 = por %p80, %p81
      %p83 = scmp.ne.s32.totalorder %s74, %s75
      %p84 = scmp.eq.s32.totalorder %s22, 0
      %p85 = por %p83, %p84
      %p86 = scmp.ne.s32.totalorder %s74, %s75
      %p87 = scmp.eq.s32.totalorder %s23, 1
      %p88 = por %p86, %p87
      %p90 = scmp.ne.s32.totalorder %s75, %s89
      %p91 = scmp.eq.s32.totalorder %s23, 0
      %p92 = por %p90, %p91
      %s94 = sadd.s32 %s93, 1
      %p97 = scmp.eq.s32.totalorder %s17, 1
      %p98 = scmp.ne.s32.totalorder %s93, %s95
      %p99 = scmp.eq.s32.totalorder %s17, 0
      %p100 = por %p98, %p99
      %p101 = scmp.ne.s32.totalorder %s93, %s95
      %p102 = scmp.eq.s32.totalorder %s22, 1
      %p103 = por %p101, %p102
      %p104 = scmp.ne.s32.totalorder %s95, %s96
      %p105 = scmp.eq.s32.totalorder %s22, 0
      %p106 = por %p104, %p105
      %p107 = scmp.ne.s32.totalorder %s95, %s96
      %p108 = scmp.eq.s32.totalorder %s23, 1
      %p109 = por %p107, %p108
      %p111 = scmp.ne.s32.totalorder %s96, %s110
      %p112 = scmp.eq.s32.totalorder %s23, 0
      %p113 = por %p111, %p112
      %s114 = ssub.s32 %s17, %s24
      %p115 = scmp.eq.s32.totalorder %s114, 0
      %s117 = sadd.s32 %s116, 1
      %s118 = scalar_select %p115, %s116, %s117
      %p121 = pneg %p115
      %p122 = scmp.eq.s32.totalorder %s17, 1
      %p123 = por %p121, %p122
      %p124 = scmp.ne.s32.totalorder %s116, %s119
      %p125 = scmp.eq.s32.totalorder %s17, 0
      %p126 = por %p124, %p125
      %p127 = scmp.ne.s32.totalorder %s116, %s119
      %p128 = scmp.eq.s32.totalorder %s22, 1
      %p129 = por %p127, %p128
      %p130 = scmp.ne.s32.totalorder %s119, %s120
      %p131 = scmp.eq.s32.totalorder %s22, 0
      %p132 = por %p130, %p131
      %p133 = scmp.ne.s32.totalorder %s119, %s120
      %p134 = scmp.eq.s32.totalorder %s23, 1
      %p135 = por %p133, %p134
      %p137 = scmp.ne.s32.totalorder %s120, %s136
      %p138 = scmp.eq.s32.totalorder %s23, 0
      %p139 = por %p137, %p138
      %p140 = scmp.le.s32.totalorder 1, %s17
      %p141 = scmp.lt.s32.totalorder %s17, 3
      %p142 = pnand %p140, %p141
      %p143 = pneg %p142
      // Predicated region
      $region9: #{tpu_custom_call.1} parent=5 // pred_check
        _
      $region10: #{tpu_custom_call.1} parent=5 // pred_check_branch
        %145 = sbr.rel (%p142) target = $region12
      $region11: #{tpu_custom_call.1} parent=5 // pred_region
        %s146 = ssub.s32 %s17, 1
        // Predicated region
        $region13: #{tpu_custom_call.1} parent=11 // pred_check
          %p147 = pneg %p64
        $region14: #{tpu_custom_call.1} parent=11 // pred_check_branch
          %149 = sbr.rel (%p147) target = $region16
        $region15: #{tpu_custom_call.1} parent=11 // pred_region
          %s151 = ssub.s32 1024, 1024
          %152 = vsyncadd [#allocation8], %s151
          %s153 = sshll.u32 [#allocation7], 4
          %s154 = int_to_ptr.vmem [resolvable:$true] %s153
          %159 = dma.hbm_to_vmem [thread:$0]  %s1, 1024, %s154, [#allocation8], 128, 128, 8
        $region16: #{tpu_custom_call.1} parent=11 // pred_fallthru
          _
        // Predicated region
        $region17: #{tpu_custom_call.1} parent=11 // pred_check
          %p160 = pneg %p85
        $region18: #{tpu_custom_call.1} parent=11 // pred_check_branch
          %162 = sbr.rel (%p160) target = $region20
        $region19: #{tpu_custom_call.1} parent=11 // pred_region
          %s164 = ssub.s32 512, 512
          %165 = vsyncadd [#allocation8], %s164
          %s166 = sshll.u32 [#allocation9], 4
          %s167 = int_to_ptr.vmem [resolvable:$true] %s166
          %172 = dma.hbm_to_vmem [thread:$0]  %s2, 512, %s167, [#allocation8], 64, 64, 4
        $region20: #{tpu_custom_call.1} parent=11 // pred_fallthru
          _
        // Predicated region
        $region21: #{tpu_custom_call.1} parent=11 // pred_check
          %p173 = pneg %p106
        $region22: #{tpu_custom_call.1} parent=11 // pred_check_branch
          %175 = sbr.rel (%p173) target = $region24
        $region23: #{tpu_custom_call.1} parent=11 // pred_region
          _
        $region24: #{tpu_custom_call.1} parent=11 // pred_fallthru
          _
      $region12: #{tpu_custom_call.1} parent=5 // pred_fallthru
        _
      %p176 = scmp.lt.s32.totalorder %s17, 2
      // Predicated region
      $region25: #{tpu_custom_call.1} parent=5 // pred_check
        %p177 = pneg %p176
      $region26: #{tpu_custom_call.1} parent=5 // pred_check_branch
        %179 = sbr.rel (%p177) target = $region28
      $region27: #{tpu_custom_call.1} parent=5 // pred_region
        // Predicated region
        $region29: #{tpu_custom_call.1} parent=27 // pred_check
          %p180 = pneg %p37
        $region30: #{tpu_custom_call.1} parent=27 // pred_check_branch
          %182 = sbr.rel (%p180) target = $region32
        $region31: #{tpu_custom_call.1} parent=27 // pred_region
          %s183 = sand.u32 %s27, 1
          %s184 = scalar_lea.sflag [#allocation5], %s183
          %s185 = sand.u32 %s27, 1
          %s186 = smul.addr %s185, 32
          %s187 = scalar_lea.vmem [#allocation4], %s186
          %s188 = smul.u32 8, %s17
          %s190 = ssub.s32 512, 512
          %191 = vsyncadd %s184, %s190
          %s192 = smul.addr %s188, 64
          %s193 = scalar_lea.hbm %s0, %s192
          %s194 = sshll.u32 %s187, 4
          %s195 = int_to_ptr.vmem [resolvable:$true] %s194
          %200 = dma.hbm_to_vmem [thread:$0]  %s193, 512, %s195, %s184, 64, 64, 4
        $region32: #{tpu_custom_call.1} parent=27 // pred_fallthru
          _
      $region28: #{tpu_custom_call.1} parent=5 // pred_fallthru
        _
      %p201 = scmp.le.s32.totalorder 1, %s17
      %p202 = scmp.lt.s32.totalorder %s17, 3
      %p203 = pnand %p201, %p202
      %p204 = pneg %p203
      // Predicated region
      $region33: #{tpu_custom_call.1} parent=5 // pred_check
        _
      $region34: #{tpu_custom_call.1} parent=5 // pred_check_branch
        %206 = sbr.rel (%p203) target = $region36
      $region35: #{tpu_custom_call.1} parent=5 // pred_region
        %s207 = ssub.s32 %s17, 1
        %s208 = sand.u32 %s30, 1
        %s209 = scalar_lea.sflag [#allocation5], %s208
        %s210 = sand.u32 %s30, 1
        %s211 = smul.addr %s210, 32
        %s212 = scalar_lea.vmem [#allocation4], %s211
        // Predicated region
        $region37: #{tpu_custom_call.1} parent=35 // pred_check
          %p213 = pneg %p43
        $region38: #{tpu_custom_call.1} parent=35 // pred_check_branch
          %215 = sbr.rel (%p213) target = $region40
        $region39: #{tpu_custom_call.1} parent=35 // pred_region
          %216 = dma.done %s209, 512
        $region40: #{tpu_custom_call.1} parent=35 // pred_fallthru
          _
        // Predicated region
        $region41: #{tpu_custom_call.1} parent=35 // pred_check
          %p217 = pneg %p64
        $region42: #{tpu_custom_call.1} parent=35 // pred_check_branch
          %219 = sbr.rel (%p217) target = $region44
        $region43: #{tpu_custom_call.1} parent=35 // pred_region
          %220 = dma.done [#allocation8], 1024
        $region44: #{tpu_custom_call.1} parent=35 // pred_fallthru
          _
        // Predicated region
        $region45: #{tpu_custom_call.1} parent=35 // pred_check
          %p221 = pneg %p85
        $region46: #{tpu_custom_call.1} parent=35 // pred_check_branch
          %223 = sbr.rel (%p221) target = $region48
        $region47: #{tpu_custom_call.1} parent=35 // pred_region
          %224 = dma.done [#allocation8], 512
        $region48: #{tpu_custom_call.1} parent=35 // pred_fallthru
          _
        %s225 = sand.u32 %s30, 1
        %s226 = scalar_lea.sflag [#allocation5], %s225
        %s227 = sand.u32 %s30, 1
        %s228 = smul.addr %s227, 32
        %s229 = scalar_lea.vmem [#allocation4], %s228
        %p230 = pneg %p43
        %p231 = pneg %p40
        %p232 = pneg %p64
        %p233 = pneg %p61
        %p234 = pneg %p85
        %p235 = pneg %p82
        %p236 = pneg %p106
        %p237 = pneg %p103
        %p238 = pneg %p132
        %p239 = pneg %p129
        %s240 = sand.u32 %s119, 1
        %s241 = scalar_lea.sflag [#allocation6], %s240
        %s242 = sand.u32 %s119, 1
        %s243 = smul.addr %s242, 64
        %s244 = scalar_lea.vmem [#allocation10], %s243
        %s245 = smul.u32 8, %s22
        %s246 = smul.u32 8, %s22
        %v248 = vld [vmem:[%s212] sm:$0xf]
        %v249 = vld [vmem:[%s212 + $0x4] sm:$0xf]
        %v250 = vld [vmem:[%s212 + $0x8] sm:$0xf]
        %v251 = vld [vmem:[%s212 + $0xc] sm:$0xf]
        %v252 = vld [vmem:[%s212 + $0x10] sm:$0xf]
        %v253 = vld [vmem:[%s212 + $0x14] sm:$0xf]
        %v254 = vld [vmem:[%s212 + $0x18] sm:$0xf]
        %v255 = vld [vmem:[%s212 + $0x1c] sm:$0xf]
        %v256 = vld [vmem:[#allocation7] sm:$0xff]
        %v257 = vld [vmem:[#allocation7 + $0x8] sm:$0xff]
        %v258 = vld [vmem:[#allocation7 + $0x10] sm:$0xff]
        %v259 = vld [vmem:[#allocation7 + $0x18] sm:$0xff]
        %v260 = vld [vmem:[#allocation7 + $0x20] sm:$0xff]
        %v261 = vld [vmem:[#allocation7 + $0x28] sm:$0xff]
        %v262 = vld [vmem:[#allocation7 + $0x30] sm:$0xff]
        %v263 = vld [vmem:[#allocation7 + $0x38] sm:$0xff]
        %v272 = vunpack.c.l.b16 %v248
        %v273 = vunpack.c.l.b16 %v249
        %v274 = vunpack.c.l.b16 %v250
        %v275 = vunpack.c.l.b16 %v251
        %v276 = vunpack.c.l.b16 %v252
        %v277 = vunpack.c.l.b16 %v253
        %v278 = vunpack.c.l.b16 %v254
        %v279 = vunpack.c.l.b16 %v255
        %v280 = vpack.c.b16 %v273, %v272
        %v281 = vpack.c.b16 %v275, %v274
        %v282 = vpack.c.b16 %v277, %v276
        %v283 = vpack.c.b16 %v279, %v278
        %v292 = vunpack.c.l.b16 %v256
        %v293 = vunpack.c.h.b16 %v256
        %v294 = vunpack.c.l.b16 %v257
        %v295 = vunpack.c.h.b16 %v257
        %v296 = vunpack.c.l.b16 %v258
        %v297 = vunpack.c.h.b16 %v258
        %v298 = vunpack.c.l.b16 %v259
        %v299 = vunpack.c.h.b16 %v259
        %v300 = vunpack.c.l.b16 %v260
        %v301 = vunpack.c.h.b16 %v260
        %v302 = vunpack.c.l.b16 %v261
        %v303 = vunpack.c.h.b16 %v261
        %v304 = vunpack.c.l.b16 %v262
        %v305 = vunpack.c.h.b16 %v262
        %v306 = vunpack.c.l.b16 %v263
        %v307 = vunpack.c.h.b16 %v263
        %v308 = vpack.c.b16 %v294, %v292
        %v309 = vpack.c.b16 %v295, %v293
        %v310 = vpack.c.b16 %v298, %v296
        %v311 = vpack.c.b16 %v299, %v297
        %v312 = vpack.c.b16 %v302, %v300
        %v313 = vpack.c.b16 %v303, %v301
        %v314 = vpack.c.b16 %v306, %v304
        %v315 = vpack.c.b16 %v307, %v305
        %vm324 = vcmask 523264
        %v326 = vsel %vm324, %v280, 0
        %v329 = vsel %vm324, %v281, 0
        %v332 = vsel %vm324, %v282, 0
        %v335 = vsel %vm324, %v283, 0
        %337 = vmatprep.subr.bf16.mxu0 %v309
        %338 = vmatpush1.bf16.msra.mxu0 %v308
        %339 = vmatprep.subr.bf16.mxu0 %v311
        %340 = vmatpush1.bf16.msra.mxu0 %v310
        %341 = vmatprep.subr.bf16.mxu0 %v313
        %342 = vmatpush1.bf16.msra.mxu0 %v312
        %343 = vmatprep.subr.bf16.mxu0 %v315
        %344 = vmatpush1.bf16.msra.mxu0 %v314
        %345 = vmatprep.subr.bf16.mxu0 0
        %346 = vmatpush1.bf16.msra.mxu0 0
        %347 = vmatprep.subr.bf16.mxu0 0
        %348 = vmatpush1.bf16.msra.mxu0 0
        %349 = vmatprep.subr.bf16.mxu0 0
        %350 = vmatpush1.bf16.msra.mxu0 0
        %351 = vmatprep.subr.bf16.mxu0 0
        %352 = vmatpush1.bf16.msra.mxu0 0
        %353 = vmatprep.subr.bf16.mxu0 0
        %354 = vmatpush1.bf16.msra.mxu0 0
        %355 = vmatprep.subr.bf16.mxu0 0
        %356 = vmatpush1.bf16.msra.mxu0 0
        %357 = vmatprep.subr.bf16.mxu0 0
        %358 = vmatpush1.bf16.msra.mxu0 0
        %359 = vmatprep.subr.bf16.mxu0 0
        %360 = vmatpush1.bf16.msra.mxu0 0
        %361 = vmatprep.subr.bf16.mxu0 0
        %362 = vmatpush1.bf16.msra.mxu0 0
        %363 = vmatprep.subr.bf16.mxu0 0
        %364 = vmatpush1.bf16.msra.mxu0 0
        %365 = vmatprep.subr.bf16.mxu0 0
        %366 = vmatpush1.bf16.msra.mxu0 0
        %367 = vmatprep.subr.bf16.mxu0 0
        %368 = vmatpush1.bf16.msra.mxu0 0
        %369 = vmatprep.mubr.bf16.mxu0 0
        %370 = vmatmul.mubr.bf16.gmra.mrb[0].mxu0 %v326
        %v371 = vpop.f32.mrb[0].mxu0
        %v372 = vadd.f32 0.0, %v371
        %v373 = vpop.f32.mrb[0].mxu0
        %v374 = vadd.f32 0.0, %v373
        %v375 = vpop.f32.mrb[0].mxu0
        %v376 = vadd.f32 0.0, %v375
        %v377 = vpop.f32.mrb[0].mxu0
        %v378 = vadd.f32 0.0, %v377
        %379 = vmatprep.mubr.bf16.mxu0 0
        %380 = vmatmul.mubr.bf16.gmra.mrb[0].mxu0 %v329
        %v381 = vpop.f32.mrb[0].mxu0
        %v382 = vadd.f32 0.0, %v381
        %v383 = vpop.f32.mrb[0].mxu0
        %v384 = vadd.f32 0.0, %v383
        %v385 = vpop.f32.mrb[0].mxu0
        %v386 = vadd.f32 0.0, %v385
        %v387 = vpop.f32.mrb[0].mxu0
        %v388 = vadd.f32 0.0, %v387
        %389 = vmatprep.mubr.bf16.mxu0 0
        %390 = vmatmul.mubr.bf16.gmra.mrb[0].mxu0 %v332
        %v391 = vpop.f32.mrb[0].mxu0
        %v392 = vadd.f32 0.0, %v391
        %v393 = vpop.f32.mrb[0].mxu0
        %v394 = vadd.f32 0.0, %v393
        %v395 = vpop.f32.mrb[0].mxu0
        %v396 = vadd.f32 0.0, %v395
        %v397 = vpop.f32.mrb[0].mxu0
        %v398 = vadd.f32 0.0, %v397
        %399 = vmatprep.mubr.bf16.mxu0 0
        %400 = vmatmul.mubr.bf16.gmra.mrb[0].mxu0 %v335
        %v401 = vpop.f32.mrb[0].mxu0
        %v402 = vadd.f32 0.0, %v401
        %v403 = vpop.f32.mrb[0].mxu0
        %v404 = vadd.f32 0.0, %v403
        %v405 = vpop.f32.mrb[0].mxu0
        %v406 = vadd.f32 0.0, %v405
        %v407 = vpop.f32.mrb[0].mxu0
        %v408 = vadd.f32 0.0, %v407
        %409 = vdwg.mxu0
        %v410 = vpack.c.bf16 %v376, %v372
        %v411 = vpack.c.bf16 %v378, %v374
        %v412 = vpack.c.bf16 %v386, %v382
        %v413 = vpack.c.bf16 %v388, %v384
        %v414 = vpack.c.bf16 %v396, %v392
        %v415 = vpack.c.bf16 %v398, %v394
        %v416 = vpack.c.bf16 %v406, %v402
        %v417 = vpack.c.bf16 %v408, %v404
        %418 = vst [vmem:[#allocation2] sm:$0xff] %v410
        %419 = vst.msk [vmem:[#allocation2 + $0x8] sm:$0xff] %vm324, %v411
        %420 = vst [vmem:[#allocation2 + $0x10] sm:$0xff] %v412
        %421 = vst.msk [vmem:[#allocation2 + $0x18] sm:$0xff] %vm324, %v413
        %422 = vst [vmem:[#allocation2 + $0x20] sm:$0xff] %v414
        %423 = vst.msk [vmem:[#allocation2 + $0x28] sm:$0xff] %vm324, %v415
        %424 = vst [vmem:[#allocation2 + $0x30] sm:$0xff] %v416
        %425 = vst.msk [vmem:[#allocation2 + $0x38] sm:$0xff] %vm324, %v417
        %v426 = vld [vmem:[%s3] sm:$0x1]
        %v428 = vlaneseq
        %v429 = vshrl.u32 %v428, 7
        %v430 = vsub.s32 0, %v429
        %v431 = vrot.slane %v426, %v430
        %433 = vst.msk [vmem:[#allocation3] sm:$0xff] %vm324, %v431
        %434 = vst.msk [vmem:[#allocation3 + $0x8] sm:$0xff] %vm324, %v431
        %435 = vst.msk [vmem:[#allocation3 + $0x10] sm:$0xff] %vm324, %v431
        %436 = vst.msk [vmem:[#allocation3 + $0x18] sm:$0xff] %vm324, %v431
        %437 = vst.msk [vmem:[#allocation3 + $0x20] sm:$0xff] %vm324, %v431
        %438 = vst.msk [vmem:[#allocation3 + $0x28] sm:$0xff] %vm324, %v431
        %439 = vst.msk [vmem:[#allocation3 + $0x30] sm:$0xff] %vm324, %v431
        %440 = vst.msk [vmem:[#allocation3 + $0x38] sm:$0xff] %vm324, %v431
        %v441 = vld [vmem:[#allocation2] sm:$0xff]
        %v442 = vld [vmem:[#allocation2 + $0x10] sm:$0xff]
        %v443 = vld [vmem:[#allocation2 + $0x20] sm:$0xff]
        %v444 = vld [vmem:[#allocation2 + $0x30] sm:$0xff]
        %v449 = vunpack.c.l.b16 %v441
        %v450 = vunpack.c.h.b16 %v441
        %v451 = vunpack.c.l.b16 %v442
        %v452 = vunpack.c.h.b16 %v442
        %v453 = vunpack.c.l.b16 %v443
        %v454 = vunpack.c.h.b16 %v443
        %v455 = vunpack.c.l.b16 %v444
        %v456 = vunpack.c.h.b16 %v444
        %v457 = vpack.c.b16 %v449, %v449
        %v458 = vpack.c.b16 %v450, %v450
        %v459 = vpack.c.b16 %v451, %v451
        %v460 = vpack.c.b16 %v452, %v452
        %v461 = vpack.c.b16 %v453, %v453
        %v462 = vpack.c.b16 %v454, %v454
        %v463 = vpack.c.b16 %v455, %v455
        %v464 = vpack.c.b16 %v456, %v456
        %v465 = vld [vmem:[#allocation2 + $0x8] sm:$0xff]
        %v466 = vld [vmem:[#allocation2 + $0x18] sm:$0xff]
        %v467 = vld [vmem:[#allocation2 + $0x28] sm:$0xff]
        %v468 = vld [vmem:[#allocation2 + $0x38] sm:$0xff]
        %v473 = vunpack.c.l.b16 %v465
        %v474 = vunpack.c.h.b16 %v465
        %v475 = vunpack.c.l.b16 %v466
        %v476 = vunpack.c.h.b16 %v466
        %v477 = vunpack.c.l.b16 %v467
        %v478 = vunpack.c.h.b16 %v467
        %v479 = vunpack.c.l.b16 %v468
        %v480 = vunpack.c.h.b16 %v468
        %v481 = vpack.c.b16 %v473, %v473
        %v482 = vpack.c.b16 %v474, %v474
        %v483 = vpack.c.b16 %v475, %v475
        %v484 = vpack.c.b16 %v476, %v476
        %v485 = vpack.c.b16 %v477, %v477
        %v486 = vpack.c.b16 %v478, %v478
        %v487 = vpack.c.b16 %v479, %v479
        %v488 = vpack.c.b16 %v480, %v480
        %489 = vrot.lane.b32.xlu0 %v457, 64
        %v490 = vpop.permute.xlu0 %489
        %vm491 = vcmask 130048
        %v493 = vsel %vm491, %v457, 0
        %v496 = vsel %vm491, %v490, 0
        %498 = vmatprep.subr.bf16.mxu0 0
        %499 = vmatpush1.bf16.xpose.msra.mxu0 %v496
        %500 = vmatprep.subr.bf16.mxu0 0
        %501 = vmatpush1.bf16.xpose.msra.mxu0 0
        %502 = vmatprep.subr.bf16.mxu0 0
        %503 = vmatpush1.bf16.xpose.msra.mxu0 0
        %504 = vmatprep.subr.bf16.mxu0 0
        %505 = vmatpush1.bf16.xpose.msra.mxu0 0
        %506 = vmatprep.subr.bf16.mxu0 0
        %507 = vmatpush1.bf16.xpose.msra.mxu0 0
        %508 = vmatprep.subr.bf16.mxu0 0
        %509 = vmatpush1.bf16.xpose.msra.mxu0 0
        %510 = vmatprep.subr.bf16.mxu0 0
        %511 = vmatpush1.bf16.xpose.msra.mxu0 0
        %512 = vmatprep.subr.bf16.mxu0 0
        %513 = vmatpush1.bf16.xpose.msra.mxu0 0
        %514 = vmatprep.subr.bf16.mxu0 0
        %515 = vmatpush1.bf16.xpose.msra.mxu0 0
        %516 = vmatprep.subr.bf16.mxu0 0
        %517 = vmatpush1.bf16.xpose.msra.mxu0 0
        %518 = vmatprep.subr.bf16.mxu0 0
        %519 = vmatpush1.bf16.xpose.msra.mxu0 0
        %520 = vmatprep.subr.bf16.mxu0 0
        %521 = vmatpush1.bf16.xpose.msra.mxu0 0
        %522 = vmatprep.subr.bf16.mxu0 0
        %523 = vmatpush1.bf16.xpose.msra.mxu0 0
        %524 = vmatprep.subr.bf16.mxu0 0
        %525 = vmatpush1.bf16.xpose.msra.mxu0 0
        %526 = vmatprep.subr.bf16.mxu0 0
        %527 = vmatpush1.bf16.xpose.msra.mxu0 0
        %528 = vmatprep.subr.bf16.mxu0 0
        %529 = vmatpush1.bf16.xpose.msra.mxu0 0
        %530 = vmatprep.mubr.bf16.mxu0 0
        %531 = vmatmul.mubr.bf16.gmra.mrb[0].mxu0 %v493
        %v532 = vpop.f32.mrb[0].mxu0
        %v533 = vadd.f32 0.0, %v532
        %v534 = vpop.f32.mrb[0].mxu0
        %v535 = vpop.f32.mrb[0].mxu0
        %v536 = vpop.f32.mrb[0].mxu0
        %537 = vdwg.mxu0
        %538 = vrot.lane.b32.xlu0 %v458, 64
        %v539 = vpop.permute.xlu0 %538
        %v541 = vsel %vm491, %v458, 0
        %v544 = vsel %vm491, %v539, 0
        %546 = vmatprep.subr.bf16.mxu0 0
        %547 = vmatpush1.bf16.xpose.msra.mxu0 %v544
        %548 = vmatprep.subr.bf16.mxu0 0
        %549 = vmatpush1.bf16.xpose.msra.mxu0 0
        %550 = vmatprep.subr.bf16.mxu0 0
        %551 = vmatpush1.bf16.xpose.msra.mxu0 0
        %552 = vmatprep.subr.bf16.mxu0 0
        %553 = vmatpush1.bf16.xpose.msra.mxu0 0
        %554 = vmatprep.subr.bf16.mxu0 0
        %555 = vmatpush1.bf16.xpose.msra.mxu0 0
        %556 = vmatprep.subr.bf16.mxu0 0
        %557 = vmatpush1.bf16.xpose.msra.mxu0 0
        %558 = vmatprep.subr.bf16.mxu0 0
        %559 = vmatpush1.bf16.xpose.msra.mxu0 0
        %560 = vmatprep.subr.bf16.mxu0 0
        %561 = vmatpush1.bf16.xpose.msra.mxu0 0
        %562 = vmatprep.subr.bf16.mxu0 0
        %563 = vmatpush1.bf16.xpose.msra.mxu0 0
        %564 = vmatprep.subr.bf16.mxu0 0
        %565 = vmatpush1.bf16.xpose.msra.mxu0 0
        %566 = vmatprep.subr.bf16.mxu0 0
        %567 = vmatpush1.bf16.xpose.msra.mxu0 0
        %568 = vmatprep.subr.bf16.mxu0 0
        %569 = vmatpush1.bf16.xpose.msra.mxu0 0
        %570 = vmatprep.subr.bf16.mxu0 0
        %571 = vmatpush1.bf16.xpose.msra.mxu0 0
        %572 = vmatprep.subr.bf16.mxu0 0
        %573 = vmatpush1.bf16.xpose.msra.mxu0 0
        %574 = vmatprep.subr.bf16.mxu0 0
        %575 = vmatpush1.bf16.xpose.msra.mxu0 0
        %576 = vmatprep.subr.bf16.mxu0 0
        %577 = vmatpush1.bf16.xpose.msra.mxu0 0
        %578 = vmatprep.mubr.bf16.mxu0 0
        %579 = vmatmul.mubr.bf16.gmra.mrb[0].mxu0 %v541
        %v580 = vpop.f32.mrb[0].mxu0
        %v581 = vadd.f32 0.0, %v580
        %v582 = vpop.f32.mrb[0].mxu0
        %v583 = vpop.f32.mrb[0].mxu0
        %v584 = vpop.f32.mrb[0].mxu0
        %585 = vdwg.mxu0
        %586 = vrot.lane.b32.xlu0 %v459, 64
        %v587 = vpop.permute.xlu0 %586
        %v589 = vsel %vm491, %v459, 0
        %v592 = vsel %vm491, %v587, 0
        %594 = vmatprep.subr.bf16.mxu0 0
        %595 = vmatpush1.bf16.xpose.msra.mxu0 %v592
        %596 = vmatprep.subr.bf16.mxu0 0
        %597 = vmatpush1.bf16.xpose.msra.mxu0 0
        %598 = vmatprep.subr.bf16.mxu0 0
        %599 = vmatpush1.bf16.xpose.msra.mxu0 0
        %600 = vmatprep.subr.bf16.mxu0 0
        %601 = vmatpush1.bf16.xpose.msra.mxu0 0
        %602 = vmatprep.subr.bf16.mxu0 0
        %603 = vmatpush1.bf16.xpose.msra.mxu0 0
        %604 = vmatprep.subr.bf16.mxu0 0
        %605 = vmatpush1.bf16.xpose.msra.mxu0 0
        %606 = vmatprep.subr.bf16.mxu0 0
        %607 = vmatpush1.bf16.xpose.msra.mxu0 0
        %608 = vmatprep.subr.bf16.mxu0 0
        %609 = vmatpush1.bf16.xpose.msra.mxu0 0
        %610 = vmatprep.subr.bf16.mxu0 0
        %611 = vmatpush1.bf16.xpose.msra.mxu0 0
        %612 = vmatprep.subr.bf16.mxu0 0
        %613 = vmatpush1.bf16.xpose.msra.mxu0 0
        %614 = vmatprep.subr.bf16.mxu0 0
        %615 = vmatpush1.bf16.xpose.msra.mxu0 0
        %616 = vmatprep.subr.bf16.mxu0 0
        %617 = vmatpush1.bf16.xpose.msra.mxu0 0
        %618 = vmatprep.subr.bf16.mxu0 0
        %619 = vmatpush1.bf16.xpose.msra.mxu0 0
        %620 = vmatprep.subr.bf16.mxu0 0
        %621 = vmatpush1.bf16.xpose.msra.mxu0 0
        %622 = vmatprep.subr.bf16.mxu0 0
        %623 = vmatpush1.bf16.xpose.msra.mxu0 0
        %624 = vmatprep.subr.bf16.mxu0 0
        %625 = vmatpush1.bf16.xpose.msra.mxu0 0
        %626 = vmatprep.mubr.bf16.mxu0 0
        %627 = vmatmul.mubr.bf16.gmra.mrb[0].mxu0 %v589
        %v628 = vpop.f32.mrb[0].mxu0
        %v629 = vadd.f32 0.0, %v628
        %v630 = vpop.f32.mrb[0].mxu0
        %v631 = vpop.f32.mrb[0].mxu0
        %v632 = vpop.f32.mrb[0].mxu0
        %633 = vdwg.mxu0
        %634 = vrot.lane.b32.xlu0 %v460, 64
        %v635 = vpop.permute.xlu0 %634
        %v637 = vsel %vm491, %v460, 0
        %v640 = vsel %vm491, %v635, 0
        %642 = vmatprep.subr.bf16.mxu0 0
        %643 = vmatpush1.bf16.xpose.msra.mxu0 %v640
        %644 = vmatprep.subr.bf16.mxu0 0
        %645 = vmatpush1.bf16.xpose.msra.mxu0 0
        %646 = vmatprep.subr.bf16.mxu0 0
        %647 = vmatpush1.bf16.xpose.msra.mxu0 0
        %648 = vmatprep.subr.bf16.mxu0 0
        %649 = vmatpush1.bf16.xpose.msra.mxu0 0
        %650 = vmatprep.subr.bf16.mxu0 0
        %651 = vmatpush1.bf16.xpose.msra.mxu0 0
        %652 = vmatprep.subr.bf16.mxu0 0
        %653 = vmatpush1.bf16.xpose.msra.mxu0 0
        %654 = vmatprep.subr.bf16.mxu0 0
        %655 = vmatpush1.bf16.xpose.msra.mxu0 0
        %656 = vmatprep.subr.bf16.mxu0 0
        %657 = vmatpush1.bf16.xpose.msra.mxu0 0
        %658 = vmatprep.subr.bf16.mxu0 0
        %659 = vmatpush1.bf16.xpose.msra.mxu0 0
        %660 = vmatprep.subr.bf16.mxu0 0
        %661 = vmatpush1.bf16.xpose.msra.mxu0 0
        %662 = vmatprep.subr.bf16.mxu0 0
        %663 = vmatpush1.bf16.xpose.msra.mxu0 0
        %664 = vmatprep.subr.bf16.mxu0 0
        %665 = vmatpush1.bf16.xpose.msra.mxu0 0
        %666 = vmatprep.subr.bf16.mxu0 0
        %667 = vmatpush1.bf16.xpose.msra.mxu0 0
        %668 = vmatprep.subr.bf16.mxu0 0
        %669 = vmatpush1.bf16.xpose.msra.mxu0 0
        %670 = vmatprep.subr.bf16.mxu0 0
        %671 = vmatpush1.bf16.xpose.msra.mxu0 0
        %672 = vmatprep.subr.bf16.mxu0 0
        %673 = vmatpush1.bf16.xpose.msra.mxu0 0
        %674 = vmatprep.mubr.bf16.mxu0 0
        %675 = vmatmul.mubr.bf16.gmra.mrb[0].mxu0 %v637
        %v676 = vpop.f32.mrb[0].mxu0
        %v677 = vadd.f32 0.0, %v676
        %v678 = vpop.f32.mrb[0].mxu0
        %v679 = vpop.f32.mrb[0].mxu0
        %v680 = vpop.f32.mrb[0].mxu0
        %681 = vdwg.mxu0
        %682 = vrot.lane.b32.xlu0 %v461, 64
        %v683 = vpop.permute.xlu0 %682
        %v685 = vsel %vm491, %v461, 0
        %v688 = vsel %vm491, %v683, 0
        %690 = vmatprep.subr.bf16.mxu0 0
        %691 = vmatpush1.bf16.xpose.msra.mxu0 %v688
        %692 = vmatprep.subr.bf16.mxu0 0
        %693 = vmatpush1.bf16.xpose.msra.mxu0 0
        %694 = vmatprep.subr.bf16.mxu0 0
        %695 = vmatpush1.bf16.xpose.msra.mxu0 0
        %696 = vmatprep.subr.bf16.mxu0 0
        %697 = vmatpush1.bf16.xpose.msra.mxu0 0
        %698 = vmatprep.subr.bf16.mxu0 0
        %699 = vmatpush1.bf16.xpose.msra.mxu0 0
        %700 = vmatprep.subr.bf16.mxu0 0
        %701 = vmatpush1.bf16.xpose.msra.mxu0 0
        %702 = vmatprep.subr.bf16.mxu0 0
        %703 = vmatpush1.bf16.xpose.msra.mxu0 0
        %704 = vmatprep.subr.bf16.mxu0 0
        %705 = vmatpush1.bf16.xpose.msra.mxu0 0
        %706 = vmatprep.subr.bf16.mxu0 0
        %707 = vmatpush1.bf16.xpose.msra.mxu0 0
        %708 = vmatprep.subr.bf16.mxu0 0
        %709 = vmatpush1.bf16.xpose.msra.mxu0 0
        %710 = vmatprep.subr.bf16.mxu0 0
        %711 = vmatpush1.bf16.xpose.msra.mxu0 0
        %712 = vmatprep.subr.bf16.mxu0 0
        %713 = vmatpush1.bf16.xpose.msra.mxu0 0
        %714 = vmatprep.subr.bf16.mxu0 0
        %715 = vmatpush1.bf16.xpose.msra.mxu0 0
        %716 = vmatprep.subr.bf16.mxu0 0
        %717 = vmatpush1.bf16.xpose.msra.mxu0 0
        %718 = vmatprep.subr.bf16.mxu0 0
        %719 = vmatpush1.bf16.xpose.msra.mxu0 0
        %720 = vmatprep.subr.bf16.mxu0 0
        %721 = vmatpush1.bf16.xpose.msra.mxu0 0
        %722 = vmatprep.mubr.bf16.mxu0 0
        %723 = vmatmul.mubr.bf16.gmra.mrb[0].mxu0 %v685
        %v724 = vpop.f32.mrb[0].mxu0
        %v725 = vadd.f32 0.0, %v724
        %v726 = vpop.f32.mrb[0].mxu0
        %v727 = vpop.f32.mrb[0].mxu0
        %v728 = vpop.f32.mrb[0].mxu0
        %729 = vdwg.mxu0
        %730 = vrot.lane.b32.xlu0 %v462, 64
        %v731 = vpop.permute.xlu0 %730
        %v733 = vsel %vm491, %v462, 0
        %v736 = vsel %vm491, %v731, 0
        %738 = vmatprep.subr.bf16.mxu0 0
        %739 = vmatpush1.bf16.xpose.msra.mxu0 %v736
        %740 = vmatprep.subr.bf16.mxu0 0
        %741 = vmatpush1.bf16.xpose.msra.mxu0 0
        %742 = vmatprep.subr.bf16.mxu0 0
        %743 = vmatpush1.bf16.xpose.msra.mxu0 0
        %744 = vmatprep.subr.bf16.mxu0 0
        %745 = vmatpush1.bf16.xpose.msra.mxu0 0
        %746 = vmatprep.subr.bf16.mxu0 0
        %747 = vmatpush1.bf16.xpose.msra.mxu0 0
        %748 = vmatprep.subr.bf16.mxu0 0
        %749 = vmatpush1.bf16.xpose.msra.mxu0 0
        %750 = vmatprep.subr.bf16.mxu0 0
        %751 = vmatpush1.bf16.xpose.msra.mxu0 0
        %752 = vmatprep.subr.bf16.mxu0 0
        %753 = vmatpush1.bf16.xpose.msra.mxu0 0
        %754 = vmatprep.subr.bf16.mxu0 0
        %755 = vmatpush1.bf16.xpose.msra.mxu0 0
        %756 = vmatprep.subr.bf16.mxu0 0
        %757 = vmatpush1.bf16.xpose.msra.mxu0 0
        %758 = vmatprep.subr.bf16.mxu0 0
        %759 = vmatpush1.bf16.xpose.msra.mxu0 0
        %760 = vmatprep.subr.bf16.mxu0 0
        %761 = vmatpush1.bf16.xpose.msra.mxu0 0
        %762 = vmatprep.subr.bf16.mxu0 0
        %763 = vmatpush1.bf16.xpose.msra.mxu0 0
        %764 = vmatprep.subr.bf16.mxu0 0
        %765 = vmatpush1.bf16.xpose.msra.mxu0 0
        %766 = vmatprep.subr.bf16.mxu0 0
        %767 = vmatpush1.bf16.xpose.msra.mxu0 0
        %768 = vmatprep.subr.bf16.mxu0 0
        %769 = vmatpush1.bf16.xpose.msra.mxu0 0
        %770 = vmatprep.mubr.bf16.mxu0 0
        %771 = vmatmul.mubr.bf16.gmra.mrb[0].mxu0 %v733
        %v772 = vpop.f32.mrb[0].mxu0
        %v773 = vadd.f32 0.0, %v772
        %v774 = vpop.f32.mrb[0].mxu0
        %v775 = vpop.f32.mrb[0].mxu0
        %v776 = vpop.f32.mrb[0].mxu0
        %777 = vdwg.mxu0
        %778 = vrot.lane.b32.xlu0 %v463, 64
        %v779 = vpop.permute.xlu0 %778
        %v781 = vsel %vm491, %v463, 0
        %v784 = vsel %vm491, %v779, 0
        %786 = vmatprep.subr.bf16.mxu0 0
        %787 = vmatpush1.bf16.xpose.msra.mxu0 %v784
        %788 = vmatprep.subr.bf16.mxu0 0
        %789 = vmatpush1.bf16.xpose.msra.mxu0 0
        %790 = vmatprep.subr.bf16.mxu0 0
        %791 = vmatpush1.bf16.xpose.msra.mxu0 0
        %792 = vmatprep.subr.bf16.mxu0 0
        %793 = vmatpush1.bf16.xpose.msra.mxu0 0
        %794 = vmatprep.subr.bf16.mxu0 0
        %795 = vmatpush1.bf16.xpose.msra.mxu0 0
        %796 = vmatprep.subr.bf16.mxu0 0
        %797 = vmatpush1.bf16.xpose.msra.mxu0 0
        %798 = vmatprep.subr.bf16.mxu0 0
        %799 = vmatpush1.bf16.xpose.msra.mxu0 0
        %800 = vmatprep.subr.bf16.mxu0 0
        %801 = vmatpush1.bf16.xpose.msra.mxu0 0
        %802 = vmatprep.subr.bf16.mxu0 0
        %803 = vmatpush1.bf16.xpose.msra.mxu0 0
        %804 = vmatprep.subr.bf16.mxu0 0
        %805 = vmatpush1.bf16.xpose.msra.mxu0 0
        %806 = vmatprep.subr.bf16.mxu0 0
        %807 = vmatpush1.bf16.xpose.msra.mxu0 0
        %808 = vmatprep.subr.bf16.mxu0 0
        %809 = vmatpush1.bf16.xpose.msra.mxu0 0
        %810 = vmatprep.subr.bf16.mxu0 0
        %811 = vmatpush1.bf16.xpose.msra.mxu0 0
        %812 = vmatprep.subr.bf16.mxu0 0
        %813 = vmatpush1.bf16.xpose.msra.mxu0 0
        %814 = vmatprep.subr.bf16.mxu0 0
        %815 = vmatpush1.bf16.xpose.msra.mxu0 0
        %816 = vmatprep.subr.bf16.mxu0 0
        %817 = vmatpush1.bf16.xpose.msra.mxu0 0
        %818 = vmatprep.mubr.bf16.mxu0 0
        %819 = vmatmul.mubr.bf16.gmra.mrb[0].mxu0 %v781
        %v820 = vpop.f32.mrb[0].mxu0
        %v821 = vadd.f32 0.0, %v820
        %v822 = vpop.f32.mrb[0].mxu0
        %v823 = vpop.f32.mrb[0].mxu0
        %v824 = vpop.f32.mrb[0].mxu0
        %825 = vdwg.mxu0
        %826 = vrot.lane.b32.xlu0 %v464, 64
        %v827 = vpop.permute.xlu0 %826
        %v829 = vsel %vm491, %v464, 0
        %v832 = vsel %vm491, %v827, 0
        %834 = vmatprep.subr.bf16.mxu0 0
        %835 = vmatpush1.bf16.xpose.msra.mxu0 %v832
        %836 = vmatprep.subr.bf16.mxu0 0
        %837 = vmatpush1.bf16.xpose.msra.mxu0 0
        %838 = vmatprep.subr.bf16.mxu0 0
        %839 = vmatpush1.bf16.xpose.msra.mxu0 0
        %840 = vmatprep.subr.bf16.mxu0 0
        %841 = vmatpush1.bf16.xpose.msra.mxu0 0
        %842 = vmatprep.subr.bf16.mxu0 0
        %843 = vmatpush1.bf16.xpose.msra.mxu0 0
        %844 = vmatprep.subr.bf16.mxu0 0
        %845 = vmatpush1.bf16.xpose.msra.mxu0 0
        %846 = vmatprep.subr.bf16.mxu0 0
        %847 = vmatpush1.bf16.xpose.msra.mxu0 0
        %848 = vmatprep.subr.bf16.mxu0 0
        %849 = vmatpush1.bf16.xpose.msra.mxu0 0
        %850 = vmatprep.subr.bf16.mxu0 0
        %851 = vmatpush1.bf16.xpose.msra.mxu0 0
        %852 = vmatprep.subr.bf16.mxu0 0
        %853 = vmatpush1.bf16.xpose.msra.mxu0 0
        %854 = vmatprep.subr.bf16.mxu0 0
        %855 = vmatpush1.bf16.xpose.msra.mxu0 0
        %856 = vmatprep.subr.bf16.mxu0 0
        %857 = vmatpush1.bf16.xpose.msra.mxu0 0
        %858 = vmatprep.subr.bf16.mxu0 0
        %859 = vmatpush1.bf16.xpose.msra.mxu0 0
        %860 = vmatprep.subr.bf16.mxu0 0
        %861 = vmatpush1.bf16.xpose.msra.mxu0 0
        %862 = vmatprep.subr.bf16.mxu0 0
        %863 = vmatpush1.bf16.xpose.msra.mxu0 0
        %864 = vmatprep.subr.bf16.mxu0 0
        %865 = vmatpush1.bf16.xpose.msra.mxu0 0
        %866 = vmatprep.mubr.bf16.mxu0 0
        %867 = vmatmul.mubr.bf16.gmra.mrb[0].mxu0 %v829
        %v868 = vpop.f32.mrb[0].mxu0
        %v869 = vadd.f32 0.0, %v868
        %v870 = vpop.f32.mrb[0].mxu0
        %v871 = vpop.f32.mrb[0].mxu0
        %v872 = vpop.f32.mrb[0].mxu0
        %873 = vdwg.mxu0
        %vm874 = vcmask 64512
        %v875 = vsel %vm874, %v533, -inf
        %876 = vmax.xlane.f32.xlu0 %v875
        %v877 = vpop.xlane.xlu0 %876
        %v878 = vsel %vm874, %v581, -inf
        %879 = vmax.xlane.f32.xlu0 %v878
        %v880 = vpop.xlane.xlu0 %879
        %v881 = vsel %vm874, %v629, -inf
        %882 = vmax.xlane.f32.xlu0 %v881
        %v883 = vpop.xlane.xlu0 %882
        %v884 = vsel %vm874, %v677, -inf
        %885 = vmax.xlane.f32.xlu0 %v884
        %v886 = vpop.xlane.xlu0 %885
        %v887 = vsel %vm874, %v725, -inf
        %888 = vmax.xlane.f32.xlu0 %v887
        %v889 = vpop.xlane.xlu0 %888
        %v890 = vsel %vm874, %v773, -inf
        %891 = vmax.xlane.f32.xlu0 %v890
        %v892 = vpop.xlane.xlu0 %891
        %v893 = vsel %vm874, %v821, -inf
        %894 = vmax.xlane.f32.xlu0 %v893
        %v895 = vpop.xlane.xlu0 %894
        %v896 = vsel %vm874, %v869, -inf
        %897 = vmax.xlane.f32.xlu0 %v896
        %v898 = vpop.xlane.xlu0 %897
        %v899 = vsub.f32 %v533, %v877
        %v900 = vsub.f32 %v581, %v880
        %v901 = vsub.f32 %v629, %v883
        %v902 = vsub.f32 %v677, %v886
        %v903 = vsub.f32 %v725, %v889
        %v904 = vsub.f32 %v773, %v892
        %v905 = vsub.f32 %v821, %v895
        %v906 = vsub.f32 %v869, %v898
        %v907 = vmul.f32 %v899, 1.442695
        %v908 = vpow.pop %v907
        %v909 = vmul.f32 %v900, 1.442695
        %v910 = vpow.pop %v909
        %v911 = vmul.f32 %v901, 1.442695
        %v912 = vpow.pop %v911
        %v913 = vmul.f32 %v902, 1.442695
        %v914 = vpow.pop %v913
        %v915 = vmul.f32 %v903, 1.442695
        %v916 = vpow.pop %v915
        %v917 = vmul.f32 %v904, 1.442695
        %v918 = vpow.pop %v917
        %v919 = vmul.f32 %v905, 1.442695
        %v920 = vpow.pop %v919
        %v921 = vmul.f32 %v906, 1.442695
        %v922 = vpow.pop %v921
        %v923 = vsel %vm874, %v908, 0.0
        %924 = vadd.xlane.f32.xlu0 %v923
        %v925 = vpop.xlane.xlu0 %924
        %v926 = vsel %vm874, %v910, 0.0
        %927 = vadd.xlane.f32.xlu0 %v926
        %v928 = vpop.xlane.xlu0 %927
        %v929 = vsel %vm874, %v912, 0.0
        %930 = vadd.xlane.f32.xlu0 %v929
        %v931 = vpop.xlane.xlu0 %930
        %v932 = vsel %vm874, %v914, 0.0
        %933 = vadd.xlane.f32.xlu0 %v932
        %v934 = vpop.xlane.xlu0 %933
        %v935 = vsel %vm874, %v916, 0.0
        %936 = vadd.xlane.f32.xlu0 %v935
        %v937 = vpop.xlane.xlu0 %936
        %v938 = vsel %vm874, %v918, 0.0
        %939 = vadd.xlane.f32.xlu0 %v938
        %v940 = vpop.xlane.xlu0 %939
        %v941 = vsel %vm874, %v920, 0.0
        %942 = vadd.xlane.f32.xlu0 %v941
        %v943 = vpop.xlane.xlu0 %942
        %v944 = vsel %vm874, %v922, 0.0
        %945 = vadd.xlane.f32.xlu0 %v944
        %v946 = vpop.xlane.xlu0 %945
        %v947 = vrcp.pop %v925
        %v948 = vrcp.pop %v928
        %v949 = vrcp.pop %v931
        %v950 = vrcp.pop %v934
        %v951 = vrcp.pop %v937
        %v952 = vrcp.pop %v940
        %v953 = vrcp.pop %v943
        %v954 = vrcp.pop %v946
        %v955 = vmul.f32 %v908, %v947
        %v956 = vmul.f32 %v910, %v948
        %v957 = vmul.f32 %v912, %v949
        %v958 = vmul.f32 %v914, %v950
        %v959 = vmul.f32 %v916, %v951
        %v960 = vmul.f32 %v918, %v952
        %v961 = vmul.f32 %v920, %v953
        %v962 = vmul.f32 %v922, %v954
        %v963 = vpack.c.bf16 %v955, %v955
        %v964 = vpack.c.bf16 %v956, %v956
        %v965 = vpack.c.bf16 %v957, %v957
        %v966 = vpack.c.bf16 %v958, %v958
        %v967 = vpack.c.bf16 %v959, %v959
        %v968 = vpack.c.bf16 %v960, %v960
        %v969 = vpack.c.bf16 %v961, %v961
        %v970 = vpack.c.bf16 %v962, %v962
        %v972 = vsel %vm874, %v963, 0
        %vm974 = vcmask 1043456
        %v976 = vsel %vm974, %v481, 0
        %978 = vmatprep.subr.bf16.mxu0 0
        %979 = vmatpush1.bf16.msra.mxu0 %v976
        %980 = vmatprep.subr.bf16.mxu0 0
        %981 = vmatpush1.bf16.msra.mxu0 0
        %982 = vmatprep.subr.bf16.mxu0 0
        %983 = vmatpush1.bf16.msra.mxu0 0
        %984 = vmatprep.subr.bf16.mxu0 0
        %985 = vmatpush1.bf16.msra.mxu0 0
        %986 = vmatprep.subr.bf16.mxu0 0
        %987 = vmatpush1.bf16.msra.mxu0 0
        %988 = vmatprep.subr.bf16.mxu0 0
        %989 = vmatpush1.bf16.msra.mxu0 0
        %990 = vmatprep.subr.bf16.mxu0 0
        %991 = vmatpush1.bf16.msra.mxu0 0
        %992 = vmatprep.subr.bf16.mxu0 0
        %993 = vmatpush1.bf16.msra.mxu0 0
        %994 = vmatprep.subr.bf16.mxu0 0
        %995 = vmatpush1.bf16.msra.mxu0 0
        %996 = vmatprep.subr.bf16.mxu0 0
        %997 = vmatpush1.bf16.msra.mxu0 0
        %998 = vmatprep.subr.bf16.mxu0 0
        %999 = vmatpush1.bf16.msra.mxu0 0
        %1000 = vmatprep.subr.bf16.mxu0 0
        %1001 = vmatpush1.bf16.msra.mxu0 0
        %1002 = vmatprep.subr.bf16.mxu0 0
        %1003 = vmatpush1.bf16.msra.mxu0 0
        %1004 = vmatprep.subr.bf16.mxu0 0
        %1005 = vmatpush1.bf16.msra.mxu0 0
        %1006 = vmatprep.subr.bf16.mxu0 0
        %1007 = vmatpush1.bf16.msra.mxu0 0
        %1008 = vmatprep.subr.bf16.mxu0 0
        %1009 = vmatpush1.bf16.msra.mxu0 0
        %1010 = vmatprep.mubr.bf16.mxu0 0
        %1011 = vmatmul.mubr.bf16.gmra.mrb[0].mxu0 %v972
        %v1012 = vpop.f32.mrb[0].mxu0
        %v1013 = vadd.f32 0.0, %v1012
        %v1014 = vpop.f32.mrb[0].mxu0
        %v1015 = vpop.f32.mrb[0].mxu0
        %v1016 = vpop.f32.mrb[0].mxu0
        %1017 = vdwg.mxu0
        %v1019 = vsel %vm874, %v964, 0
        %v1022 = vsel %vm974, %v482, 0
        %1024 = vmatprep.subr.bf16.mxu0 0
        %1025 = vmatpush1.bf16.msra.mxu0 %v1022
        %1026 = vmatprep.subr.bf16.mxu0 0
        %1027 = vmatpush1.bf16.msra.mxu0 0
        %1028 = vmatprep.subr.bf16.mxu0 0
        %1029 = vmatpush1.bf16.msra.mxu0 0
        %1030 = vmatprep.subr.bf16.mxu0 0
        %1031 = vmatpush1.bf16.msra.mxu0 0
        %1032 = vmatprep.subr.bf16.mxu0 0
        %1033 = vmatpush1.bf16.msra.mxu0 0
        %1034 = vmatprep.subr.bf16.mxu0 0
        %1035 = vmatpush1.bf16.msra.mxu0 0
        %1036 = vmatprep.subr.bf16.mxu0 0
        %1037 = vmatpush1.bf16.msra.mxu0 0
        %1038 = vmatprep.subr.bf16.mxu0 0
        %1039 = vmatpush1.bf16.msra.mxu0 0
        %1040 = vmatprep.subr.bf16.mxu0 0
        %1041 = vmatpush1.bf16.msra.mxu0 0
        %1042 = vmatprep.subr.bf16.mxu0 0
        %1043 = vmatpush1.bf16.msra.mxu0 0
        %1044 = vmatprep.subr.bf16.mxu0 0
        %1045 = vmatpush1.bf16.msra.mxu0 0
        %1046 = vmatprep.subr.bf16.mxu0 0
        %1047 = vmatpush1.bf16.msra.mxu0 0
        %1048 = vmatprep.subr.bf16.mxu0 0
        %1049 = vmatpush1.bf16.msra.mxu0 0
        %1050 = vmatprep.subr.bf16.mxu0 0
        %1051 = vmatpush1.bf16.msra.mxu0 0
        %1052 = vmatprep.subr.bf16.mxu0 0
        %1053 = vmatpush1.bf16.msra.mxu0 0
        %1054 = vmatprep.subr.bf16.mxu0 0
        %1055 = vmatpush1.bf16.msra.mxu0 0
        %1056 = vmatprep.mubr.bf16.mxu0 0
        %1057 = vmatmul.mubr.bf16.gmra.mrb[0].mxu0 %v1019
        %v1058 = vpop.f32.mrb[0].mxu0
        %v1059 = vadd.f32 0.0, %v1058
        %v1060 = vpop.f32.mrb[0].mxu0
        %v1061 = vpop.f32.mrb[0].mxu0
        %v1062 = vpop.f32.mrb[0].mxu0
        %1063 = vdwg.mxu0
        %v1065 = vsel %vm874, %v965, 0
        %v1068 = vsel %vm974, %v483, 0
        %1070 = vmatprep.subr.bf16.mxu0 0
        %1071 = vmatpush1.bf16.msra.mxu0 %v1068
        %1072 = vmatprep.subr.bf16.mxu0 0
        %1073 = vmatpush1.bf16.msra.mxu0 0
        %1074 = vmatprep.subr.bf16.mxu0 0
        %1075 = vmatpush1.bf16.msra.mxu0 0
        %1076 = vmatprep.subr.bf16.mxu0 0
        %1077 = vmatpush1.bf16.msra.mxu0 0
        %1078 = vmatprep.subr.bf16.mxu0 0
        %1079 = vmatpush1.bf16.msra.mxu0 0
        %1080 = vmatprep.subr.bf16.mxu0 0
        %1081 = vmatpush1.bf16.msra.mxu0 0
        %1082 = vmatprep.subr.bf16.mxu0 0
        %1083 = vmatpush1.bf16.msra.mxu0 0
        %1084 = vmatprep.subr.bf16.mxu0 0
        %1085 = vmatpush1.bf16.msra.mxu0 0
        %1086 = vmatprep.subr.bf16.mxu0 0
        %1087 = vmatpush1.bf16.msra.mxu0 0
        %1088 = vmatprep.subr.bf16.mxu0 0
        %1089 = vmatpush1.bf16.msra.mxu0 0
        %1090 = vmatprep.subr.bf16.mxu0 0
        %1091 = vmatpush1.bf16.msra.mxu0 0
        %1092 = vmatprep.subr.bf16.mxu0 0
        %1093 = vmatpush1.bf16.msra.mxu0 0
        %1094 = vmatprep.subr.bf16.mxu0 0
        %1095 = vmatpush1.bf16.msra.mxu0 0
        %1096 = vmatprep.subr.bf16.mxu0 0
        %1097 = vmatpush1.bf16.msra.mxu0 0
        %1098 = vmatprep.subr.bf16.mxu0 0
        %1099 = vmatpush1.bf16.msra.mxu0 0
        %1100 = vmatprep.subr.bf16.mxu0 0
        %1101 = vmatpush1.bf16.msra.mxu0 0
        %1102 = vmatprep.mubr.bf16.mxu0 0
        %1103 = vmatmul.mubr.bf16.gmra.mrb[0].mxu0 %v1065
        %v1104 = vpop.f32.mrb[0].mxu0
        %v1105 = vadd.f32 0.0, %v1104
        %v1106 = vpop.f32.mrb[0].mxu0
        %v1107 = vpop.f32.mrb[0].mxu0
        %v1108 = vpop.f32.mrb[0].mxu0
        %1109 = vdwg.mxu0
        %v1111 = vsel %vm874, %v966, 0
        %v1114 = vsel %vm974, %v484, 0
        %1116 = vmatprep.subr.bf16.mxu0 0
        %1117 = vmatpush1.bf16.msra.mxu0 %v1114
        %1118 = vmatprep.subr.bf16.mxu0 0
        %1119 = vmatpush1.bf16.msra.mxu0 0
        %1120 = vmatprep.subr.bf16.mxu0 0
        %1121 = vmatpush1.bf16.msra.mxu0 0
        %1122 = vmatprep.subr.bf16.mxu0 0
        %1123 = vmatpush1.bf16.msra.mxu0 0
        %1124 = vmatprep.subr.bf16.mxu0 0
        %1125 = vmatpush1.bf16.msra.mxu0 0
        %1126 = vmatprep.subr.bf16.mxu0 0
        %1127 = vmatpush1.bf16.msra.mxu0 0
        %1128 = vmatprep.subr.bf16.mxu0 0
        %1129 = vmatpush1.bf16.msra.mxu0 0
        %1130 = vmatprep.subr.bf16.mxu0 0
        %1131 = vmatpush1.bf16.msra.mxu0 0
        %1132 = vmatprep.subr.bf16.mxu0 0
        %1133 = vmatpush1.bf16.msra.mxu0 0
        %1134 = vmatprep.subr.bf16.mxu0 0
        %1135 = vmatpush1.bf16.msra.mxu0 0
        %1136 = vmatprep.subr.bf16.mxu0 0
        %1137 = vmatpush1.bf16.msra.mxu0 0
        %1138 = vmatprep.subr.bf16.mxu0 0
        %1139 = vmatpush1.bf16.msra.mxu0 0
        %1140 = vmatprep.subr.bf16.mxu0 0
        %1141 = vmatpush1.bf16.msra.mxu0 0
        %1142 = vmatprep.subr.bf16.mxu0 0
        %1143 = vmatpush1.bf16.msra.mxu0 0
        %1144 = vmatprep.subr.bf16.mxu0 0
        %1145 = vmatpush1.bf16.msra.mxu0 0
        %1146 = vmatprep.subr.bf16.mxu0 0
        %1147 = vmatpush1.bf16.msra.mxu0 0
        %1148 = vmatprep.mubr.bf16.mxu0 0
        %1149 = vmatmul.mubr.bf16.gmra.mrb[0].mxu0 %v1111
        %v1150 = vpop.f32.mrb[0].mxu0
        %v1151 = vadd.f32 0.0, %v1150
        %v1152 = vpop.f32.mrb[0].mxu0
        %v1153 = vpop.f32.mrb[0].mxu0
        %v1154 = vpop.f32.mrb[0].mxu0
        %1155 = vdwg.mxu0
        %v1157 = vsel %vm874, %v967, 0
        %v1160 = vsel %vm974, %v485, 0
        %1162 = vmatprep.subr.bf16.mxu0 0
        %1163 = vmatpush1.bf16.msra.mxu0 %v1160
        %1164 = vmatprep.subr.bf16.mxu0 0
        %1165 = vmatpush1.bf16.msra.mxu0 0
        %1166 = vmatprep.subr.bf16.mxu0 0
        %1167 = vmatpush1.bf16.msra.mxu0 0
        %1168 = vmatprep.subr.bf16.mxu0 0
        %1169 = vmatpush1.bf16.msra.mxu0 0
        %1170 = vmatprep.subr.bf16.mxu0 0
        %1171 = vmatpush1.bf16.msra.mxu0 0
        %1172 = vmatprep.subr.bf16.mxu0 0
        %1173 = vmatpush1.bf16.msra.mxu0 0
        %1174 = vmatprep.subr.bf16.mxu0 0
        %1175 = vmatpush1.bf16.msra.mxu0 0
        %1176 = vmatprep.subr.bf16.mxu0 0
        %1177 = vmatpush1.bf16.msra.mxu0 0
        %1178 = vmatprep.subr.bf16.mxu0 0
        %1179 = vmatpush1.bf16.msra.mxu0 0
        %1180 = vmatprep.subr.bf16.mxu0 0
        %1181 = vmatpush1.bf16.msra.mxu0 0
        %1182 = vmatprep.subr.bf16.mxu0 0
        %1183 = vmatpush1.bf16.msra.mxu0 0
        %1184 = vmatprep.subr.bf16.mxu0 0
        %1185 = vmatpush1.bf16.msra.mxu0 0
        %1186 = vmatprep.subr.bf16.mxu0 0
        %1187 = vmatpush1.bf16.msra.mxu0 0
        %1188 = vmatprep.subr.bf16.mxu0 0
        %1189 = vmatpush1.bf16.msra.mxu0 0
        %1190 = vmatprep.subr.bf16.mxu0 0
        %1191 = vmatpush1.bf16.msra.mxu0 0
        %1192 = vmatprep.subr.bf16.mxu0 0
        %1193 = vmatpush1.bf16.msra.mxu0 0
        %1194 = vmatprep.mubr.bf16.mxu0 0
        %1195 = vmatmul.mubr.bf16.gmra.mrb[0].mxu0 %v1157
        %v1196 = vpop.f32.mrb[0].mxu0
        %v1197 = vadd.f32 0.0, %v1196
        %v1198 = vpop.f32.mrb[0].mxu0
        %v1199 = vpop.f32.mrb[0].mxu0
        %v1200 = vpop.f32.mrb[0].mxu0
        %1201 = vdwg.mxu0
        %v1203 = vsel %vm874, %v968, 0
        %v1206 = vsel %vm974, %v486, 0
        %1208 = vmatprep.subr.bf16.mxu0 0
        %1209 = vmatpush1.bf16.msra.mxu0 %v1206
        %1210 = vmatprep.subr.bf16.mxu0 0
        %1211 = vmatpush1.bf16.msra.mxu0 0
        %1212 = vmatprep.subr.bf16.mxu0 0
        %1213 = vmatpush1.bf16.msra.mxu0 0
        %1214 = vmatprep.subr.bf16.mxu0 0
        %1215 = vmatpush1.bf16.msra.mxu0 0
        %1216 = vmatprep.subr.bf16.mxu0 0
        %1217 = vmatpush1.bf16.msra.mxu0 0
        %1218 = vmatprep.subr.bf16.mxu0 0
        %1219 = vmatpush1.bf16.msra.mxu0 0
        %1220 = vmatprep.subr.bf16.mxu0 0
        %1221 = vmatpush1.bf16.msra.mxu0 0
        %1222 = vmatprep.subr.bf16.mxu0 0
        %1223 = vmatpush1.bf16.msra.mxu0 0
        %1224 = vmatprep.subr.bf16.mxu0 0
        %1225 = vmatpush1.bf16.msra.mxu0 0
        %1226 = vmatprep.subr.bf16.mxu0 0
        %1227 = vmatpush1.bf16.msra.mxu0 0
        %1228 = vmatprep.subr.bf16.mxu0 0
        %1229 = vmatpush1.bf16.msra.mxu0 0
        %1230 = vmatprep.subr.bf16.mxu0 0
        %1231 = vmatpush1.bf16.msra.mxu0 0
        %1232 = vmatprep.subr.bf16.mxu0 0
        %1233 = vmatpush1.bf16.msra.mxu0 0
        %1234 = vmatprep.subr.bf16.mxu0 0
        %1235 = vmatpush1.bf16.msra.mxu0 0
        %1236 = vmatprep.subr.bf16.mxu0 0
        %1237 = vmatpush1.bf16.msra.mxu0 0
        %1238 = vmatprep.subr.bf16.mxu0 0
        %1239 = vmatpush1.bf16.msra.mxu0 0
        %1240 = vmatprep.mubr.bf16.mxu0 0
        %1241 = vmatmul.mubr.bf16.gmra.mrb[0].mxu0 %v1203
        %v1242 = vpop.f32.mrb[0].mxu0
        %v1243 = vadd.f32 0.0, %v1242
        %v1244 = vpop.f32.mrb[0].mxu0
        %v1245 = vpop.f32.mrb[0].mxu0
        %v1246 = vpop.f32.mrb[0].mxu0
        %1247 = vdwg.mxu0
        %v1249 = vsel %vm874, %v969, 0
        %v1252 = vsel %vm974, %v487, 0
        %1254 = vmatprep.subr.bf16.mxu0 0
        %1255 = vmatpush1.bf16.msra.mxu0 %v1252
        %1256 = vmatprep.subr.bf16.mxu0 0
        %1257 = vmatpush1.bf16.msra.mxu0 0
        %1258 = vmatprep.subr.bf16.mxu0 0
        %1259 = vmatpush1.bf16.msra.mxu0 0
        %1260 = vmatprep.subr.bf16.mxu0 0
        %1261 = vmatpush1.bf16.msra.mxu0 0
        %1262 = vmatprep.subr.bf16.mxu0 0
        %1263 = vmatpush1.bf16.msra.mxu0 0
        %1264 = vmatprep.subr.bf16.mxu0 0
        %1265 = vmatpush1.bf16.msra.mxu0 0
        %1266 = vmatprep.subr.bf16.mxu0 0
        %1267 = vmatpush1.bf16.msra.mxu0 0
        %1268 = vmatprep.subr.bf16.mxu0 0
        %1269 = vmatpush1.bf16.msra.mxu0 0
        %1270 = vmatprep.subr.bf16.mxu0 0
        %1271 = vmatpush1.bf16.msra.mxu0 0
        %1272 = vmatprep.subr.bf16.mxu0 0
        %1273 = vmatpush1.bf16.msra.mxu0 0
        %1274 = vmatprep.subr.bf16.mxu0 0
        %1275 = vmatpush1.bf16.msra.mxu0 0
        %1276 = vmatprep.subr.bf16.mxu0 0
        %1277 = vmatpush1.bf16.msra.mxu0 0
        %1278 = vmatprep.subr.bf16.mxu0 0
        %1279 = vmatpush1.bf16.msra.mxu0 0
        %1280 = vmatprep.subr.bf16.mxu0 0
        %1281 = vmatpush1.bf16.msra.mxu0 0
        %1282 = vmatprep.subr.bf16.mxu0 0
        %1283 = vmatpush1.bf16.msra.mxu0 0
        %1284 = vmatprep.subr.bf16.mxu0 0
        %1285 = vmatpush1.bf16.msra.mxu0 0
        %1286 = vmatprep.mubr.bf16.mxu0 0
        %1287 = vmatmul.mubr.bf16.gmra.mrb[0].mxu0 %v1249
        %v1288 = vpop.f32.mrb[0].mxu0
        %v1289 = vadd.f32 0.0, %v1288
        %v1290 = vpop.f32.mrb[0].mxu0
        %v1291 = vpop.f32.mrb[0].mxu0
        %v1292 = vpop.f32.mrb[0].mxu0
        %1293 = vdwg.mxu0
        %v1295 = vsel %vm874, %v970, 0
        %v1298 = vsel %vm974, %v488, 0
        %1300 = vmatprep.subr.bf16.mxu0 0
        %1301 = vmatpush1.bf16.msra.mxu0 %v1298
        %1302 = vmatprep.subr.bf16.mxu0 0
        %1303 = vmatpush1.bf16.msra.mxu0 0
        %1304 = vmatprep.subr.bf16.mxu0 0
        %1305 = vmatpush1.bf16.msra.mxu0 0
        %1306 = vmatprep.subr.bf16.mxu0 0
        %1307 = vmatpush1.bf16.msra.mxu0 0
        %1308 = vmatprep.subr.bf16.mxu0 0
        %1309 = vmatpush1.bf16.msra.mxu0 0
        %1310 = vmatprep.subr.bf16.mxu0 0
        %1311 = vmatpush1.bf16.msra.mxu0 0
        %1312 = vmatprep.subr.bf16.mxu0 0
        %1313 = vmatpush1.bf16.msra.mxu0 0
        %1314 = vmatprep.subr.bf16.mxu0 0
        %1315 = vmatpush1.bf16.msra.mxu0 0
        %1316 = vmatprep.subr.bf16.mxu0 0
        %1317 = vmatpush1.bf16.msra.mxu0 0
        %1318 = vmatprep.subr.bf16.mxu0 0
        %1319 = vmatpush1.bf16.msra.mxu0 0
        %1320 = vmatprep.subr.bf16.mxu0 0
        %1321 = vmatpush1.bf16.msra.mxu0 0
        %1322 = vmatprep.subr.bf16.mxu0 0
        %1323 = vmatpush1.bf16.msra.mxu0 0
        %1324 = vmatprep.subr.bf16.mxu0 0
        %1325 = vmatpush1.bf16.msra.mxu0 0
        %1326 = vmatprep.subr.bf16.mxu0 0
        %1327 = vmatpush1.bf16.msra.mxu0 0
        %1328 = vmatprep.subr.bf16.mxu0 0
        %1329 = vmatpush1.bf16.msra.mxu0 0
        %1330 = vmatprep.subr.bf16.mxu0 0
        %1331 = vmatpush1.bf16.msra.mxu0 0
        %1332 = vmatprep.mubr.bf16.mxu0 0
        %1333 = vmatmul.mubr.bf16.gmra.mrb[0].mxu0 %v1295
        %v1334 = vpop.f32.mrb[0].mxu0
        %v1335 = vadd.f32 0.0, %v1334
        %v1336 = vpop.f32.mrb[0].mxu0
        %v1337 = vpop.f32.mrb[0].mxu0
        %v1338 = vpop.f32.mrb[0].mxu0
        %1339 = vdwg.mxu0
        %v1340 = vld [vmem:[#allocation3] sm:$0xff]
        %v1341 = vld [vmem:[#allocation3 + $0x8] sm:$0xff]
        %v1342 = vld [vmem:[#allocation3 + $0x10] sm:$0xff]
        %v1343 = vld [vmem:[#allocation3 + $0x18] sm:$0xff]
        %v1344 = vld [vmem:[#allocation3 + $0x20] sm:$0xff]
        %v1345 = vld [vmem:[#allocation3 + $0x28] sm:$0xff]
        %v1346 = vld [vmem:[#allocation3 + $0x30] sm:$0xff]
        %v1347 = vld [vmem:[#allocation3 + $0x38] sm:$0xff]
        %v1348 = vpack.c.bf16 %v1059, %v1013
        %v1349 = vpack.c.bf16 %v1151, %v1105
        %v1350 = vpack.c.bf16 %v1243, %v1197
        %v1351 = vpack.c.bf16 %v1335, %v1289
        %v1352 = vld [vmem:[#allocation9] sm:$0xf]
        %v1353 = vld [vmem:[#allocation9 + $0x4] sm:$0xf]
        %v1356 = vunpack.c.l.b16 %v1352
        %v1357 = vunpack.c.l.b16 %v1353
        %v1358 = vpack.c.b16 %v1357, %v1356
        %v1361 = vsel %vm491, %v1348, 0
        %v1364 = vsel %vm491, %v1349, 0
        %v1367 = vsel %vm491, %v1350, 0
        %v1370 = vsel %vm491, %v1351, 0
        %1372 = vmatprep.subr.bf16.mxu0 0
        %1373 = vmatpush1.bf16.msra.mxu0 %v1358
        %1374 = vmatprep.subr.bf16.mxu0 0
        %1375 = vmatpush1.bf16.msra.mxu0 0
        %1376 = vmatprep.subr.bf16.mxu0 0
        %1377 = vmatpush1.bf16.msra.mxu0 0
        %1378 = vmatprep.subr.bf16.mxu0 0
        %1379 = vmatpush1.bf16.msra.mxu0 0
        %1380 = vmatprep.subr.bf16.mxu0 0
        %1381 = vmatpush1.bf16.msra.mxu0 0
        %1382 = vmatprep.subr.bf16.mxu0 0
        %1383 = vmatpush1.bf16.msra.mxu0 0
        %1384 = vmatprep.subr.bf16.mxu0 0
        %1385 = vmatpush1.bf16.msra.mxu0 0
        %1386 = vmatprep.subr.bf16.mxu0 0
        %1387 = vmatpush1.bf16.msra.mxu0 0
        %1388 = vmatprep.subr.bf16.mxu0 0
        %1389 = vmatpush1.bf16.msra.mxu0 0
        %1390 = vmatprep.subr.bf16.mxu0 0
        %1391 = vmatpush1.bf16.msra.mxu0 0
        %1392 = vmatprep.subr.bf16.mxu0 0
        %1393 = vmatpush1.bf16.msra.mxu0 0
        %1394 = vmatprep.subr.bf16.mxu0 0
        %1395 = vmatpush1.bf16.msra.mxu0 0
        %1396 = vmatprep.subr.bf16.mxu0 0
        %1397 = vmatpush1.bf16.msra.mxu0 0
        %1398 = vmatprep.subr.bf16.mxu0 0
        %1399 = vmatpush1.bf16.msra.mxu0 0
        %1400 = vmatprep.subr.bf16.mxu0 0
        %1401 = vmatpush1.bf16.msra.mxu0 0
        %1402 = vmatprep.subr.bf16.mxu0 0
        %1403 = vmatpush1.bf16.msra.mxu0 0
        %1404 = vmatprep.mubr.bf16.mxu0 0
        %1405 = vmatmul.mubr.bf16.gmra.mrb[0].mxu0 %v1361
        %v1406 = vpop.f32.mrb[0].mxu0
        %v1407 = vadd.f32 0.0, %v1406
        %v1408 = vpop.f32.mrb[0].mxu0
        %v1409 = vpop.f32.mrb[0].mxu0
        %v1410 = vadd.f32 0.0, %v1409
        %v1411 = vpop.f32.mrb[0].mxu0
        %1412 = vmatprep.mubr.bf16.mxu0 0
        %1413 = vmatmul.mubr.bf16.gmra.mrb[0].mxu0 %v1364
        %v1414 = vpop.f32.mrb[0].mxu0
        %v1415 = vadd.f32 0.0, %v1414
        %v1416 = vpop.f32.mrb[0].mxu0
        %v1417 = vpop.f32.mrb[0].mxu0
        %v1418 = vadd.f32 0.0, %v1417
        %v1419 = vpop.f32.mrb[0].mxu0
        %1420 = vmatprep.mubr.bf16.mxu0 0
        %1421 = vmatmul.mubr.bf16.gmra.mrb[0].mxu0 %v1367
        %v1422 = vpop.f32.mrb[0].mxu0
        %v1423 = vadd.f32 0.0, %v1422
        %v1424 = vpop.f32.mrb[0].mxu0
        %v1425 = vpop.f32.mrb[0].mxu0
        %v1426 = vadd.f32 0.0, %v1425
        %v1427 = vpop.f32.mrb[0].mxu0
        %1428 = vmatprep.mubr.bf16.mxu0 0
        %1429 = vmatmul.mubr.bf16.gmra.mrb[0].mxu0 %v1370
        %v1430 = vpop.f32.mrb[0].mxu0
        %v1431 = vadd.f32 0.0, %v1430
        %v1432 = vpop.f32.mrb[0].mxu0
        %v1433 = vpop.f32.mrb[0].mxu0
        %v1434 = vadd.f32 0.0, %v1433
        %v1435 = vpop.f32.mrb[0].mxu0
        %1436 = vdwg.mxu0
        %v1437 = vadd.f32 %v1340, %v1407
        %v1438 = vadd.f32 %v1341, %v1410
        %v1439 = vadd.f32 %v1342, %v1415
        %v1440 = vadd.f32 %v1343, %v1418
        %v1441 = vadd.f32 %v1344, %v1423
        %v1442 = vadd.f32 %v1345, %v1426
        %v1443 = vadd.f32 %v1346, %v1431
        %v1444 = vadd.f32 %v1347, %v1434
        %1445 = vst.msk [vmem:[#allocation3] sm:$0xff] %vm324, %v1437
        %1446 = vst.msk [vmem:[#allocation3 + $0x8] sm:$0xff] %vm324, %v1438
        %1447 = vst.msk [vmem:[#allocation3 + $0x10] sm:$0xff] %vm324, %v1439
        %1448 = vst.msk [vmem:[#allocation3 + $0x18] sm:$0xff] %vm324, %v1440
        %1449 = vst.msk [vmem:[#allocation3 + $0x20] sm:$0xff] %vm324, %v1441
        %1450 = vst.msk [vmem:[#allocation3 + $0x28] sm:$0xff] %vm324, %v1442
        %1451 = vst.msk [vmem:[#allocation3 + $0x30] sm:$0xff] %vm324, %v1443
        %1452 = vst.msk [vmem:[#allocation3 + $0x38] sm:$0xff] %vm324, %v1444
        %v1453 = vld [vmem:[#allocation2] sm:$0xff]
        %v1454 = vld [vmem:[#allocation2 + $0x10] sm:$0xff]
        %v1455 = vld [vmem:[#allocation2 + $0x20] sm:$0xff]
        %v1456 = vld [vmem:[#allocation2 + $0x30] sm:$0xff]
        %v1461 = vunpack.c.l.b16 %v1453
        %v1462 = vunpack.c.h.b16 %v1453
        %v1463 = vunpack.c.l.b16 %v1454
        %v1464 = vunpack.c.h.b16 %v1454
        %v1465 = vunpack.c.l.b16 %v1455
        %v1466 = vunpack.c.h.b16 %v1455
        %v1467 = vunpack.c.l.b16 %v1456
        %v1468 = vunpack.c.h.b16 %v1456
        %v1469 = vld [vmem:[#allocation2 + $0x8] sm:$0xff]
        %v1470 = vld [vmem:[#allocation2 + $0x18] sm:$0xff]
        %v1471 = vld [vmem:[#allocation2 + $0x28] sm:$0xff]
        %v1472 = vld [vmem:[#allocation2 + $0x38] sm:$0xff]
        %v1477 = vunpack.c.l.b16 %v1469
        %v1478 = vunpack.c.h.b16 %v1469
        %v1479 = vunpack.c.l.b16 %v1470
        %v1480 = vunpack.c.h.b16 %v1470
        %v1481 = vunpack.c.l.b16 %v1471
        %v1482 = vunpack.c.h.b16 %v1471
        %v1483 = vunpack.c.l.b16 %v1472
        %v1484 = vunpack.c.h.b16 %v1472
        %v1485 = vpack.c.b16 %v1461, %v1461
        %1486 = vrot.lane.b32.xlu0 %v1485, 112
        %v1487 = vpop.permute.xlu0 %1486
        %1488 = vrot.lane.b32.xlu0 %v1485, 48
        %v1489 = vpop.permute.xlu0 %1488
        %v1491 = vsel %vm491, %v1487, 0
        %v1494 = vsel %vm491, %v1489, 0
        %1496 = vmatprep.subr.bf16.mxu0 0
        %1497 = vmatpush1.bf16.xpose.msra.mxu0 %v1494
        %1498 = vmatprep.subr.bf16.mxu0 0
        %1499 = vmatpush1.bf16.xpose.msra.mxu0 0
        %1500 = vmatprep.subr.bf16.mxu0 0
        %1501 = vmatpush1.bf16.xpose.msra.mxu0 0
        %1502 = vmatprep.subr.bf16.mxu0 0
        %1503 = vmatpush1.bf16.xpose.msra.mxu0 0
        %1504 = vmatprep.subr.bf16.mxu0 0
        %1505 = vmatpush1.bf16.xpose.msra.mxu0 0
        %1506 = vmatprep.subr.bf16.mxu0 0
        %1507 = vmatpush1.bf16.xpose.msra.mxu0 0
        %1508 = vmatprep.subr.bf16.mxu0 0
        %1509 = vmatpush1.bf16.xpose.msra.mxu0 0
        %1510 = vmatprep.subr.bf16.mxu0 0
        %1511 = vmatpush1.bf16.xpose.msra.mxu0 0
        %1512 = vmatprep.subr.bf16.mxu0 0
        %1513 = vmatpush1.bf16.xpose.msra.mxu0 0
        %1514 = vmatprep.subr.bf16.mxu0 0
        %1515 = vmatpush1.bf16.xpose.msra.mxu0 0
        %1516 = vmatprep.subr.bf16.mxu0 0
        %1517 = vmatpush1.bf16.xpose.msra.mxu0 0
        %1518 = vmatprep.subr.bf16.mxu0 0
        %1519 = vmatpush1.bf16.xpose.msra.mxu0 0
        %1520 = vmatprep.subr.bf16.mxu0 0
        %1521 = vmatpush1.bf16.xpose.msra.mxu0 0
        %1522 = vmatprep.subr.bf16.mxu0 0
        %1523 = vmatpush1.bf16.xpose.msra.mxu0 0
        %1524 = vmatprep.subr.bf16.mxu0 0
        %1525 = vmatpush1.bf16.xpose.msra.mxu0 0
        %1526 = vmatprep.subr.bf16.mxu0 0
        %1527 = vmatpush1.bf16.xpose.msra.mxu0 0
        %1528 = vmatprep.mubr.bf16.mxu0 0
        %1529 = vmatmul.mubr.bf16.gmra.mrb[0].mxu0 %v1491
        %v1530 = vpop.f32.mrb[0].mxu0
        %v1531 = vadd.f32 0.0, %v1530
        %v1532 = vpop.f32.mrb[0].mxu0
        %v1533 = vpop.f32.mrb[0].mxu0
        %v1534 = vpop.f32.mrb[0].mxu0
        %1535 = vdwg.mxu0
        %v1536 = vpack.c.b16 %v1462, %v1462
        %1537 = vrot.lane.b32.xlu0 %v1536, 112
        %v1538 = vpop.permute.xlu0 %1537
        %1539 = vrot.lane.b32.xlu0 %v1536, 48
        %v1540 = vpop.permute.xlu0 %1539
        %v1542 = vsel %vm491, %v1538, 0
        %v1545 = vsel %vm491, %v1540, 0
        %1547 = vmatprep.subr.bf16.mxu0 0
        %1548 = vmatpush1.bf16.xpose.msra.mxu0 %v1545
        %1549 = vmatprep.subr.bf16.mxu0 0
        %1550 = vmatpush1.bf16.xpose.msra.mxu0 0
        %1551 = vmatprep.subr.bf16.mxu0 0
        %1552 = vmatpush1.bf16.xpose.msra.mxu0 0
        %1553 = vmatprep.subr.bf16.mxu0 0
        %1554 = vmatpush1.bf16.xpose.msra.mxu0 0
        %1555 = vmatprep.subr.bf16.mxu0 0
        %1556 = vmatpush1.bf16.xpose.msra.mxu0 0
        %1557 = vmatprep.subr.bf16.mxu0 0
        %1558 = vmatpush1.bf16.xpose.msra.mxu0 0
        %1559 = vmatprep.subr.bf16.mxu0 0
        %1560 = vmatpush1.bf16.xpose.msra.mxu0 0
        %1561 = vmatprep.subr.bf16.mxu0 0
        %1562 = vmatpush1.bf16.xpose.msra.mxu0 0
        %1563 = vmatprep.subr.bf16.mxu0 0
        %1564 = vmatpush1.bf16.xpose.msra.mxu0 0
        %1565 = vmatprep.subr.bf16.mxu0 0
        %1566 = vmatpush1.bf16.xpose.msra.mxu0 0
        %1567 = vmatprep.subr.bf16.mxu0 0
        %1568 = vmatpush1.bf16.xpose.msra.mxu0 0
        %1569 = vmatprep.subr.bf16.mxu0 0
        %1570 = vmatpush1.bf16.xpose.msra.mxu0 0
        %1571 = vmatprep.subr.bf16.mxu0 0
        %1572 = vmatpush1.bf16.xpose.msra.mxu0 0
        %1573 = vmatprep.subr.bf16.mxu0 0
        %1574 = vmatpush1.bf16.xpose.msra.mxu0 0
        %1575 = vmatprep.subr.bf16.mxu0 0
        %1576 = vmatpush1.bf16.xpose.msra.mxu0 0
        %1577 = vmatprep.subr.bf16.mxu0 0
        %1578 = vmatpush1.bf16.xpose.msra.mxu0 0
        %1579 = vmatprep.mubr.bf16.mxu0 0
        %1580 = vmatmul.mubr.bf16.gmra.mrb[0].mxu0 %v1542
        %v1581 = vpop.f32.mrb[0].mxu0
        %v1582 = vadd.f32 0.0, %v1581
        %v1583 = vpop.f32.mrb[0].mxu0
        %v1584 = vpop.f32.mrb[0].mxu0
        %v1585 = vpop.f32.mrb[0].mxu0
        %1586 = vdwg.mxu0
        %v1587 = vpack.c.b16 %v1463, %v1463
        %1588 = vrot.lane.b32.xlu0 %v1587, 112
        %v1589 = vpop.permute.xlu0 %1588
        %1590 = vrot.lane.b32.xlu0 %v1587, 48
        %v1591 = vpop.permute.xlu0 %1590
        %v1593 = vsel %vm491, %v1589, 0
        %v1596 = vsel %vm491, %v1591, 0
        %1598 = vmatprep.subr.bf16.mxu0 0
        %1599 = vmatpush1.bf16.xpose.msra.mxu0 %v1596
        %1600 = vmatprep.subr.bf16.mxu0 0
        %1601 = vmatpush1.bf16.xpose.msra.mxu0 0
        %1602 = vmatprep.subr.bf16.mxu0 0
        %1603 = vmatpush1.bf16.xpose.msra.mxu0 0
        %1604 = vmatprep.subr.bf16.mxu0 0
        %1605 = vmatpush1.bf16.xpose.msra.mxu0 0
        %1606 = vmatprep.subr.bf16.mxu0 0
        %1607 = vmatpush1.bf16.xpose.msra.mxu0 0
        %1608 = vmatprep.subr.bf16.mxu0 0
        %1609 = vmatpush1.bf16.xpose.msra.mxu0 0
        %1610 = vmatprep.subr.bf16.mxu0 0
        %1611 = vmatpush1.bf16.xpose.msra.mxu0 0
        %1612 = vmatprep.subr.bf16.mxu0 0
        %1613 = vmatpush1.bf16.xpose.msra.mxu0 0
        %1614 = vmatprep.subr.bf16.mxu0 0
        %1615 = vmatpush1.bf16.xpose.msra.mxu0 0
        %1616 = vmatprep.subr.bf16.mxu0 0
        %1617 = vmatpush1.bf16.xpose.msra.mxu0 0
        %1618 = vmatprep.subr.bf16.mxu0 0
        %1619 = vmatpush1.bf16.xpose.msra.mxu0 0
        %1620 = vmatprep.subr.bf16.mxu0 0
        %1621 = vmatpush1.bf16.xpose.msra.mxu0 0
        %1622 = vmatprep.subr.bf16.mxu0 0
        %1623 = vmatpush1.bf16.xpose.msra.mxu0 0
        %1624 = vmatprep.subr.bf16.mxu0 0
        %1625 = vmatpush1.bf16.xpose.msra.mxu0 0
        %1626 = vmatprep.subr.bf16.mxu0 0
        %1627 = vmatpush1.bf16.xpose.msra.mxu0 0
        %1628 = vmatprep.subr.bf16.mxu0 0
        %1629 = vmatpush1.bf16.xpose.msra.mxu0 0
        %1630 = vmatprep.mubr.bf16.mxu0 0
        %1631 = vmatmul.mubr.bf16.gmra.mrb[0].mxu0 %v1593
        %v1632 = vpop.f32.mrb[0].mxu0
        %v1633 = vadd.f32 0.0, %v1632
        %v1634 = vpop.f32.mrb[0].mxu0
        %v1635 = vpop.f32.mrb[0].mxu0
        %v1636 = vpop.f32.mrb[0].mxu0
        %1637 = vdwg.mxu0
        %v1638 = vpack.c.b16 %v1464, %v1464
        %1639 = vrot.lane.b32.xlu0 %v1638, 112
        %v1640 = vpop.permute.xlu0 %1639
        %1641 = vrot.lane.b32.xlu0 %v1638, 48
        %v1642 = vpop.permute.xlu0 %1641
        %v1644 = vsel %vm491, %v1640, 0
        %v1647 = vsel %vm491, %v1642, 0
        %1649 = vmatprep.subr.bf16.mxu0 0
        %1650 = vmatpush1.bf16.xpose.msra.mxu0 %v1647
        %1651 = vmatprep.subr.bf16.mxu0 0
        %1652 = vmatpush1.bf16.xpose.msra.mxu0 0
        %1653 = vmatprep.subr.bf16.mxu0 0
        %1654 = vmatpush1.bf16.xpose.msra.mxu0 0
        %1655 = vmatprep.subr.bf16.mxu0 0
        %1656 = vmatpush1.bf16.xpose.msra.mxu0 0
        %1657 = vmatprep.subr.bf16.mxu0 0
        %1658 = vmatpush1.bf16.xpose.msra.mxu0 0
        %1659 = vmatprep.subr.bf16.mxu0 0
        %1660 = vmatpush1.bf16.xpose.msra.mxu0 0
        %1661 = vmatprep.subr.bf16.mxu0 0
        %1662 = vmatpush1.bf16.xpose.msra.mxu0 0
        %1663 = vmatprep.subr.bf16.mxu0 0
        %1664 = vmatpush1.bf16.xpose.msra.mxu0 0
        %1665 = vmatprep.subr.bf16.mxu0 0
        %1666 = vmatpush1.bf16.xpose.msra.mxu0 0
        %1667 = vmatprep.subr.bf16.mxu0 0
        %1668 = vmatpush1.bf16.xpose.msra.mxu0 0
        %1669 = vmatprep.subr.bf16.mxu0 0
        %1670 = vmatpush1.bf16.xpose.msra.mxu0 0
        %1671 = vmatprep.subr.bf16.mxu0 0
        %1672 = vmatpush1.bf16.xpose.msra.mxu0 0
        %1673 = vmatprep.subr.bf16.mxu0 0
        %1674 = vmatpush1.bf16.xpose.msra.mxu0 0
        %1675 = vmatprep.subr.bf16.mxu0 0
        %1676 = vmatpush1.bf16.xpose.msra.mxu0 0
        %1677 = vmatprep.subr.bf16.mxu0 0
        %1678 = vmatpush1.bf16.xpose.msra.mxu0 0
        %1679 = vmatprep.subr.bf16.mxu0 0
        %1680 = vmatpush1.bf16.xpose.msra.mxu0 0
        %1681 = vmatprep.mubr.bf16.mxu0 0
        %1682 = vmatmul.mubr.bf16.gmra.mrb[0].mxu0 %v1644
        %v1683 = vpop.f32.mrb[0].mxu0
        %v1684 = vadd.f32 0.0, %v1683
        %v1685 = vpop.f32.mrb[0].mxu0
        %v1686 = vpop.f32.mrb[0].mxu0
        %v1687 = vpop.f32.mrb[0].mxu0
        %1688 = vdwg.mxu0
        %v1689 = vpack.c.b16 %v1465, %v1465
        %1690 = vrot.lane.b32.xlu0 %v1689, 112
        %v1691 = vpop.permute.xlu0 %1690
        %1692 = vrot.lane.b32.xlu0 %v1689, 48
        %v1693 = vpop.permute.xlu0 %1692
        %v1695 = vsel %vm491, %v1691, 0
        %v1698 = vsel %vm491, %v1693, 0
        %1700 = vmatprep.subr.bf16.mxu0 0
        %1701 = vmatpush1.bf16.xpose.msra.mxu0 %v1698
        %1702 = vmatprep.subr.bf16.mxu0 0
        %1703 = vmatpush1.bf16.xpose.msra.mxu0 0
        %1704 = vmatprep.subr.bf16.mxu0 0
        %1705 = vmatpush1.bf16.xpose.msra.mxu0 0
        %1706 = vmatprep.subr.bf16.mxu0 0
        %1707 = vmatpush1.bf16.xpose.msra.mxu0 0
        %1708 = vmatprep.subr.bf16.mxu0 0
        %1709 = vmatpush1.bf16.xpose.msra.mxu0 0
        %1710 = vmatprep.subr.bf16.mxu0 0
        %1711 = vmatpush1.bf16.xpose.msra.mxu0 0
        %1712 = vmatprep.subr.bf16.mxu0 0
        %1713 = vmatpush1.bf16.xpose.msra.mxu0 0
        %1714 = vmatprep.subr.bf16.mxu0 0
        %1715 = vmatpush1.bf16.xpose.msra.mxu0 0
        %1716 = vmatprep.subr.bf16.mxu0 0
        %1717 = vmatpush1.bf16.xpose.msra.mxu0 0
        %1718 = vmatprep.subr.bf16.mxu0 0
        %1719 = vmatpush1.bf16.xpose.msra.mxu0 0
        %1720 = vmatprep.subr.bf16.mxu0 0
        %1721 = vmatpush1.bf16.xpose.msra.mxu0 0
        %1722 = vmatprep.subr.bf16.mxu0 0
        %1723 = vmatpush1.bf16.xpose.msra.mxu0 0
        %1724 = vmatprep.subr.bf16.mxu0 0
        %1725 = vmatpush1.bf16.xpose.msra.mxu0 0
        %1726 = vmatprep.subr.bf16.mxu0 0
        %1727 = vmatpush1.bf16.xpose.msra.mxu0 0
        %1728 = vmatprep.subr.bf16.mxu0 0
        %1729 = vmatpush1.bf16.xpose.msra.mxu0 0
        %1730 = vmatprep.subr.bf16.mxu0 0
        %1731 = vmatpush1.bf16.xpose.msra.mxu0 0
        %1732 = vmatprep.mubr.bf16.mxu0 0
        %1733 = vmatmul.mubr.bf16.gmra.mrb[0].mxu0 %v1695
        %v1734 = vpop.f32.mrb[0].mxu0
        %v1735 = vadd.f32 0.0, %v1734
        %v1736 = vpop.f32.mrb[0].mxu0
        %v1737 = vpop.f32.mrb[0].mxu0
        %v1738 = vpop.f32.mrb[0].mxu0
        %1739 = vdwg.mxu0
        %v1740 = vpack.c.b16 %v1466, %v1466
        %1741 = vrot.lane.b32.xlu0 %v1740, 112
        %v1742 = vpop.permute.xlu0 %1741
        %1743 = vrot.lane.b32.xlu0 %v1740, 48
        %v1744 = vpop.permute.xlu0 %1743
        %v1746 = vsel %vm491, %v1742, 0
        %v1749 = vsel %vm491, %v1744, 0
        %1751 = vmatprep.subr.bf16.mxu0 0
        %1752 = vmatpush1.bf16.xpose.msra.mxu0 %v1749
        %1753 = vmatprep.subr.bf16.mxu0 0
        %1754 = vmatpush1.bf16.xpose.msra.mxu0 0
        %1755 = vmatprep.subr.bf16.mxu0 0
        %1756 = vmatpush1.bf16.xpose.msra.mxu0 0
        %1757 = vmatprep.subr.bf16.mxu0 0
        %1758 = vmatpush1.bf16.xpose.msra.mxu0 0
        %1759 = vmatprep.subr.bf16.mxu0 0
        %1760 = vmatpush1.bf16.xpose.msra.mxu0 0
        %1761 = vmatprep.subr.bf16.mxu0 0
        %1762 = vmatpush1.bf16.xpose.msra.mxu0 0
        %1763 = vmatprep.subr.bf16.mxu0 0
        %1764 = vmatpush1.bf16.xpose.msra.mxu0 0
        %1765 = vmatprep.subr.bf16.mxu0 0
        %1766 = vmatpush1.bf16.xpose.msra.mxu0 0
        %1767 = vmatprep.subr.bf16.mxu0 0
        %1768 = vmatpush1.bf16.xpose.msra.mxu0 0
        %1769 = vmatprep.subr.bf16.mxu0 0
        %1770 = vmatpush1.bf16.xpose.msra.mxu0 0
        %1771 = vmatprep.subr.bf16.mxu0 0
        %1772 = vmatpush1.bf16.xpose.msra.mxu0 0
        %1773 = vmatprep.subr.bf16.mxu0 0
        %1774 = vmatpush1.bf16.xpose.msra.mxu0 0
        %1775 = vmatprep.subr.bf16.mxu0 0
        %1776 = vmatpush1.bf16.xpose.msra.mxu0 0
        %1777 = vmatprep.subr.bf16.mxu0 0
        %1778 = vmatpush1.bf16.xpose.msra.mxu0 0
        %1779 = vmatprep.subr.bf16.mxu0 0
        %1780 = vmatpush1.bf16.xpose.msra.mxu0 0
        %1781 = vmatprep.subr.bf16.mxu0 0
        %1782 = vmatpush1.bf16.xpose.msra.mxu0 0
        %1783 = vmatprep.mubr.bf16.mxu0 0
        %1784 = vmatmul.mubr.bf16.gmra.mrb[0].mxu0 %v1746
        %v1785 = vpop.f32.mrb[0].mxu0
        %v1786 = vadd.f32 0.0, %v1785
        %v1787 = vpop.f32.mrb[0].mxu0
        %v1788 = vpop.f32.mrb[0].mxu0
        %v1789 = vpop.f32.mrb[0].mxu0
        %1790 = vdwg.mxu0
        %v1791 = vpack.c.b16 %v1467, %v1467
        %1792 = vrot.lane.b32.xlu0 %v1791, 112
        %v1793 = vpop.permute.xlu0 %1792
        %1794 = vrot.lane.b32.xlu0 %v1791, 48
        %v1795 = vpop.permute.xlu0 %1794
        %v1797 = vsel %vm491, %v1793, 0
        %v1800 = vsel %vm491, %v1795, 0
        %1802 = vmatprep.subr.bf16.mxu0 0
        %1803 = vmatpush1.bf16.xpose.msra.mxu0 %v1800
        %1804 = vmatprep.subr.bf16.mxu0 0
        %1805 = vmatpush1.bf16.xpose.msra.mxu0 0
        %1806 = vmatprep.subr.bf16.mxu0 0
        %1807 = vmatpush1.bf16.xpose.msra.mxu0 0
        %1808 = vmatprep.subr.bf16.mxu0 0
        %1809 = vmatpush1.bf16.xpose.msra.mxu0 0
        %1810 = vmatprep.subr.bf16.mxu0 0
        %1811 = vmatpush1.bf16.xpose.msra.mxu0 0
        %1812 = vmatprep.subr.bf16.mxu0 0
        %1813 = vmatpush1.bf16.xpose.msra.mxu0 0
        %1814 = vmatprep.subr.bf16.mxu0 0
        %1815 = vmatpush1.bf16.xpose.msra.mxu0 0
        %1816 = vmatprep.subr.bf16.mxu0 0
        %1817 = vmatpush1.bf16.xpose.msra.mxu0 0
        %1818 = vmatprep.subr.bf16.mxu0 0
        %1819 = vmatpush1.bf16.xpose.msra.mxu0 0
        %1820 = vmatprep.subr.bf16.mxu0 0
        %1821 = vmatpush1.bf16.xpose.msra.mxu0 0
        %1822 = vmatprep.subr.bf16.mxu0 0
        %1823 = vmatpush1.bf16.xpose.msra.mxu0 0
        %1824 = vmatprep.subr.bf16.mxu0 0
        %1825 = vmatpush1.bf16.xpose.msra.mxu0 0
        %1826 = vmatprep.subr.bf16.mxu0 0
        %1827 = vmatpush1.bf16.xpose.msra.mxu0 0
        %1828 = vmatprep.subr.bf16.mxu0 0
        %1829 = vmatpush1.bf16.xpose.msra.mxu0 0
        %1830 = vmatprep.subr.bf16.mxu0 0
        %1831 = vmatpush1.bf16.xpose.msra.mxu0 0
        %1832 = vmatprep.subr.bf16.mxu0 0
        %1833 = vmatpush1.bf16.xpose.msra.mxu0 0
        %1834 = vmatprep.mubr.bf16.mxu0 0
        %1835 = vmatmul.mubr.bf16.gmra.mrb[0].mxu0 %v1797
        %v1836 = vpop.f32.mrb[0].mxu0
        %v1837 = vadd.f32 0.0, %v1836
        %v1838 = vpop.f32.mrb[0].mxu0
        %v1839 = vpop.f32.mrb[0].mxu0
        %v1840 = vpop.f32.mrb[0].mxu0
        %1841 = vdwg.mxu0
        %v1842 = vpack.c.b16 %v1468, %v1468
        %1843 = vrot.lane.b32.xlu0 %v1842, 112
        %v1844 = vpop.permute.xlu0 %1843
        %1845 = vrot.lane.b32.xlu0 %v1842, 48
        %v1846 = vpop.permute.xlu0 %1845
        %v1848 = vsel %vm491, %v1844, 0
        %v1851 = vsel %vm491, %v1846, 0
        %1853 = vmatprep.subr.bf16.mxu0 0
        %1854 = vmatpush1.bf16.xpose.msra.mxu0 %v1851
        %1855 = vmatprep.subr.bf16.mxu0 0
        %1856 = vmatpush1.bf16.xpose.msra.mxu0 0
        %1857 = vmatprep.subr.bf16.mxu0 0
        %1858 = vmatpush1.bf16.xpose.msra.mxu0 0
        %1859 = vmatprep.subr.bf16.mxu0 0
        %1860 = vmatpush1.bf16.xpose.msra.mxu0 0
        %1861 = vmatprep.subr.bf16.mxu0 0
        %1862 = vmatpush1.bf16.xpose.msra.mxu0 0
        %1863 = vmatprep.subr.bf16.mxu0 0
        %1864 = vmatpush1.bf16.xpose.msra.mxu0 0
        %1865 = vmatprep.subr.bf16.mxu0 0
        %1866 = vmatpush1.bf16.xpose.msra.mxu0 0
        %1867 = vmatprep.subr.bf16.mxu0 0
        %1868 = vmatpush1.bf16.xpose.msra.mxu0 0
        %1869 = vmatprep.subr.bf16.mxu0 0
        %1870 = vmatpush1.bf16.xpose.msra.mxu0 0
        %1871 = vmatprep.subr.bf16.mxu0 0
        %1872 = vmatpush1.bf16.xpose.msra.mxu0 0
        %1873 = vmatprep.subr.bf16.mxu0 0
        %1874 = vmatpush1.bf16.xpose.msra.mxu0 0
        %1875 = vmatprep.subr.bf16.mxu0 0
        %1876 = vmatpush1.bf16.xpose.msra.mxu0 0
        %1877 = vmatprep.subr.bf16.mxu0 0
        %1878 = vmatpush1.bf16.xpose.msra.mxu0 0
        %1879 = vmatprep.subr.bf16.mxu0 0
        %1880 = vmatpush1.bf16.xpose.msra.mxu0 0
        %1881 = vmatprep.subr.bf16.mxu0 0
        %1882 = vmatpush1.bf16.xpose.msra.mxu0 0
        %1883 = vmatprep.subr.bf16.mxu0 0
        %1884 = vmatpush1.bf16.xpose.msra.mxu0 0
        %1885 = vmatprep.mubr.bf16.mxu0 0
        %1886 = vmatmul.mubr.bf16.gmra.mrb[0].mxu0 %v1848
        %v1887 = vpop.f32.mrb[0].mxu0
        %v1888 = vadd.f32 0.0, %v1887
        %v1889 = vpop.f32.mrb[0].mxu0
        %v1890 = vpop.f32.mrb[0].mxu0
        %v1891 = vpop.f32.mrb[0].mxu0
        %1892 = vdwg.mxu0
        %v1893 = vsel %vm874, %v1531, -inf
        %1894 = vmax.xlane.f32.xlu0 %v1893
        %v1895 = vpop.xlane.xlu0 %1894
        %v1896 = vsel %vm874, %v1582, -inf
        %1897 = vmax.xlane.f32.xlu0 %v1896
        %v1898 = vpop.xlane.xlu0 %1897
        %v1899 = vsel %vm874, %v1633, -inf
        %1900 = vmax.xlane.f32.xlu0 %v1899
        %v1901 = vpop.xlane.xlu0 %1900
        %v1902 = vsel %vm874, %v1684, -inf
        %1903 = vmax.xlane.f32.xlu0 %v1902
        %v1904 = vpop.xlane.xlu0 %1903
        %v1905 = vsel %vm874, %v1735, -inf
        %1906 = vmax.xlane.f32.xlu0 %v1905
        %v1907 = vpop.xlane.xlu0 %1906
        %v1908 = vsel %vm874, %v1786, -inf
        %1909 = vmax.xlane.f32.xlu0 %v1908
        %v1910 = vpop.xlane.xlu0 %1909
        %v1911 = vsel %vm874, %v1837, -inf
        %1912 = vmax.xlane.f32.xlu0 %v1911
        %v1913 = vpop.xlane.xlu0 %1912
        %v1914 = vsel %vm874, %v1888, -inf
        %1915 = vmax.xlane.f32.xlu0 %v1914
        %v1916 = vpop.xlane.xlu0 %1915
        %v1917 = vsub.f32 %v1531, %v1895
        %v1918 = vsub.f32 %v1582, %v1898
        %v1919 = vsub.f32 %v1633, %v1901
        %v1920 = vsub.f32 %v1684, %v1904
        %v1921 = vsub.f32 %v1735, %v1907
        %v1922 = vsub.f32 %v1786, %v1910
        %v1923 = vsub.f32 %v1837, %v1913
        %v1924 = vsub.f32 %v1888, %v1916
        %v1925 = vmul.f32 %v1917, 1.442695
        %v1926 = vpow.pop %v1925
        %v1927 = vmul.f32 %v1918, 1.442695
        %v1928 = vpow.pop %v1927
        %v1929 = vmul.f32 %v1919, 1.442695
        %v1930 = vpow.pop %v1929
        %v1931 = vmul.f32 %v1920, 1.442695
        %v1932 = vpow.pop %v1931
        %v1933 = vmul.f32 %v1921, 1.442695
        %v1934 = vpow.pop %v1933
        %v1935 = vmul.f32 %v1922, 1.442695
        %v1936 = vpow.pop %v1935
        %v1937 = vmul.f32 %v1923, 1.442695
        %v1938 = vpow.pop %v1937
        %v1939 = vmul.f32 %v1924, 1.442695
        %v1940 = vpow.pop %v1939
        %v1941 = vsel %vm874, %v1926, 0.0
        %1942 = vadd.xlane.f32.xlu0 %v1941
        %v1943 = vpop.xlane.xlu0 %1942
        %v1944 = vsel %vm874, %v1928, 0.0
        %1945 = vadd.xlane.f32.xlu0 %v1944
        %v1946 = vpop.xlane.xlu0 %1945
        %v1947 = vsel %vm874, %v1930, 0.0
        %1948 = vadd.xlane.f32.xlu0 %v1947
        %v1949 = vpop.xlane.xlu0 %1948
        %v1950 = vsel %vm874, %v1932, 0.0
        %1951 = vadd.xlane.f32.xlu0 %v1950
        %v1952 = vpop.xlane.xlu0 %1951
        %v1953 = vsel %vm874, %v1934, 0.0
        %1954 = vadd.xlane.f32.xlu0 %v1953
        %v1955 = vpop.xlane.xlu0 %1954
        %v1956 = vsel %vm874, %v1936, 0.0
        %1957 = vadd.xlane.f32.xlu0 %v1956
        %v1958 = vpop.xlane.xlu0 %1957
        %v1959 = vsel %vm874, %v1938, 0.0
        %1960 = vadd.xlane.f32.xlu0 %v1959
        %v1961 = vpop.xlane.xlu0 %1960
        %v1962 = vsel %vm874, %v1940, 0.0
        %1963 = vadd.xlane.f32.xlu0 %v1962
        %v1964 = vpop.xlane.xlu0 %1963
        %v1965 = vrcp.pop %v1943
        %v1966 = vrcp.pop %v1946
        %v1967 = vrcp.pop %v1949
        %v1968 = vrcp.pop %v1952
        %v1969 = vrcp.pop %v1955
        %v1970 = vrcp.pop %v1958
        %v1971 = vrcp.pop %v1961
        %v1972 = vrcp.pop %v1964
        %v1973 = vmul.f32 %v1926, %v1965
        %v1974 = vmul.f32 %v1928, %v1966
        %v1975 = vmul.f32 %v1930, %v1967
        %v1976 = vmul.f32 %v1932, %v1968
        %v1977 = vmul.f32 %v1934, %v1969
        %v1978 = vmul.f32 %v1936, %v1970
        %v1979 = vmul.f32 %v1938, %v1971
        %v1980 = vmul.f32 %v1940, %v1972
        %v1981 = vpack.c.bf16 %v1973, %v1973
        %v1982 = vpack.c.bf16 %v1974, %v1974
        %v1983 = vpack.c.bf16 %v1975, %v1975
        %v1984 = vpack.c.bf16 %v1976, %v1976
        %v1985 = vpack.c.bf16 %v1977, %v1977
        %v1986 = vpack.c.bf16 %v1978, %v1978
        %v1987 = vpack.c.bf16 %v1979, %v1979
        %v1988 = vpack.c.bf16 %v1980, %v1980
        %v1989 = vpack.c.b16 %v1477, %v1477
        %1990 = vrot.lane.b32.xlu0 %v1989, 112
        %v1991 = vpop.permute.xlu0 %1990
        %v1993 = vsel %vm874, %v1981, 0
        %v1996 = vsel %vm974, %v1991, 0
        %1998 = vmatprep.subr.bf16.mxu0 0
        %1999 = vmatpush1.bf16.msra.mxu0 %v1996
        %2000 = vmatprep.subr.bf16.mxu0 0
        %2001 = vmatpush1.bf16.msra.mxu0 0
        %2002 = vmatprep.subr.bf16.mxu0 0
        %2003 = vmatpush1.bf16.msra.mxu0 0
        %2004 = vmatprep.subr.bf16.mxu0 0
        %2005 = vmatpush1.bf16.msra.mxu0 0
        %2006 = vmatprep.subr.bf16.mxu0 0
        %2007 = vmatpush1.bf16.msra.mxu0 0
        %2008 = vmatprep.subr.bf16.mxu0 0
        %2009 = vmatpush1.bf16.msra.mxu0 0
        %2010 = vmatprep.subr.bf16.mxu0 0
        %2011 = vmatpush1.bf16.msra.mxu0 0
        %2012 = vmatprep.subr.bf16.mxu0 0
        %2013 = vmatpush1.bf16.msra.mxu0 0
        %2014 = vmatprep.subr.bf16.mxu0 0
        %2015 = vmatpush1.bf16.msra.mxu0 0
        %2016 = vmatprep.subr.bf16.mxu0 0
        %2017 = vmatpush1.bf16.msra.mxu0 0
        %2018 = vmatprep.subr.bf16.mxu0 0
        %2019 = vmatpush1.bf16.msra.mxu0 0
        %2020 = vmatprep.subr.bf16.mxu0 0
        %2021 = vmatpush1.bf16.msra.mxu0 0
        %2022 = vmatprep.subr.bf16.mxu0 0
        %2023 = vmatpush1.bf16.msra.mxu0 0
        %2024 = vmatprep.subr.bf16.mxu0 0
        %2025 = vmatpush1.bf16.msra.mxu0 0
        %2026 = vmatprep.subr.bf16.mxu0 0
        %2027 = vmatpush1.bf16.msra.mxu0 0
        %2028 = vmatprep.subr.bf16.mxu0 0
        %2029 = vmatpush1.bf16.msra.mxu0 0
        %2030 = vmatprep.mubr.bf16.mxu0 0
        %2031 = vmatmul.mubr.bf16.gmra.mrb[0].mxu0 %v1993
        %v2032 = vpop.f32.mrb[0].mxu0
        %v2033 = vadd.f32 0.0, %v2032
        %v2034 = vpop.f32.mrb[0].mxu0
        %v2035 = vpop.f32.mrb[0].mxu0
        %v2036 = vpop.f32.mrb[0].mxu0
        %2037 = vdwg.mxu0
        %v2038 = vpack.c.b16 %v1478, %v1478
        %2039 = vrot.lane.b32.xlu0 %v2038, 112
        %v2040 = vpop.permute.xlu0 %2039
        %v2042 = vsel %vm874, %v1982, 0
        %v2045 = vsel %vm974, %v2040, 0
        %2047 = vmatprep.subr.bf16.mxu0 0
        %2048 = vmatpush1.bf16.msra.mxu0 %v2045
        %2049 = vmatprep.subr.bf16.mxu0 0
        %2050 = vmatpush1.bf16.msra.mxu0 0
        %2051 = vmatprep.subr.bf16.mxu0 0
        %2052 = vmatpush1.bf16.msra.mxu0 0
        %2053 = vmatprep.subr.bf16.mxu0 0
        %2054 = vmatpush1.bf16.msra.mxu0 0
        %2055 = vmatprep.subr.bf16.mxu0 0
        %2056 = vmatpush1.bf16.msra.mxu0 0
        %2057 = vmatprep.subr.bf16.mxu0 0
        %2058 = vmatpush1.bf16.msra.mxu0 0
        %2059 = vmatprep.subr.bf16.mxu0 0
        %2060 = vmatpush1.bf16.msra.mxu0 0
        %2061 = vmatprep.subr.bf16.mxu0 0
        %2062 = vmatpush1.bf16.msra.mxu0 0
        %2063 = vmatprep.subr.bf16.mxu0 0
        %2064 = vmatpush1.bf16.msra.mxu0 0
        %2065 = vmatprep.subr.bf16.mxu0 0
        %2066 = vmatpush1.bf16.msra.mxu0 0
        %2067 = vmatprep.subr.bf16.mxu0 0
        %2068 = vmatpush1.bf16.msra.mxu0 0
        %2069 = vmatprep.subr.bf16.mxu0 0
        %2070 = vmatpush1.bf16.msra.mxu0 0
        %2071 = vmatprep.subr.bf16.mxu0 0
        %2072 = vmatpush1.bf16.msra.mxu0 0
        %2073 = vmatprep.subr.bf16.mxu0 0
        %2074 = vmatpush1.bf16.msra.mxu0 0
        %2075 = vmatprep.subr.bf16.mxu0 0
        %2076 = vmatpush1.bf16.msra.mxu0 0
        %2077 = vmatprep.subr.bf16.mxu0 0
        %2078 = vmatpush1.bf16.msra.mxu0 0
        %2079 = vmatprep.mubr.bf16.mxu0 0
        %2080 = vmatmul.mubr.bf16.gmra.mrb[0].mxu0 %v2042
        %v2081 = vpop.f32.mrb[0].mxu0
        %v2082 = vadd.f32 0.0, %v2081
        %v2083 = vpop.f32.mrb[0].mxu0
        %v2084 = vpop.f32.mrb[0].mxu0
        %v2085 = vpop.f32.mrb[0].mxu0
        %2086 = vdwg.mxu0
        %v2087 = vpack.c.b16 %v1479, %v1479
        %2088 = vrot.lane.b32.xlu0 %v2087, 112
        %v2089 = vpop.permute.xlu0 %2088
        %v2091 = vsel %vm874, %v1983, 0
        %v2094 = vsel %vm974, %v2089, 0
        %2096 = vmatprep.subr.bf16.mxu0 0
        %2097 = vmatpush1.bf16.msra.mxu0 %v2094
        %2098 = vmatprep.subr.bf16.mxu0 0
        %2099 = vmatpush1.bf16.msra.mxu0 0
        %2100 = vmatprep.subr.bf16.mxu0 0
        %2101 = vmatpush1.bf16.msra.mxu0 0
        %2102 = vmatprep.subr.bf16.mxu0 0
        %2103 = vmatpush1.bf16.msra.mxu0 0
        %2104 = vmatprep.subr.bf16.mxu0 0
        %2105 = vmatpush1.bf16.msra.mxu0 0
        %2106 = vmatprep.subr.bf16.mxu0 0
        %2107 = vmatpush1.bf16.msra.mxu0 0
        %2108 = vmatprep.subr.bf16.mxu0 0
        %2109 = vmatpush1.bf16.msra.mxu0 0
        %2110 = vmatprep.subr.bf16.mxu0 0
        %2111 = vmatpush1.bf16.msra.mxu0 0
        %2112 = vmatprep.subr.bf16.mxu0 0
        %2113 = vmatpush1.bf16.msra.mxu0 0
        %2114 = vmatprep.subr.bf16.mxu0 0
        %2115 = vmatpush1.bf16.msra.mxu0 0
        %2116 = vmatprep.subr.bf16.mxu0 0
        %2117 = vmatpush1.bf16.msra.mxu0 0
        %2118 = vmatprep.subr.bf16.mxu0 0
        %2119 = vmatpush1.bf16.msra.mxu0 0
        %2120 = vmatprep.subr.bf16.mxu0 0
        %2121 = vmatpush1.bf16.msra.mxu0 0
        %2122 = vmatprep.subr.bf16.mxu0 0
        %2123 = vmatpush1.bf16.msra.mxu0 0
        %2124 = vmatprep.subr.bf16.mxu0 0
        %2125 = vmatpush1.bf16.msra.mxu0 0
        %2126 = vmatprep.subr.bf16.mxu0 0
        %2127 = vmatpush1.bf16.msra.mxu0 0
        %2128 = vmatprep.mubr.bf16.mxu0 0
        %2129 = vmatmul.mubr.bf16.gmra.mrb[0].mxu0 %v2091
        %v2130 = vpop.f32.mrb[0].mxu0
        %v2131 = vadd.f32 0.0, %v2130
        %v2132 = vpop.f32.mrb[0].mxu0
        %v2133 = vpop.f32.mrb[0].mxu0
        %v2134 = vpop.f32.mrb[0].mxu0
        %2135 = vdwg.mxu0
        %v2136 = vpack.c.b16 %v1480, %v1480
        %2137 = vrot.lane.b32.xlu0 %v2136, 112
        %v2138 = vpop.permute.xlu0 %2137
        %v2140 = vsel %vm874, %v1984, 0
        %v2143 = vsel %vm974, %v2138, 0
        %2145 = vmatprep.subr.bf16.mxu0 0
        %2146 = vmatpush1.bf16.msra.mxu0 %v2143
        %2147 = vmatprep.subr.bf16.mxu0 0
        %2148 = vmatpush1.bf16.msra.mxu0 0
        %2149 = vmatprep.subr.bf16.mxu0 0
        %2150 = vmatpush1.bf16.msra.mxu0 0
        %2151 = vmatprep.subr.bf16.mxu0 0
        %2152 = vmatpush1.bf16.msra.mxu0 0
        %2153 = vmatprep.subr.bf16.mxu0 0
        %2154 = vmatpush1.bf16.msra.mxu0 0
        %2155 = vmatprep.subr.bf16.mxu0 0
        %2156 = vmatpush1.bf16.msra.mxu0 0
        %2157 = vmatprep.subr.bf16.mxu0 0
        %2158 = vmatpush1.bf16.msra.mxu0 0
        %2159 = vmatprep.subr.bf16.mxu0 0
        %2160 = vmatpush1.bf16.msra.mxu0 0
        %2161 = vmatprep.subr.bf16.mxu0 0
        %2162 = vmatpush1.bf16.msra.mxu0 0
        %2163 = vmatprep.subr.bf16.mxu0 0
        %2164 = vmatpush1.bf16.msra.mxu0 0
        %2165 = vmatprep.subr.bf16.mxu0 0
        %2166 = vmatpush1.bf16.msra.mxu0 0
        %2167 = vmatprep.subr.bf16.mxu0 0
        %2168 = vmatpush1.bf16.msra.mxu0 0
        %2169 = vmatprep.subr.bf16.mxu0 0
        %2170 = vmatpush1.bf16.msra.mxu0 0
        %2171 = vmatprep.subr.bf16.mxu0 0
        %2172 = vmatpush1.bf16.msra.mxu0 0
        %2173 = vmatprep.subr.bf16.mxu0 0
        %2174 = vmatpush1.bf16.msra.mxu0 0
        %2175 = vmatprep.subr.bf16.mxu0 0
        %2176 = vmatpush1.bf16.msra.mxu0 0
        %2177 = vmatprep.mubr.bf16.mxu0 0
        %2178 = vmatmul.mubr.bf16.gmra.mrb[0].mxu0 %v2140
        %v2179 = vpop.f32.mrb[0].mxu0
        %v2180 = vadd.f32 0.0, %v2179
        %v2181 = vpop.f32.mrb[0].mxu0
        %v2182 = vpop.f32.mrb[0].mxu0
        %v2183 = vpop.f32.mrb[0].mxu0
        %2184 = vdwg.mxu0
        %v2185 = vpack.c.b16 %v1481, %v1481
        %2186 = vrot.lane.b32.xlu0 %v2185, 112
        %v2187 = vpop.permute.xlu0 %2186
        %v2189 = vsel %vm874, %v1985, 0
        %v2192 = vsel %vm974, %v2187, 0
        %2194 = vmatprep.subr.bf16.mxu0 0
        %2195 = vmatpush1.bf16.msra.mxu0 %v2192
        %2196 = vmatprep.subr.bf16.mxu0 0
        %2197 = vmatpush1.bf16.msra.mxu0 0
        %2198 = vmatprep.subr.bf16.mxu0 0
        %2199 = vmatpush1.bf16.msra.mxu0 0
        %2200 = vmatprep.subr.bf16.mxu0 0
        %2201 = vmatpush1.bf16.msra.mxu0 0
        %2202 = vmatprep.subr.bf16.mxu0 0
        %2203 = vmatpush1.bf16.msra.mxu0 0
        %2204 = vmatprep.subr.bf16.mxu0 0
        %2205 = vmatpush1.bf16.msra.mxu0 0
        %2206 = vmatprep.subr.bf16.mxu0 0
        %2207 = vmatpush1.bf16.msra.mxu0 0
        %2208 = vmatprep.subr.bf16.mxu0 0
        %2209 = vmatpush1.bf16.msra.mxu0 0
        %2210 = vmatprep.subr.bf16.mxu0 0
        %2211 = vmatpush1.bf16.msra.mxu0 0
        %2212 = vmatprep.subr.bf16.mxu0 0
        %2213 = vmatpush1.bf16.msra.mxu0 0
        %2214 = vmatprep.subr.bf16.mxu0 0
        %2215 = vmatpush1.bf16.msra.mxu0 0
        %2216 = vmatprep.subr.bf16.mxu0 0
        %2217 = vmatpush1.bf16.msra.mxu0 0
        %2218 = vmatprep.subr.bf16.mxu0 0
        %2219 = vmatpush1.bf16.msra.mxu0 0
        %2220 = vmatprep.subr.bf16.mxu0 0
        %2221 = vmatpush1.bf16.msra.mxu0 0
        %2222 = vmatprep.subr.bf16.mxu0 0
        %2223 = vmatpush1.bf16.msra.mxu0 0
        %2224 = vmatprep.subr.bf16.mxu0 0
        %2225 = vmatpush1.bf16.msra.mxu0 0
        %2226 = vmatprep.mubr.bf16.mxu0 0
        %2227 = vmatmul.mubr.bf16.gmra.mrb[0].mxu0 %v2189
        %v2228 = vpop.f32.mrb[0].mxu0
        %v2229 = vadd.f32 0.0, %v2228
        %v2230 = vpop.f32.mrb[0].mxu0
        %v2231 = vpop.f32.mrb[0].mxu0
        %v2232 = vpop.f32.mrb[0].mxu0
        %2233 = vdwg.mxu0
        %v2234 = vpack.c.b16 %v1482, %v1482
        %2235 = vrot.lane.b32.xlu0 %v2234, 112
        %v2236 = vpop.permute.xlu0 %2235
        %v2238 = vsel %vm874, %v1986, 0
        %v2241 = vsel %vm974, %v2236, 0
        %2243 = vmatprep.subr.bf16.mxu0 0
        %2244 = vmatpush1.bf16.msra.mxu0 %v2241
        %2245 = vmatprep.subr.bf16.mxu0 0
        %2246 = vmatpush1.bf16.msra.mxu0 0
        %2247 = vmatprep.subr.bf16.mxu0 0
        %2248 = vmatpush1.bf16.msra.mxu0 0
        %2249 = vmatprep.subr.bf16.mxu0 0
        %2250 = vmatpush1.bf16.msra.mxu0 0
        %2251 = vmatprep.subr.bf16.mxu0 0
        %2252 = vmatpush1.bf16.msra.mxu0 0
        %2253 = vmatprep.subr.bf16.mxu0 0
        %2254 = vmatpush1.bf16.msra.mxu0 0
        %2255 = vmatprep.subr.bf16.mxu0 0
        %2256 = vmatpush1.bf16.msra.mxu0 0
        %2257 = vmatprep.subr.bf16.mxu0 0
        %2258 = vmatpush1.bf16.msra.mxu0 0
        %2259 = vmatprep.subr.bf16.mxu0 0
        %2260 = vmatpush1.bf16.msra.mxu0 0
        %2261 = vmatprep.subr.bf16.mxu0 0
        %2262 = vmatpush1.bf16.msra.mxu0 0
        %2263 = vmatprep.subr.bf16.mxu0 0
        %2264 = vmatpush1.bf16.msra.mxu0 0
        %2265 = vmatprep.subr.bf16.mxu0 0
        %2266 = vmatpush1.bf16.msra.mxu0 0
        %2267 = vmatprep.subr.bf16.mxu0 0
        %2268 = vmatpush1.bf16.msra.mxu0 0
        %2269 = vmatprep.subr.bf16.mxu0 0
        %2270 = vmatpush1.bf16.msra.mxu0 0
        %2271 = vmatprep.subr.bf16.mxu0 0
        %2272 = vmatpush1.bf16.msra.mxu0 0
        %2273 = vmatprep.subr.bf16.mxu0 0
        %2274 = vmatpush1.bf16.msra.mxu0 0
        %2275 = vmatprep.mubr.bf16.mxu0 0
        %2276 = vmatmul.mubr.bf16.gmra.mrb[0].mxu0 %v2238
        %v2277 = vpop.f32.mrb[0].mxu0
        %v2278 = vadd.f32 0.0, %v2277
        %v2279 = vpop.f32.mrb[0].mxu0
        %v2280 = vpop.f32.mrb[0].mxu0
        %v2281 = vpop.f32.mrb[0].mxu0
        %2282 = vdwg.mxu0
        %v2283 = vpack.c.b16 %v1483, %v1483
        %2284 = vrot.lane.b32.xlu0 %v2283, 112
        %v2285 = vpop.permute.xlu0 %2284
        %v2287 = vsel %vm874, %v1987, 0
        %v2290 = vsel %vm974, %v2285, 0
        %2292 = vmatprep.subr.bf16.mxu0 0
        %2293 = vmatpush1.bf16.msra.mxu0 %v2290
        %2294 = vmatprep.subr.bf16.mxu0 0
        %2295 = vmatpush1.bf16.msra.mxu0 0
        %2296 = vmatprep.subr.bf16.mxu0 0
        %2297 = vmatpush1.bf16.msra.mxu0 0
        %2298 = vmatprep.subr.bf16.mxu0 0
        %2299 = vmatpush1.bf16.msra.mxu0 0
        %2300 = vmatprep.subr.bf16.mxu0 0
        %2301 = vmatpush1.bf16.msra.mxu0 0
        %2302 = vmatprep.subr.bf16.mxu0 0
        %2303 = vmatpush1.bf16.msra.mxu0 0
        %2304 = vmatprep.subr.bf16.mxu0 0
        %2305 = vmatpush1.bf16.msra.mxu0 0
        %2306 = vmatprep.subr.bf16.mxu0 0
        %2307 = vmatpush1.bf16.msra.mxu0 0
        %2308 = vmatprep.subr.bf16.mxu0 0
        %2309 = vmatpush1.bf16.msra.mxu0 0
        %2310 = vmatprep.subr.bf16.mxu0 0
        %2311 = vmatpush1.bf16.msra.mxu0 0
        %2312 = vmatprep.subr.bf16.mxu0 0
        %2313 = vmatpush1.bf16.msra.mxu0 0
        %2314 = vmatprep.subr.bf16.mxu0 0
        %2315 = vmatpush1.bf16.msra.mxu0 0
        %2316 = vmatprep.subr.bf16.mxu0 0
        %2317 = vmatpush1.bf16.msra.mxu0 0
        %2318 = vmatprep.subr.bf16.mxu0 0
        %2319 = vmatpush1.bf16.msra.mxu0 0
        %2320 = vmatprep.subr.bf16.mxu0 0
        %2321 = vmatpush1.bf16.msra.mxu0 0
        %2322 = vmatprep.subr.bf16.mxu0 0
        %2323 = vmatpush1.bf16.msra.mxu0 0
        %2324 = vmatprep.mubr.bf16.mxu0 0
        %2325 = vmatmul.mubr.bf16.gmra.mrb[0].mxu0 %v2287
        %v2326 = vpop.f32.mrb[0].mxu0
        %v2327 = vadd.f32 0.0, %v2326
        %v2328 = vpop.f32.mrb[0].mxu0
        %v2329 = vpop.f32.mrb[0].mxu0
        %v2330 = vpop.f32.mrb[0].mxu0
        %2331 = vdwg.mxu0
        %v2332 = vpack.c.b16 %v1484, %v1484
        %2333 = vrot.lane.b32.xlu0 %v2332, 112
        %v2334 = vpop.permute.xlu0 %2333
        %v2336 = vsel %vm874, %v1988, 0
        %v2339 = vsel %vm974, %v2334, 0
        %2341 = vmatprep.subr.bf16.mxu0 0
        %2342 = vmatpush1.bf16.msra.mxu0 %v2339
        %2343 = vmatprep.subr.bf16.mxu0 0
        %2344 = vmatpush1.bf16.msra.mxu0 0
        %2345 = vmatprep.subr.bf16.mxu0 0
        %2346 = vmatpush1.bf16.msra.mxu0 0
        %2347 = vmatprep.subr.bf16.mxu0 0
        %2348 = vmatpush1.bf16.msra.mxu0 0
        %2349 = vmatprep.subr.bf16.mxu0 0
        %2350 = vmatpush1.bf16.msra.mxu0 0
        %2351 = vmatprep.subr.bf16.mxu0 0
        %2352 = vmatpush1.bf16.msra.mxu0 0
        %2353 = vmatprep.subr.bf16.mxu0 0
        %2354 = vmatpush1.bf16.msra.mxu0 0
        %2355 = vmatprep.subr.bf16.mxu0 0
        %2356 = vmatpush1.bf16.msra.mxu0 0
        %2357 = vmatprep.subr.bf16.mxu0 0
        %2358 = vmatpush1.bf16.msra.mxu0 0
        %2359 = vmatprep.subr.bf16.mxu0 0
        %2360 = vmatpush1.bf16.msra.mxu0 0
        %2361 = vmatprep.subr.bf16.mxu0 0
        %2362 = vmatpush1.bf16.msra.mxu0 0
        %2363 = vmatprep.subr.bf16.mxu0 0
        %2364 = vmatpush1.bf16.msra.mxu0 0
        %2365 = vmatprep.subr.bf16.mxu0 0
        %2366 = vmatpush1.bf16.msra.mxu0 0
        %2367 = vmatprep.subr.bf16.mxu0 0
        %2368 = vmatpush1.bf16.msra.mxu0 0
        %2369 = vmatprep.subr.bf16.mxu0 0
        %2370 = vmatpush1.bf16.msra.mxu0 0
        %2371 = vmatprep.subr.bf16.mxu0 0
        %2372 = vmatpush1.bf16.msra.mxu0 0
        %2373 = vmatprep.mubr.bf16.mxu0 0
        %2374 = vmatmul.mubr.bf16.gmra.mrb[0].mxu0 %v2336
        %v2375 = vpop.f32.mrb[0].mxu0
        %v2376 = vadd.f32 0.0, %v2375
        %v2377 = vpop.f32.mrb[0].mxu0
        %v2378 = vpop.f32.mrb[0].mxu0
        %v2379 = vpop.f32.mrb[0].mxu0
        %2380 = vdwg.mxu0
        %v2381 = vld [vmem:[#allocation3] sm:$0xff]
        %v2382 = vld [vmem:[#allocation3 + $0x8] sm:$0xff]
        %v2383 = vld [vmem:[#allocation3 + $0x10] sm:$0xff]
        %v2384 = vld [vmem:[#allocation3 + $0x18] sm:$0xff]
        %v2385 = vld [vmem:[#allocation3 + $0x20] sm:$0xff]
        %v2386 = vld [vmem:[#allocation3 + $0x28] sm:$0xff]
        %v2387 = vld [vmem:[#allocation3 + $0x30] sm:$0xff]
        %v2388 = vld [vmem:[#allocation3 + $0x38] sm:$0xff]
        %v2389 = vpack.c.bf16 %v2082, %v2033
        %v2390 = vpack.c.bf16 %v2180, %v2131
        %v2391 = vpack.c.bf16 %v2278, %v2229
        %v2392 = vpack.c.bf16 %v2376, %v2327
        %v2393 = vld [vmem:[#allocation9 + $0x8] sm:$0xf]
        %v2394 = vld [vmem:[#allocation9 + $0xc] sm:$0xf]
        %v2397 = vunpack.c.l.b16 %v2393
        %v2398 = vunpack.c.l.b16 %v2394
        %v2399 = vpack.c.b16 %v2398, %v2397
        %v2402 = vsel %vm491, %v2389, 0
        %v2405 = vsel %vm491, %v2390, 0
        %v2408 = vsel %vm491, %v2391, 0
        %v2411 = vsel %vm491, %v2392, 0
        %2413 = vmatprep.subr.bf16.mxu0 0
        %2414 = vmatpush1.bf16.msra.mxu0 %v2399
        %2415 = vmatprep.subr.bf16.mxu0 0
        %2416 = vmatpush1.bf16.msra.mxu0 0
        %2417 = vmatprep.subr.bf16.mxu0 0
        %2418 = vmatpush1.bf16.msra.mxu0 0
        %2419 = vmatprep.subr.bf16.mxu0 0
        %2420 = vmatpush1.bf16.msra.mxu0 0
        %2421 = vmatprep.subr.bf16.mxu0 0
        %2422 = vmatpush1.bf16.msra.mxu0 0
        %2423 = vmatprep.subr.bf16.mxu0 0
        %2424 = vmatpush1.bf16.msra.mxu0 0
        %2425 = vmatprep.subr.bf16.mxu0 0
        %2426 = vmatpush1.bf16.msra.mxu0 0
        %2427 = vmatprep.subr.bf16.mxu0 0
        %2428 = vmatpush1.bf16.msra.mxu0 0
        %2429 = vmatprep.subr.bf16.mxu0 0
        %2430 = vmatpush1.bf16.msra.mxu0 0
        %2431 = vmatprep.subr.bf16.mxu0 0
        %2432 = vmatpush1.bf16.msra.mxu0 0
        %2433 = vmatprep.subr.bf16.mxu0 0
        %2434 = vmatpush1.bf16.msra.mxu0 0
        %2435 = vmatprep.subr.bf16.mxu0 0
        %2436 = vmatpush1.bf16.msra.mxu0 0
        %2437 = vmatprep.subr.bf16.mxu0 0
        %2438 = vmatpush1.bf16.msra.mxu0 0
        %2439 = vmatprep.subr.bf16.mxu0 0
        %2440 = vmatpush1.bf16.msra.mxu0 0
        %2441 = vmatprep.subr.bf16.mxu0 0
        %2442 = vmatpush1.bf16.msra.mxu0 0
        %2443 = vmatprep.subr.bf16.mxu0 0
        %2444 = vmatpush1.bf16.msra.mxu0 0
        %2445 = vmatprep.mubr.bf16.mxu0 0
        %2446 = vmatmul.mubr.bf16.gmra.mrb[0].mxu0 %v2402
        %v2447 = vpop.f32.mrb[0].mxu0
        %v2448 = vadd.f32 0.0, %v2447
        %v2449 = vpop.f32.mrb[0].mxu0
        %v2450 = vpop.f32.mrb[0].mxu0
        %v2451 = vadd.f32 0.0, %v2450
        %v2452 = vpop.f32.mrb[0].mxu0
        %2453 = vmatprep.mubr.bf16.mxu0 0
        %2454 = vmatmul.mubr.bf16.gmra.mrb[0].mxu0 %v2405
        %v2455 = vpop.f32.mrb[0].mxu0
        %v2456 = vadd.f32 0.0, %v2455
        %v2457 = vpop.f32.mrb[0].mxu0
        %v2458 = vpop.f32.mrb[0].mxu0
        %v2459 = vadd.f32 0.0, %v2458
        %v2460 = vpop.f32.mrb[0].mxu0
        %2461 = vmatprep.mubr.bf16.mxu0 0
        %2462 = vmatmul.mubr.bf16.gmra.mrb[0].mxu0 %v2408
        %v2463 = vpop.f32.mrb[0].mxu0
        %v2464 = vadd.f32 0.0, %v2463
        %v2465 = vpop.f32.mrb[0].mxu0
        %v2466 = vpop.f32.mrb[0].mxu0
        %v2467 = vadd.f32 0.0, %v2466
        %v2468 = vpop.f32.mrb[0].mxu0
        %2469 = vmatprep.mubr.bf16.mxu0 0
        %2470 = vmatmul.mubr.bf16.gmra.mrb[0].mxu0 %v2411
        %v2471 = vpop.f32.mrb[0].mxu0
        %v2472 = vadd.f32 0.0, %v2471
        %v2473 = vpop.f32.mrb[0].mxu0
        %v2474 = vpop.f32.mrb[0].mxu0
        %v2475 = vadd.f32 0.0, %v2474
        %v2476 = vpop.f32.mrb[0].mxu0
        %2477 = vdwg.mxu0
        %v2478 = vadd.f32 %v2381, %v2448
        %v2479 = vadd.f32 %v2382, %v2451
        %v2480 = vadd.f32 %v2383, %v2456
        %v2481 = vadd.f32 %v2384, %v2459
        %v2482 = vadd.f32 %v2385, %v2464
        %v2483 = vadd.f32 %v2386, %v2467
        %v2484 = vadd.f32 %v2387, %v2472
        %v2485 = vadd.f32 %v2388, %v2475
        %2486 = vst.msk [vmem:[#allocation3] sm:$0xff] %vm324, %v2478
        %2487 = vst.msk [vmem:[#allocation3 + $0x8] sm:$0xff] %vm324, %v2479
        %2488 = vst.msk [vmem:[#allocation3 + $0x10] sm:$0xff] %vm324, %v2480
        %2489 = vst.msk [vmem:[#allocation3 + $0x18] sm:$0xff] %vm324, %v2481
        %2490 = vst.msk [vmem:[#allocation3 + $0x20] sm:$0xff] %vm324, %v2482
        %2491 = vst.msk [vmem:[#allocation3 + $0x28] sm:$0xff] %vm324, %v2483
        %2492 = vst.msk [vmem:[#allocation3 + $0x30] sm:$0xff] %vm324, %v2484
        %2493 = vst.msk [vmem:[#allocation3 + $0x38] sm:$0xff] %vm324, %v2485
        %v2494 = vld [vmem:[#allocation2] sm:$0xff]
        %v2495 = vld [vmem:[#allocation2 + $0x10] sm:$0xff]
        %v2496 = vld [vmem:[#allocation2 + $0x20] sm:$0xff]
        %v2497 = vld [vmem:[#allocation2 + $0x30] sm:$0xff]
        %v2502 = vunpack.c.l.b16 %v2494
        %v2503 = vunpack.c.h.b16 %v2494
        %v2504 = vunpack.c.l.b16 %v2495
        %v2505 = vunpack.c.h.b16 %v2495
        %v2506 = vunpack.c.l.b16 %v2496
        %v2507 = vunpack.c.h.b16 %v2496
        %v2508 = vunpack.c.l.b16 %v2497
        %v2509 = vunpack.c.h.b16 %v2497
        %v2510 = vld [vmem:[#allocation2 + $0x8] sm:$0xff]
        %v2511 = vld [vmem:[#allocation2 + $0x18] sm:$0xff]
        %v2512 = vld [vmem:[#allocation2 + $0x28] sm:$0xff]
        %v2513 = vld [vmem:[#allocation2 + $0x38] sm:$0xff]
        %v2518 = vunpack.c.l.b16 %v2510
        %v2519 = vunpack.c.h.b16 %v2510
        %v2520 = vunpack.c.l.b16 %v2511
        %v2521 = vunpack.c.h.b16 %v2511
        %v2522 = vunpack.c.l.b16 %v2512
        %v2523 = vunpack.c.h.b16 %v2512
        %v2524 = vunpack.c.l.b16 %v2513
        %v2525 = vunpack.c.h.b16 %v2513
        %v2526 = vpack.c.b16 %v2502, %v2502
        %2527 = vrot.lane.b32.xlu0 %v2526, 96
        %v2528 = vpop.permute.xlu0 %2527
        %2529 = vrot.lane.b32.xlu0 %v2526, 32
        %v2530 = vpop.permute.xlu0 %2529
        %v2532 = vsel %vm491, %v2528, 0
        %v2535 = vsel %vm491, %v2530, 0
        %2537 = vmatprep.subr.bf16.mxu0 0
        %2538 = vmatpush1.bf16.xpose.msra.mxu0 %v2535
        %2539 = vmatprep.subr.bf16.mxu0 0
        %2540 = vmatpush1.bf16.xpose.msra.mxu0 0
        %2541 = vmatprep.subr.bf16.mxu0 0
        %2542 = vmatpush1.bf16.xpose.msra.mxu0 0
        %2543 = vmatprep.subr.bf16.mxu0 0
        %2544 = vmatpush1.bf16.xpose.msra.mxu0 0
        %2545 = vmatprep.subr.bf16.mxu0 0
        %2546 = vmatpush1.bf16.xpose.msra.mxu0 0
        %2547 = vmatprep.subr.bf16.mxu0 0
        %2548 = vmatpush1.bf16.xpose.msra.mxu0 0
        %2549 = vmatprep.subr.bf16.mxu0 0
        %2550 = vmatpush1.bf16.xpose.msra.mxu0 0
        %2551 = vmatprep.subr.bf16.mxu0 0
        %2552 = vmatpush1.bf16.xpose.msra.mxu0 0
        %2553 = vmatprep.subr.bf16.mxu0 0
        %2554 = vmatpush1.bf16.xpose.msra.mxu0 0
        %2555 = vmatprep.subr.bf16.mxu0 0
        %2556 = vmatpush1.bf16.xpose.msra.mxu0 0
        %2557 = vmatprep.subr.bf16.mxu0 0
        %2558 = vmatpush1.bf16.xpose.msra.mxu0 0
        %2559 = vmatprep.subr.bf16.mxu0 0
        %2560 = vmatpush1.bf16.xpose.msra.mxu0 0
        %2561 = vmatprep.subr.bf16.mxu0 0
        %2562 = vmatpush1.bf16.xpose.msra.mxu0 0
        %2563 = vmatprep.subr.bf16.mxu0 0
        %2564 = vmatpush1.bf16.xpose.msra.mxu0 0
        %2565 = vmatprep.subr.bf16.mxu0 0
        %2566 = vmatpush1.bf16.xpose.msra.mxu0 0
        %2567 = vmatprep.subr.bf16.mxu0 0
        %2568 = vmatpush1.bf16.xpose.msra.mxu0 0
        %2569 = vmatprep.mubr.bf16.mxu0 0
        %2570 = vmatmul.mubr.bf16.gmra.mrb[0].mxu0 %v2532
        %v2571 = vpop.f32.mrb[0].mxu0
        %v2572 = vadd.f32 0.0, %v2571
        %v2573 = vpop.f32.mrb[0].mxu0
        %v2574 = vpop.f32.mrb[0].mxu0
        %v2575 = vpop.f32.mrb[0].mxu0
        %2576 = vdwg.mxu0
        %v2577 = vpack.c.b16 %v2503, %v2503
        %2578 = vrot.lane.b32.xlu0 %v2577, 96
        %v2579 = vpop.permute.xlu0 %2578
        %2580 = vrot.lane.b32.xlu0 %v2577, 32
        %v2581 = vpop.permute.xlu0 %2580
        %v2583 = vsel %vm491, %v2579, 0
        %v2586 = vsel %vm491, %v2581, 0
        %2588 = vmatprep.subr.bf16.mxu0 0
        %2589 = vmatpush1.bf16.xpose.msra.mxu0 %v2586
        %2590 = vmatprep.subr.bf16.mxu0 0
        %2591 = vmatpush1.bf16.xpose.msra.mxu0 0
        %2592 = vmatprep.subr.bf16.mxu0 0
        %2593 = vmatpush1.bf16.xpose.msra.mxu0 0
        %2594 = vmatprep.subr.bf16.mxu0 0
        %2595 = vmatpush1.bf16.xpose.msra.mxu0 0
        %2596 = vmatprep.subr.bf16.mxu0 0
        %2597 = vmatpush1.bf16.xpose.msra.mxu0 0
        %2598 = vmatprep.subr.bf16.mxu0 0
        %2599 = vmatpush1.bf16.xpose.msra.mxu0 0
        %2600 = vmatprep.subr.bf16.mxu0 0
        %2601 = vmatpush1.bf16.xpose.msra.mxu0 0
        %2602 = vmatprep.subr.bf16.mxu0 0
        %2603 = vmatpush1.bf16.xpose.msra.mxu0 0
        %2604 = vmatprep.subr.bf16.mxu0 0
        %2605 = vmatpush1.bf16.xpose.msra.mxu0 0
        %2606 = vmatprep.subr.bf16.mxu0 0
        %2607 = vmatpush1.bf16.xpose.msra.mxu0 0
        %2608 = vmatprep.subr.bf16.mxu0 0
        %2609 = vmatpush1.bf16.xpose.msra.mxu0 0
        %2610 = vmatprep.subr.bf16.mxu0 0
        %2611 = vmatpush1.bf16.xpose.msra.mxu0 0
        %2612 = vmatprep.subr.bf16.mxu0 0
        %2613 = vmatpush1.bf16.xpose.msra.mxu0 0
        %2614 = vmatprep.subr.bf16.mxu0 0
        %2615 = vmatpush1.bf16.xpose.msra.mxu0 0
        %2616 = vmatprep.subr.bf16.mxu0 0
        %2617 = vmatpush1.bf16.xpose.msra.mxu0 0
        %2618 = vmatprep.subr.bf16.mxu0 0
        %2619 = vmatpush1.bf16.xpose.msra.mxu0 0
        %2620 = vmatprep.mubr.bf16.mxu0 0
        %2621 = vmatmul.mubr.bf16.gmra.mrb[0].mxu0 %v2583
        %v2622 = vpop.f32.mrb[0].mxu0
        %v2623 = vadd.f32 0.0, %v2622
        %v2624 = vpop.f32.mrb[0].mxu0
        %v2625 = vpop.f32.mrb[0].mxu0
        %v2626 = vpop.f32.mrb[0].mxu0
        %2627 = vdwg.mxu0
        %v2628 = vpack.c.b16 %v2504, %v2504
        %2629 = vrot.lane.b32.xlu0 %v2628, 96
        %v2630 = vpop.permute.xlu0 %2629
        %2631 = vrot.lane.b32.xlu0 %v2628, 32
        %v2632 = vpop.permute.xlu0 %2631
        %v2634 = vsel %vm491, %v2630, 0
        %v2637 = vsel %vm491, %v2632, 0
        %2639 = vmatprep.subr.bf16.mxu0 0
        %2640 = vmatpush1.bf16.xpose.msra.mxu0 %v2637
        %2641 = vmatprep.subr.bf16.mxu0 0
        %2642 = vmatpush1.bf16.xpose.msra.mxu0 0
        %2643 = vmatprep.subr.bf16.mxu0 0
        %2644 = vmatpush1.bf16.xpose.msra.mxu0 0
        %2645 = vmatprep.subr.bf16.mxu0 0
        %2646 = vmatpush1.bf16.xpose.msra.mxu0 0
        %2647 = vmatprep.subr.bf16.mxu0 0
        %2648 = vmatpush1.bf16.xpose.msra.mxu0 0
        %2649 = vmatprep.subr.bf16.mxu0 0
        %2650 = vmatpush1.bf16.xpose.msra.mxu0 0
        %2651 = vmatprep.subr.bf16.mxu0 0
        %2652 = vmatpush1.bf16.xpose.msra.mxu0 0
        %2653 = vmatprep.subr.bf16.mxu0 0
        %2654 = vmatpush1.bf16.xpose.msra.mxu0 0
        %2655 = vmatprep.subr.bf16.mxu0 0
        %2656 = vmatpush1.bf16.xpose.msra.mxu0 0
        %2657 = vmatprep.subr.bf16.mxu0 0
        %2658 = vmatpush1.bf16.xpose.msra.mxu0 0
        %2659 = vmatprep.subr.bf16.mxu0 0
        %2660 = vmatpush1.bf16.xpose.msra.mxu0 0
        %2661 = vmatprep.subr.bf16.mxu0 0
        %2662 = vmatpush1.bf16.xpose.msra.mxu0 0
        %2663 = vmatprep.subr.bf16.mxu0 0
        %2664 = vmatpush1.bf16.xpose.msra.mxu0 0
        %2665 = vmatprep.subr.bf16.mxu0 0
        %2666 = vmatpush1.bf16.xpose.msra.mxu0 0
        %2667 = vmatprep.subr.bf16.mxu0 0
        %2668 = vmatpush1.bf16.xpose.msra.mxu0 0
        %2669 = vmatprep.subr.bf16.mxu0 0
        %2670 = vmatpush1.bf16.xpose.msra.mxu0 0
        %2671 = vmatprep.mubr.bf16.mxu0 0
        %2672 = vmatmul.mubr.bf16.gmra.mrb[0].mxu0 %v2634
        %v2673 = vpop.f32.mrb[0].mxu0
        %v2674 = vadd.f32 0.0, %v2673
        %v2675 = vpop.f32.mrb[0].mxu0
        %v2676 = vpop.f32.mrb[0].mxu0
        %v2677 = vpop.f32.mrb[0].mxu0
        %2678 = vdwg.mxu0
        %v2679 = vpack.c.b16 %v2505, %v2505
        %2680 = vrot.lane.b32.xlu0 %v2679, 96
        %v2681 = vpop.permute.xlu0 %2680
        %2682 = vrot.lane.b32.xlu0 %v2679, 32
        %v2683 = vpop.permute.xlu0 %2682
        %v2685 = vsel %vm491, %v2681, 0
        %v2688 = vsel %vm491, %v2683, 0
        %2690 = vmatprep.subr.bf16.mxu0 0
        %2691 = vmatpush1.bf16.xpose.msra.mxu0 %v2688
        %2692 = vmatprep.subr.bf16.mxu0 0
        %2693 = vmatpush1.bf16.xpose.msra.mxu0 0
        %2694 = vmatprep.subr.bf16.mxu0 0
        %2695 = vmatpush1.bf16.xpose.msra.mxu0 0
        %2696 = vmatprep.subr.bf16.mxu0 0
        %2697 = vmatpush1.bf16.xpose.msra.mxu0 0
        %2698 = vmatprep.subr.bf16.mxu0 0
        %2699 = vmatpush1.bf16.xpose.msra.mxu0 0
        %2700 = vmatprep.subr.bf16.mxu0 0
        %2701 = vmatpush1.bf16.xpose.msra.mxu0 0
        %2702 = vmatprep.subr.bf16.mxu0 0
        %2703 = vmatpush1.bf16.xpose.msra.mxu0 0
        %2704 = vmatprep.subr.bf16.mxu0 0
        %2705 = vmatpush1.bf16.xpose.msra.mxu0 0
        %2706 = vmatprep.subr.bf16.mxu0 0
        %2707 = vmatpush1.bf16.xpose.msra.mxu0 0
        %2708 = vmatprep.subr.bf16.mxu0 0
        %2709 = vmatpush1.bf16.xpose.msra.mxu0 0
        %2710 = vmatprep.subr.bf16.mxu0 0
        %2711 = vmatpush1.bf16.xpose.msra.mxu0 0
        %2712 = vmatprep.subr.bf16.mxu0 0
        %2713 = vmatpush1.bf16.xpose.msra.mxu0 0
        %2714 = vmatprep.subr.bf16.mxu0 0
        %2715 = vmatpush1.bf16.xpose.msra.mxu0 0
        %2716 = vmatprep.subr.bf16.mxu0 0
        %2717 = vmatpush1.bf16.xpose.msra.mxu0 0
        %2718 = vmatprep.subr.bf16.mxu0 0
        %2719 = vmatpush1.bf16.xpose.msra.mxu0 0
        %2720 = vmatprep.subr.bf16.mxu0 0
        %2721 = vmatpush1.bf16.xpose.msra.mxu0 0
        %2722 = vmatprep.mubr.bf16.mxu0 0
        %2723 = vmatmul.mubr.bf16.gmra.mrb[0].mxu0 %v2685
        %v2724 = vpop.f32.mrb[0].mxu0
        %v2725 = vadd.f32 0.0, %v2724
        %v2726 = vpop.f32.mrb[0].mxu0
        %v2727 = vpop.f32.mrb[0].mxu0
        %v2728 = vpop.f32.mrb[0].mxu0
        %2729 = vdwg.mxu0
        %v2730 = vpack.c.b16 %v2506, %v2506
        %2731 = vrot.lane.b32.xlu0 %v2730, 96
        %v2732 = vpop.permute.xlu0 %2731
        %2733 = vrot.lane.b32.xlu0 %v2730, 32
        %v2734 = vpop.permute.xlu0 %2733
        %v2736 = vsel %vm491, %v2732, 0
        %v2739 = vsel %vm491, %v2734, 0
        %2741 = vmatprep.subr.bf16.mxu0 0
        %2742 = vmatpush1.bf16.xpose.msra.mxu0 %v2739
        %2743 = vmatprep.subr.bf16.mxu0 0
        %2744 = vmatpush1.bf16.xpose.msra.mxu0 0
        %2745 = vmatprep.subr.bf16.mxu0 0
        %2746 = vmatpush1.bf16.xpose.msra.mxu0 0
        %2747 = vmatprep.subr.bf16.mxu0 0
        %2748 = vmatpush1.bf16.xpose.msra.mxu0 0
        %2749 = vmatprep.subr.bf16.mxu0 0
        %2750 = vmatpush1.bf16.xpose.msra.mxu0 0
        %2751 = vmatprep.subr.bf16.mxu0 0
        %2752 = vmatpush1.bf16.xpose.msra.mxu0 0
        %2753 = vmatprep.subr.bf16.mxu0 0
        %2754 = vmatpush1.bf16.xpose.msra.mxu0 0
        %2755 = vmatprep.subr.bf16.mxu0 0
        %2756 = vmatpush1.bf16.xpose.msra.mxu0 0
        %2757 = vmatprep.subr.bf16.mxu0 0
        %2758 = vmatpush1.bf16.xpose.msra.mxu0 0
        %2759 = vmatprep.subr.bf16.mxu0 0
        %2760 = vmatpush1.bf16.xpose.msra.mxu0 0
        %2761 = vmatprep.subr.bf16.mxu0 0
        %2762 = vmatpush1.bf16.xpose.msra.mxu0 0
        %2763 = vmatprep.subr.bf16.mxu0 0
        %2764 = vmatpush1.bf16.xpose.msra.mxu0 0
        %2765 = vmatprep.subr.bf16.mxu0 0
        %2766 = vmatpush1.bf16.xpose.msra.mxu0 0
        %2767 = vmatprep.subr.bf16.mxu0 0
        %2768 = vmatpush1.bf16.xpose.msra.mxu0 0
        %2769 = vmatprep.subr.bf16.mxu0 0
        %2770 = vmatpush1.bf16.xpose.msra.mxu0 0
        %2771 = vmatprep.subr.bf16.mxu0 0
        %2772 = vmatpush1.bf16.xpose.msra.mxu0 0
        %2773 = vmatprep.mubr.bf16.mxu0 0
        %2774 = vmatmul.mubr.bf16.gmra.mrb[0].mxu0 %v2736
        %v2775 = vpop.f32.mrb[0].mxu0
        %v2776 = vadd.f32 0.0, %v2775
        %v2777 = vpop.f32.mrb[0].mxu0
        %v2778 = vpop.f32.mrb[0].mxu0
        %v2779 = vpop.f32.mrb[0].mxu0
        %2780 = vdwg.mxu0
        %v2781 = vpack.c.b16 %v2507, %v2507
        %2782 = vrot.lane.b32.xlu0 %v2781, 96
        %v2783 = vpop.permute.xlu0 %2782
        %2784 = vrot.lane.b32.xlu0 %v2781, 32
        %v2785 = vpop.permute.xlu0 %2784
        %v2787 = vsel %vm491, %v2783, 0
        %v2790 = vsel %vm491, %v2785, 0
        %2792 = vmatprep.subr.bf16.mxu0 0
        %2793 = vmatpush1.bf16.xpose.msra.mxu0 %v2790
        %2794 = vmatprep.subr.bf16.mxu0 0
        %2795 = vmatpush1.bf16.xpose.msra.mxu0 0
        %2796 = vmatprep.subr.bf16.mxu0 0
        %2797 = vmatpush1.bf16.xpose.msra.mxu0 0
        %2798 = vmatprep.subr.bf16.mxu0 0
        %2799 = vmatpush1.bf16.xpose.msra.mxu0 0
        %2800 = vmatprep.subr.bf16.mxu0 0
        %2801 = vmatpush1.bf16.xpose.msra.mxu0 0
        %2802 = vmatprep.subr.bf16.mxu0 0
        %2803 = vmatpush1.bf16.xpose.msra.mxu0 0
        %2804 = vmatprep.subr.bf16.mxu0 0
        %2805 = vmatpush1.bf16.xpose.msra.mxu0 0
        %2806 = vmatprep.subr.bf16.mxu0 0
        %2807 = vmatpush1.bf16.xpose.msra.mxu0 0
        %2808 = vmatprep.subr.bf16.mxu0 0
        %2809 = vmatpush1.bf16.xpose.msra.mxu0 0
        %2810 = vmatprep.subr.bf16.mxu0 0
        %2811 = vmatpush1.bf16.xpose.msra.mxu0 0
        %2812 = vmatprep.subr.bf16.mxu0 0
        %2813 = vmatpush1.bf16.xpose.msra.mxu0 0
        %2814 = vmatprep.subr.bf16.mxu0 0
        %2815 = vmatpush1.bf16.xpose.msra.mxu0 0
        %2816 = vmatprep.subr.bf16.mxu0 0
        %2817 = vmatpush1.bf16.xpose.msra.mxu0 0
        %2818 = vmatprep.subr.bf16.mxu0 0
        %2819 = vmatpush1.bf16.xpose.msra.mxu0 0
        %2820 = vmatprep.subr.bf16.mxu0 0
        %2821 = vmatpush1.bf16.xpose.msra.mxu0 0
        %2822 = vmatprep.subr.bf16.mxu0 0
        %2823 = vmatpush1.bf16.xpose.msra.mxu0 0
        %2824 = vmatprep.mubr.bf16.mxu0 0
        %2825 = vmatmul.mubr.bf16.gmra.mrb[0].mxu0 %v2787
        %v2826 = vpop.f32.mrb[0].mxu0
        %v2827 = vadd.f32 0.0, %v2826
        %v2828 = vpop.f32.mrb[0].mxu0
        %v2829 = vpop.f32.mrb[0].mxu0
        %v2830 = vpop.f32.mrb[0].mxu0
        %2831 = vdwg.mxu0
        %v2832 = vpack.c.b16 %v2508, %v2508
        %2833 = vrot.lane.b32.xlu0 %v2832, 96
        %v2834 = vpop.permute.xlu0 %2833
        %2835 = vrot.lane.b32.xlu0 %v2832, 32
        %v2836 = vpop.permute.xlu0 %2835
        %v2838 = vsel %vm491, %v2834, 0
        %v2841 = vsel %vm491, %v2836, 0
        %2843 = vmatprep.subr.bf16.mxu0 0
        %2844 = vmatpush1.bf16.xpose.msra.mxu0 %v2841
        %2845 = vmatprep.subr.bf16.mxu0 0
        %2846 = vmatpush1.bf16.xpose.msra.mxu0 0
        %2847 = vmatprep.subr.bf16.mxu0 0
        %2848 = vmatpush1.bf16.xpose.msra.mxu0 0
        %2849 = vmatprep.subr.bf16.mxu0 0
        %2850 = vmatpush1.bf16.xpose.msra.mxu0 0
        %2851 = vmatprep.subr.bf16.mxu0 0
        %2852 = vmatpush1.bf16.xpose.msra.mxu0 0
        %2853 = vmatprep.subr.bf16.mxu0 0
        %2854 = vmatpush1.bf16.xpose.msra.mxu0 0
        %2855 = vmatprep.subr.bf16.mxu0 0
        %2856 = vmatpush1.bf16.xpose.msra.mxu0 0
        %2857 = vmatprep.subr.bf16.mxu0 0
        %2858 = vmatpush1.bf16.xpose.msra.mxu0 0
        %2859 = vmatprep.subr.bf16.mxu0 0
        %2860 = vmatpush1.bf16.xpose.msra.mxu0 0
        %2861 = vmatprep.subr.bf16.mxu0 0
        %2862 = vmatpush1.bf16.xpose.msra.mxu0 0
        %2863 = vmatprep.subr.bf16.mxu0 0
        %2864 = vmatpush1.bf16.xpose.msra.mxu0 0
        %2865 = vmatprep.subr.bf16.mxu0 0
        %2866 = vmatpush1.bf16.xpose.msra.mxu0 0
        %2867 = vmatprep.subr.bf16.mxu0 0
        %2868 = vmatpush1.bf16.xpose.msra.mxu0 0
        %2869 = vmatprep.subr.bf16.mxu0 0
        %2870 = vmatpush1.bf16.xpose.msra.mxu0 0
        %2871 = vmatprep.subr.bf16.mxu0 0
        %2872 = vmatpush1.bf16.xpose.msra.mxu0 0
        %2873 = vmatprep.subr.bf16.mxu0 0
        %2874 = vmatpush1.bf16.xpose.msra.mxu0 0
        %2875 = vmatprep.mubr.bf16.mxu0 0
        %2876 = vmatmul.mubr.bf16.gmra.mrb[0].mxu0 %v2838
        %v2877 = vpop.f32.mrb[0].mxu0
        %v2878 = vadd.f32 0.0, %v2877
        %v2879 = vpop.f32.mrb[0].mxu0
        %v2880 = vpop.f32.mrb[0].mxu0
        %v2881 = vpop.f32.mrb[0].mxu0
        %2882 = vdwg.mxu0
        %v2883 = vpack.c.b16 %v2509, %v2509
        %2884 = vrot.lane.b32.xlu0 %v2883, 96
        %v2885 = vpop.permute.xlu0 %2884
        %2886 = vrot.lane.b32.xlu0 %v2883, 32
        %v2887 = vpop.permute.xlu0 %2886
        %v2889 = vsel %vm491, %v2885, 0
        %v2892 = vsel %vm491, %v2887, 0
        %2894 = vmatprep.subr.bf16.mxu0 0
        %2895 = vmatpush1.bf16.xpose.msra.mxu0 %v2892
        %2896 = vmatprep.subr.bf16.mxu0 0
        %2897 = vmatpush1.bf16.xpose.msra.mxu0 0
        %2898 = vmatprep.subr.bf16.mxu0 0
        %2899 = vmatpush1.bf16.xpose.msra.mxu0 0
        %2900 = vmatprep.subr.bf16.mxu0 0
        %2901 = vmatpush1.bf16.xpose.msra.mxu0 0
        %2902 = vmatprep.subr.bf16.mxu0 0
        %2903 = vmatpush1.bf16.xpose.msra.mxu0 0
        %2904 = vmatprep.subr.bf16.mxu0 0
        %2905 = vmatpush1.bf16.xpose.msra.mxu0 0
        %2906 = vmatprep.subr.bf16.mxu0 0
        %2907 = vmatpush1.bf16.xpose.msra.mxu0 0
        %2908 = vmatprep.subr.bf16.mxu0 0
        %2909 = vmatpush1.bf16.xpose.msra.mxu0 0
        %2910 = vmatprep.subr.bf16.mxu0 0
        %2911 = vmatpush1.bf16.xpose.msra.mxu0 0
        %2912 = vmatprep.subr.bf16.mxu0 0
        %2913 = vmatpush1.bf16.xpose.msra.mxu0 0
        %2914 = vmatprep.subr.bf16.mxu0 0
        %2915 = vmatpush1.bf16.xpose.msra.mxu0 0
        %2916 = vmatprep.subr.bf16.mxu0 0
        %2917 = vmatpush1.bf16.xpose.msra.mxu0 0
        %2918 = vmatprep.subr.bf16.mxu0 0
        %2919 = vmatpush1.bf16.xpose.msra.mxu0 0
        %2920 = vmatprep.subr.bf16.mxu0 0
        %2921 = vmatpush1.bf16.xpose.msra.mxu0 0
        %2922 = vmatprep.subr.bf16.mxu0 0
        %2923 = vmatpush1.bf16.xpose.msra.mxu0 0
        %2924 = vmatprep.subr.bf16.mxu0 0
        %2925 = vmatpush1.bf16.xpose.msra.mxu0 0
        %2926 = vmatprep.mubr.bf16.mxu0 0
        %2927 = vmatmul.mubr.bf16.gmra.mrb[0].mxu0 %v2889
        %v2928 = vpop.f32.mrb[0].mxu0
        %v2929 = vadd.f32 0.0, %v2928
        %v2930 = vpop.f32.mrb[0].mxu0
        %v2931 = vpop.f32.mrb[0].mxu0
        %v2932 = vpop.f32.mrb[0].mxu0
        %2933 = vdwg.mxu0
        %v2934 = vsel %vm874, %v2572, -inf
        %2935 = vmax.xlane.f32.xlu0 %v2934
        %v2936 = vpop.xlane.xlu0 %2935
        %v2937 = vsel %vm874, %v2623, -inf
        %2938 = vmax.xlane.f32.xlu0 %v2937
        %v2939 = vpop.xlane.xlu0 %2938
        %v2940 = vsel %vm874, %v2674, -inf
        %2941 = vmax.xlane.f32.xlu0 %v2940
        %v2942 = vpop.xlane.xlu0 %2941
        %v2943 = vsel %vm874, %v2725, -inf
        %2944 = vmax.xlane.f32.xlu0 %v2943
        %v2945 = vpop.xlane.xlu0 %2944
        %v2946 = vsel %vm874, %v2776, -inf
        %2947 = vmax.xlane.f32.xlu0 %v2946
        %v2948 = vpop.xlane.xlu0 %2947
        %v2949 = vsel %vm874, %v2827, -inf
        %2950 = vmax.xlane.f32.xlu0 %v2949
        %v2951 = vpop.xlane.xlu0 %2950
        %v2952 = vsel %vm874, %v2878, -inf
        %2953 = vmax.xlane.f32.xlu0 %v2952
        %v2954 = vpop.xlane.xlu0 %2953
        %v2955 = vsel %vm874, %v2929, -inf
        %2956 = vmax.xlane.f32.xlu0 %v2955
        %v2957 = vpop.xlane.xlu0 %2956
        %v2958 = vsub.f32 %v2572, %v2936
        %v2959 = vsub.f32 %v2623, %v2939
        %v2960 = vsub.f32 %v2674, %v2942
        %v2961 = vsub.f32 %v2725, %v2945
        %v2962 = vsub.f32 %v2776, %v2948
        %v2963 = vsub.f32 %v2827, %v2951
        %v2964 = vsub.f32 %v2878, %v2954
        %v2965 = vsub.f32 %v2929, %v2957
        %v2966 = vmul.f32 %v2958, 1.442695
        %v2967 = vpow.pop %v2966
        %v2968 = vmul.f32 %v2959, 1.442695
        %v2969 = vpow.pop %v2968
        %v2970 = vmul.f32 %v2960, 1.442695
        %v2971 = vpow.pop %v2970
        %v2972 = vmul.f32 %v2961, 1.442695
        %v2973 = vpow.pop %v2972
        %v2974 = vmul.f32 %v2962, 1.442695
        %v2975 = vpow.pop %v2974
        %v2976 = vmul.f32 %v2963, 1.442695
        %v2977 = vpow.pop %v2976
        %v2978 = vmul.f32 %v2964, 1.442695
        %v2979 = vpow.pop %v2978
        %v2980 = vmul.f32 %v2965, 1.442695
        %v2981 = vpow.pop %v2980
        %v2982 = vsel %vm874, %v2967, 0.0
        %2983 = vadd.xlane.f32.xlu0 %v2982
        %v2984 = vpop.xlane.xlu0 %2983
        %v2985 = vsel %vm874, %v2969, 0.0
        %2986 = vadd.xlane.f32.xlu0 %v2985
        %v2987 = vpop.xlane.xlu0 %2986
        %v2988 = vsel %vm874, %v2971, 0.0
        %2989 = vadd.xlane.f32.xlu0 %v2988
        %v2990 = vpop.xlane.xlu0 %2989
        %v2991 = vsel %vm874, %v2973, 0.0
        %2992 = vadd.xlane.f32.xlu0 %v2991
        %v2993 = vpop.xlane.xlu0 %2992
        %v2994 = vsel %vm874, %v2975, 0.0
        %2995 = vadd.xlane.f32.xlu0 %v2994
        %v2996 = vpop.xlane.xlu0 %2995
        %v2997 = vsel %vm874, %v2977, 0.0
        %2998 = vadd.xlane.f32.xlu0 %v2997
        %v2999 = vpop.xlane.xlu0 %2998
        %v3000 = vsel %vm874, %v2979, 0.0
        %3001 = vadd.xlane.f32.xlu0 %v3000
        %v3002 = vpop.xlane.xlu0 %3001
        %v3003 = vsel %vm874, %v2981, 0.0
        %3004 = vadd.xlane.f32.xlu0 %v3003
        %v3005 = vpop.xlane.xlu0 %3004
        %v3006 = vrcp.pop %v2984
        %v3007 = vrcp.pop %v2987
        %v3008 = vrcp.pop %v2990
        %v3009 = vrcp.pop %v2993
        %v3010 = vrcp.pop %v2996
        %v3011 = vrcp.pop %v2999
        %v3012 = vrcp.pop %v3002
        %v3013 = vrcp.pop %v3005
        %v3014 = vmul.f32 %v2967, %v3006
        %v3015 = vmul.f32 %v2969, %v3007
        %v3016 = vmul.f32 %v2971, %v3008
        %v3017 = vmul.f32 %v2973, %v3009
        %v3018 = vmul.f32 %v2975, %v3010
        %v3019 = vmul.f32 %v2977, %v3011
        %v3020 = vmul.f32 %v2979, %v3012
        %v3021 = vmul.f32 %v2981, %v3013
        %v3022 = vpack.c.bf16 %v3014, %v3014
        %v3023 = vpack.c.bf16 %v3015, %v3015
        %v3024 = vpack.c.bf16 %v3016, %v3016
        %v3025 = vpack.c.bf16 %v3017, %v3017
        %v3026 = vpack.c.bf16 %v3018, %v3018
        %v3027 = vpack.c.bf16 %v3019, %v3019
        %v3028 = vpack.c.bf16 %v3020, %v3020
        %v3029 = vpack.c.bf16 %v3021, %v3021
        %v3030 = vpack.c.b16 %v2518, %v2518
        %3031 = vrot.lane.b32.xlu0 %v3030, 96
        %v3032 = vpop.permute.xlu0 %3031
        %v3034 = vsel %vm874, %v3022, 0
        %v3037 = vsel %vm974, %v3032, 0
        %3039 = vmatprep.subr.bf16.mxu0 0
        %3040 = vmatpush1.bf16.msra.mxu0 %v3037
        %3041 = vmatprep.subr.bf16.mxu0 0
        %3042 = vmatpush1.bf16.msra.mxu0 0
        %3043 = vmatprep.subr.bf16.mxu0 0
        %3044 = vmatpush1.bf16.msra.mxu0 0
        %3045 = vmatprep.subr.bf16.mxu0 0
        %3046 = vmatpush1.bf16.msra.mxu0 0
        %3047 = vmatprep.subr.bf16.mxu0 0
        %3048 = vmatpush1.bf16.msra.mxu0 0
        %3049 = vmatprep.subr.bf16.mxu0 0
        %3050 = vmatpush1.bf16.msra.mxu0 0
        %3051 = vmatprep.subr.bf16.mxu0 0
        %3052 = vmatpush1.bf16.msra.mxu0 0
        %3053 = vmatprep.subr.bf16.mxu0 0
        %3054 = vmatpush1.bf16.msra.mxu0 0
        %3055 = vmatprep.subr.bf16.mxu0 0
        %3056 = vmatpush1.bf16.msra.mxu0 0
        %3057 = vmatprep.subr.bf16.mxu0 0
        %3058 = vmatpush1.bf16.msra.mxu0 0
        %3059 = vmatprep.subr.bf16.mxu0 0
        %3060 = vmatpush1.bf16.msra.mxu0 0
        %3061 = vmatprep.subr.bf16.mxu0 0
        %3062 = vmatpush1.bf16.msra.mxu0 0
        %3063 = vmatprep.subr.bf16.mxu0 0
        %3064 = vmatpush1.bf16.msra.mxu0 0
        %3065 = vmatprep.subr.bf16.mxu0 0
        %3066 = vmatpush1.bf16.msra.mxu0 0
        %3067 = vmatprep.subr.bf16.mxu0 0
        %3068 = vmatpush1.bf16.msra.mxu0 0
        %3069 = vmatprep.subr.bf16.mxu0 0
        %3070 = vmatpush1.bf16.msra.mxu0 0
        %3071 = vmatprep.mubr.bf16.mxu0 0
        %3072 = vmatmul.mubr.bf16.gmra.mrb[0].mxu0 %v3034
        %v3073 = vpop.f32.mrb[0].mxu0
        %v3074 = vadd.f32 0.0, %v3073
        %v3075 = vpop.f32.mrb[0].mxu0
        %v3076 = vpop.f32.mrb[0].mxu0
        %v3077 = vpop.f32.mrb[0].mxu0
        %3078 = vdwg.mxu0
        %v3079 = vpack.c.b16 %v2519, %v2519
        %3080 = vrot.lane.b32.xlu0 %v3079, 96
        %v3081 = vpop.permute.xlu0 %3080
        %v3083 = vsel %vm874, %v3023, 0
        %v3086 = vsel %vm974, %v3081, 0
        %3088 = vmatprep.subr.bf16.mxu0 0
        %3089 = vmatpush1.bf16.msra.mxu0 %v3086
        %3090 = vmatprep.subr.bf16.mxu0 0
        %3091 = vmatpush1.bf16.msra.mxu0 0
        %3092 = vmatprep.subr.bf16.mxu0 0
        %3093 = vmatpush1.bf16.msra.mxu0 0
        %3094 = vmatprep.subr.bf16.mxu0 0
        %3095 = vmatpush1.bf16.msra.mxu0 0
        %3096 = vmatprep.subr.bf16.mxu0 0
        %3097 = vmatpush1.bf16.msra.mxu0 0
        %3098 = vmatprep.subr.bf16.mxu0 0
        %3099 = vmatpush1.bf16.msra.mxu0 0
        %3100 = vmatprep.subr.bf16.mxu0 0
        %3101 = vmatpush1.bf16.msra.mxu0 0
        %3102 = vmatprep.subr.bf16.mxu0 0
        %3103 = vmatpush1.bf16.msra.mxu0 0
        %3104 = vmatprep.subr.bf16.mxu0 0
        %3105 = vmatpush1.bf16.msra.mxu0 0
        %3106 = vmatprep.subr.bf16.mxu0 0
        %3107 = vmatpush1.bf16.msra.mxu0 0
        %3108 = vmatprep.subr.bf16.mxu0 0
        %3109 = vmatpush1.bf16.msra.mxu0 0
        %3110 = vmatprep.subr.bf16.mxu0 0
        %3111 = vmatpush1.bf16.msra.mxu0 0
        %3112 = vmatprep.subr.bf16.mxu0 0
        %3113 = vmatpush1.bf16.msra.mxu0 0
        %3114 = vmatprep.subr.bf16.mxu0 0
        %3115 = vmatpush1.bf16.msra.mxu0 0
        %3116 = vmatprep.subr.bf16.mxu0 0
        %3117 = vmatpush1.bf16.msra.mxu0 0
        %3118 = vmatprep.subr.bf16.mxu0 0
        %3119 = vmatpush1.bf16.msra.mxu0 0
        %3120 = vmatprep.mubr.bf16.mxu0 0
        %3121 = vmatmul.mubr.bf16.gmra.mrb[0].mxu0 %v3083
        %v3122 = vpop.f32.mrb[0].mxu0
        %v3123 = vadd.f32 0.0, %v3122
        %v3124 = vpop.f32.mrb[0].mxu0
        %v3125 = vpop.f32.mrb[0].mxu0
        %v3126 = vpop.f32.mrb[0].mxu0
        %3127 = vdwg.mxu0
        %v3128 = vpack.c.b16 %v2520, %v2520
        %3129 = vrot.lane.b32.xlu0 %v3128, 96
        %v3130 = vpop.permute.xlu0 %3129
        %v3132 = vsel %vm874, %v3024, 0
        %v3135 = vsel %vm974, %v3130, 0
        %3137 = vmatprep.subr.bf16.mxu0 0
        %3138 = vmatpush1.bf16.msra.mxu0 %v3135
        %3139 = vmatprep.subr.bf16.mxu0 0
        %3140 = vmatpush1.bf16.msra.mxu0 0
        %3141 = vmatprep.subr.bf16.mxu0 0
        %3142 = vmatpush1.bf16.msra.mxu0 0
        %3143 = vmatprep.subr.bf16.mxu0 0
        %3144 = vmatpush1.bf16.msra.mxu0 0
        %3145 = vmatprep.subr.bf16.mxu0 0
        %3146 = vmatpush1.bf16.msra.mxu0 0
        %3147 = vmatprep.subr.bf16.mxu0 0
        %3148 = vmatpush1.bf16.msra.mxu0 0
        %3149 = vmatprep.subr.bf16.mxu0 0
        %3150 = vmatpush1.bf16.msra.mxu0 0
        %3151 = vmatprep.subr.bf16.mxu0 0
        %3152 = vmatpush1.bf16.msra.mxu0 0
        %3153 = vmatprep.subr.bf16.mxu0 0
        %3154 = vmatpush1.bf16.msra.mxu0 0
        %3155 = vmatprep.subr.bf16.mxu0 0
        %3156 = vmatpush1.bf16.msra.mxu0 0
        %3157 = vmatprep.subr.bf16.mxu0 0
        %3158 = vmatpush1.bf16.msra.mxu0 0
        %3159 = vmatprep.subr.bf16.mxu0 0
        %3160 = vmatpush1.bf16.msra.mxu0 0
        %3161 = vmatprep.subr.bf16.mxu0 0
        %3162 = vmatpush1.bf16.msra.mxu0 0
        %3163 = vmatprep.subr.bf16.mxu0 0
        %3164 = vmatpush1.bf16.msra.mxu0 0
        %3165 = vmatprep.subr.bf16.mxu0 0
        %3166 = vmatpush1.bf16.msra.mxu0 0
        %3167 = vmatprep.subr.bf16.mxu0 0
        %3168 = vmatpush1.bf16.msra.mxu0 0
        %3169 = vmatprep.mubr.bf16.mxu0 0
        %3170 = vmatmul.mubr.bf16.gmra.mrb[0].mxu0 %v3132
        %v3171 = vpop.f32.mrb[0].mxu0
        %v3172 = vadd.f32 0.0, %v3171
        %v3173 = vpop.f32.mrb[0].mxu0
        %v3174 = vpop.f32.mrb[0].mxu0
        %v3175 = vpop.f32.mrb[0].mxu0
        %3176 = vdwg.mxu0
        %v3177 = vpack.c.b16 %v2521, %v2521
        %3178 = vrot.lane.b32.xlu0 %v3177, 96
        %v3179 = vpop.permute.xlu0 %3178
        %v3181 = vsel %vm874, %v3025, 0
        %v3184 = vsel %vm974, %v3179, 0
        %3186 = vmatprep.subr.bf16.mxu0 0
        %3187 = vmatpush1.bf16.msra.mxu0 %v3184
        %3188 = vmatprep.subr.bf16.mxu0 0
        %3189 = vmatpush1.bf16.msra.mxu0 0
        %3190 = vmatprep.subr.bf16.mxu0 0
        %3191 = vmatpush1.bf16.msra.mxu0 0
        %3192 = vmatprep.subr.bf16.mxu0 0
        %3193 = vmatpush1.bf16.msra.mxu0 0
        %3194 = vmatprep.subr.bf16.mxu0 0
        %3195 = vmatpush1.bf16.msra.mxu0 0
        %3196 = vmatprep.subr.bf16.mxu0 0
        %3197 = vmatpush1.bf16.msra.mxu0 0
        %3198 = vmatprep.subr.bf16.mxu0 0
        %3199 = vmatpush1.bf16.msra.mxu0 0
        %3200 = vmatprep.subr.bf16.mxu0 0
        %3201 = vmatpush1.bf16.msra.mxu0 0
        %3202 = vmatprep.subr.bf16.mxu0 0
        %3203 = vmatpush1.bf16.msra.mxu0 0
        %3204 = vmatprep.subr.bf16.mxu0 0
        %3205 = vmatpush1.bf16.msra.mxu0 0
        %3206 = vmatprep.subr.bf16.mxu0 0
        %3207 = vmatpush1.bf16.msra.mxu0 0
        %3208 = vmatprep.subr.bf16.mxu0 0
        %3209 = vmatpush1.bf16.msra.mxu0 0
        %3210 = vmatprep.subr.bf16.mxu0 0
        %3211 = vmatpush1.bf16.msra.mxu0 0
        %3212 = vmatprep.subr.bf16.mxu0 0
        %3213 = vmatpush1.bf16.msra.mxu0 0
        %3214 = vmatprep.subr.bf16.mxu0 0
        %3215 = vmatpush1.bf16.msra.mxu0 0
        %3216 = vmatprep.subr.bf16.mxu0 0
        %3217 = vmatpush1.bf16.msra.mxu0 0
        %3218 = vmatprep.mubr.bf16.mxu0 0
        %3219 = vmatmul.mubr.bf16.gmra.mrb[0].mxu0 %v3181
        %v3220 = vpop.f32.mrb[0].mxu0
        %v3221 = vadd.f32 0.0, %v3220
        %v3222 = vpop.f32.mrb[0].mxu0
        %v3223 = vpop.f32.mrb[0].mxu0
        %v3224 = vpop.f32.mrb[0].mxu0
        %3225 = vdwg.mxu0
        %v3226 = vpack.c.b16 %v2522, %v2522
        %3227 = vrot.lane.b32.xlu0 %v3226, 96
        %v3228 = vpop.permute.xlu0 %3227
        %v3230 = vsel %vm874, %v3026, 0
        %v3233 = vsel %vm974, %v3228, 0
        %3235 = vmatprep.subr.bf16.mxu0 0
        %3236 = vmatpush1.bf16.msra.mxu0 %v3233
        %3237 = vmatprep.subr.bf16.mxu0 0
        %3238 = vmatpush1.bf16.msra.mxu0 0
        %3239 = vmatprep.subr.bf16.mxu0 0
        %3240 = vmatpush1.bf16.msra.mxu0 0
        %3241 = vmatprep.subr.bf16.mxu0 0
        %3242 = vmatpush1.bf16.msra.mxu0 0
        %3243 = vmatprep.subr.bf16.mxu0 0
        %3244 = vmatpush1.bf16.msra.mxu0 0
        %3245 = vmatprep.subr.bf16.mxu0 0
        %3246 = vmatpush1.bf16.msra.mxu0 0
        %3247 = vmatprep.subr.bf16.mxu0 0
        %3248 = vmatpush1.bf16.msra.mxu0 0
        %3249 = vmatprep.subr.bf16.mxu0 0
        %3250 = vmatpush1.bf16.msra.mxu0 0
        %3251 = vmatprep.subr.bf16.mxu0 0
        %3252 = vmatpush1.bf16.msra.mxu0 0
        %3253 = vmatprep.subr.bf16.mxu0 0
        %3254 = vmatpush1.bf16.msra.mxu0 0
        %3255 = vmatprep.subr.bf16.mxu0 0
        %3256 = vmatpush1.bf16.msra.mxu0 0
        %3257 = vmatprep.subr.bf16.mxu0 0
        %3258 = vmatpush1.bf16.msra.mxu0 0
        %3259 = vmatprep.subr.bf16.mxu0 0
        %3260 = vmatpush1.bf16.msra.mxu0 0
        %3261 = vmatprep.subr.bf16.mxu0 0
        %3262 = vmatpush1.bf16.msra.mxu0 0
        %3263 = vmatprep.subr.bf16.mxu0 0
        %3264 = vmatpush1.bf16.msra.mxu0 0
        %3265 = vmatprep.subr.bf16.mxu0 0
        %3266 = vmatpush1.bf16.msra.mxu0 0
        %3267 = vmatprep.mubr.bf16.mxu0 0
        %3268 = vmatmul.mubr.bf16.gmra.mrb[0].mxu0 %v3230
        %v3269 = vpop.f32.mrb[0].mxu0
        %v3270 = vadd.f32 0.0, %v3269
        %v3271 = vpop.f32.mrb[0].mxu0
        %v3272 = vpop.f32.mrb[0].mxu0
        %v3273 = vpop.f32.mrb[0].mxu0
        %3274 = vdwg.mxu0
        %v3275 = vpack.c.b16 %v2523, %v2523
        %3276 = vrot.lane.b32.xlu0 %v3275, 96
        %v3277 = vpop.permute.xlu0 %3276
        %v3279 = vsel %vm874, %v3027, 0
        %v3282 = vsel %vm974, %v3277, 0
        %3284 = vmatprep.subr.bf16.mxu0 0
        %3285 = vmatpush1.bf16.msra.mxu0 %v3282
        %3286 = vmatprep.subr.bf16.mxu0 0
        %3287 = vmatpush1.bf16.msra.mxu0 0
        %3288 = vmatprep.subr.bf16.mxu0 0
        %3289 = vmatpush1.bf16.msra.mxu0 0
        %3290 = vmatprep.subr.bf16.mxu0 0
        %3291 = vmatpush1.bf16.msra.mxu0 0
        %3292 = vmatprep.subr.bf16.mxu0 0
        %3293 = vmatpush1.bf16.msra.mxu0 0
        %3294 = vmatprep.subr.bf16.mxu0 0
        %3295 = vmatpush1.bf16.msra.mxu0 0
        %3296 = vmatprep.subr.bf16.mxu0 0
        %3297 = vmatpush1.bf16.msra.mxu0 0
        %3298 = vmatprep.subr.bf16.mxu0 0
        %3299 = vmatpush1.bf16.msra.mxu0 0
        %3300 = vmatprep.subr.bf16.mxu0 0
        %3301 = vmatpush1.bf16.msra.mxu0 0
        %3302 = vmatprep.subr.bf16.mxu0 0
        %3303 = vmatpush1.bf16.msra.mxu0 0
        %3304 = vmatprep.subr.bf16.mxu0 0
        %3305 = vmatpush1.bf16.msra.mxu0 0
        %3306 = vmatprep.subr.bf16.mxu0 0
        %3307 = vmatpush1.bf16.msra.mxu0 0
        %3308 = vmatprep.subr.bf16.mxu0 0
        %3309 = vmatpush1.bf16.msra.mxu0 0
        %3310 = vmatprep.subr.bf16.mxu0 0
        %3311 = vmatpush1.bf16.msra.mxu0 0
        %3312 = vmatprep.subr.bf16.mxu0 0
        %3313 = vmatpush1.bf16.msra.mxu0 0
        %3314 = vmatprep.subr.bf16.mxu0 0
        %3315 = vmatpush1.bf16.msra.mxu0 0
        %3316 = vmatprep.mubr.bf16.mxu0 0
        %3317 = vmatmul.mubr.bf16.gmra.mrb[0].mxu0 %v3279
        %v3318 = vpop.f32.mrb[0].mxu0
        %v3319 = vadd.f32 0.0, %v3318
        %v3320 = vpop.f32.mrb[0].mxu0
        %v3321 = vpop.f32.mrb[0].mxu0
        %v3322 = vpop.f32.mrb[0].mxu0
        %3323 = vdwg.mxu0
        %v3324 = vpack.c.b16 %v2524, %v2524
        %3325 = vrot.lane.b32.xlu0 %v3324, 96
        %v3326 = vpop.permute.xlu0 %3325
        %v3328 = vsel %vm874, %v3028, 0
        %v3331 = vsel %vm974, %v3326, 0
        %3333 = vmatprep.subr.bf16.mxu0 0
        %3334 = vmatpush1.bf16.msra.mxu0 %v3331
        %3335 = vmatprep.subr.bf16.mxu0 0
        %3336 = vmatpush1.bf16.msra.mxu0 0
        %3337 = vmatprep.subr.bf16.mxu0 0
        %3338 = vmatpush1.bf16.msra.mxu0 0
        %3339 = vmatprep.subr.bf16.mxu0 0
        %3340 = vmatpush1.bf16.msra.mxu0 0
        %3341 = vmatprep.subr.bf16.mxu0 0
        %3342 = vmatpush1.bf16.msra.mxu0 0
        %3343 = vmatprep.subr.bf16.mxu0 0
        %3344 = vmatpush1.bf16.msra.mxu0 0
        %3345 = vmatprep.subr.bf16.mxu0 0
        %3346 = vmatpush1.bf16.msra.mxu0 0
        %3347 = vmatprep.subr.bf16.mxu0 0
        %3348 = vmatpush1.bf16.msra.mxu0 0
        %3349 = vmatprep.subr.bf16.mxu0 0
        %3350 = vmatpush1.bf16.msra.mxu0 0
        %3351 = vmatprep.subr.bf16.mxu0 0
        %3352 = vmatpush1.bf16.msra.mxu0 0
        %3353 = vmatprep.subr.bf16.mxu0 0
        %3354 = vmatpush1.bf16.msra.mxu0 0
        %3355 = vmatprep.subr.bf16.mxu0 0
        %3356 = vmatpush1.bf16.msra.mxu0 0
        %3357 = vmatprep.subr.bf16.mxu0 0
        %3358 = vmatpush1.bf16.msra.mxu0 0
        %3359 = vmatprep.subr.bf16.mxu0 0
        %3360 = vmatpush1.bf16.msra.mxu0 0
        %3361 = vmatprep.subr.bf16.mxu0 0
        %3362 = vmatpush1.bf16.msra.mxu0 0
        %3363 = vmatprep.subr.bf16.mxu0 0
        %3364 = vmatpush1.bf16.msra.mxu0 0
        %3365 = vmatprep.mubr.bf16.mxu0 0
        %3366 = vmatmul.mubr.bf16.gmra.mrb[0].mxu0 %v3328
        %v3367 = vpop.f32.mrb[0].mxu0
        %v3368 = vadd.f32 0.0, %v3367
        %v3369 = vpop.f32.mrb[0].mxu0
        %v3370 = vpop.f32.mrb[0].mxu0
        %v3371 = vpop.f32.mrb[0].mxu0
        %3372 = vdwg.mxu0
        %v3373 = vpack.c.b16 %v2525, %v2525
        %3374 = vrot.lane.b32.xlu0 %v3373, 96
        %v3375 = vpop.permute.xlu0 %3374
        %v3377 = vsel %vm874, %v3029, 0
        %v3380 = vsel %vm974, %v3375, 0
        %3382 = vmatprep.subr.bf16.mxu0 0
        %3383 = vmatpush1.bf16.msra.mxu0 %v3380
        %3384 = vmatprep.subr.bf16.mxu0 0
        %3385 = vmatpush1.bf16.msra.mxu0 0
        %3386 = vmatprep.subr.bf16.mxu0 0
        %3387 = vmatpush1.bf16.msra.mxu0 0
        %3388 = vmatprep.subr.bf16.mxu0 0
        %3389 = vmatpush1.bf16.msra.mxu0 0
        %3390 = vmatprep.subr.bf16.mxu0 0
        %3391 = vmatpush1.bf16.msra.mxu0 0
        %3392 = vmatprep.subr.bf16.mxu0 0
        %3393 = vmatpush1.bf16.msra.mxu0 0
        %3394 = vmatprep.subr.bf16.mxu0 0
        %3395 = vmatpush1.bf16.msra.mxu0 0
        %3396 = vmatprep.subr.bf16.mxu0 0
        %3397 = vmatpush1.bf16.msra.mxu0 0
        %3398 = vmatprep.subr.bf16.mxu0 0
        %3399 = vmatpush1.bf16.msra.mxu0 0
        %3400 = vmatprep.subr.bf16.mxu0 0
        %3401 = vmatpush1.bf16.msra.mxu0 0
        %3402 = vmatprep.subr.bf16.mxu0 0
        %3403 = vmatpush1.bf16.msra.mxu0 0
        %3404 = vmatprep.subr.bf16.mxu0 0
        %3405 = vmatpush1.bf16.msra.mxu0 0
        %3406 = vmatprep.subr.bf16.mxu0 0
        %3407 = vmatpush1.bf16.msra.mxu0 0
        %3408 = vmatprep.subr.bf16.mxu0 0
        %3409 = vmatpush1.bf16.msra.mxu0 0
        %3410 = vmatprep.subr.bf16.mxu0 0
        %3411 = vmatpush1.bf16.msra.mxu0 0
        %3412 = vmatprep.subr.bf16.mxu0 0
        %3413 = vmatpush1.bf16.msra.mxu0 0
        %3414 = vmatprep.mubr.bf16.mxu0 0
        %3415 = vmatmul.mubr.bf16.gmra.mrb[0].mxu0 %v3377
        %v3416 = vpop.f32.mrb[0].mxu0
        %v3417 = vadd.f32 0.0, %v3416
        %v3418 = vpop.f32.mrb[0].mxu0
        %v3419 = vpop.f32.mrb[0].mxu0
        %v3420 = vpop.f32.mrb[0].mxu0
        %3421 = vdwg.mxu0
        %v3422 = vld [vmem:[#allocation3] sm:$0xff]
        %v3423 = vld [vmem:[#allocation3 + $0x8] sm:$0xff]
        %v3424 = vld [vmem:[#allocation3 + $0x10] sm:$0xff]
        %v3425 = vld [vmem:[#allocation3 + $0x18] sm:$0xff]
        %v3426 = vld [vmem:[#allocation3 + $0x20] sm:$0xff]
        %v3427 = vld [vmem:[#allocation3 + $0x28] sm:$0xff]
        %v3428 = vld [vmem:[#allocation3 + $0x30] sm:$0xff]
        %v3429 = vld [vmem:[#allocation3 + $0x38] sm:$0xff]
        %v3430 = vpack.c.bf16 %v3123, %v3074
        %v3431 = vpack.c.bf16 %v3221, %v3172
        %v3432 = vpack.c.bf16 %v3319, %v3270
        %v3433 = vpack.c.bf16 %v3417, %v3368
        %v3434 = vld [vmem:[#allocation9 + $0x10] sm:$0xf]
        %v3435 = vld [vmem:[#allocation9 + $0x14] sm:$0xf]
        %v3438 = vunpack.c.l.b16 %v3434
        %v3439 = vunpack.c.l.b16 %v3435
        %v3440 = vpack.c.b16 %v3439, %v3438
        %v3443 = vsel %vm491, %v3430, 0
        %v3446 = vsel %vm491, %v3431, 0
        %v3449 = vsel %vm491, %v3432, 0
        %v3452 = vsel %vm491, %v3433, 0
        %3454 = vmatprep.subr.bf16.mxu0 0
        %3455 = vmatpush1.bf16.msra.mxu0 %v3440
        %3456 = vmatprep.subr.bf16.mxu0 0
        %3457 = vmatpush1.bf16.msra.mxu0 0
        %3458 = vmatprep.subr.bf16.mxu0 0
        %3459 = vmatpush1.bf16.msra.mxu0 0
        %3460 = vmatprep.subr.bf16.mxu0 0
        %3461 = vmatpush1.bf16.msra.mxu0 0
        %3462 = vmatprep.subr.bf16.mxu0 0
        %3463 = vmatpush1.bf16.msra.mxu0 0
        %3464 = vmatprep.subr.bf16.mxu0 0
        %3465 = vmatpush1.bf16.msra.mxu0 0
        %3466 = vmatprep.subr.bf16.mxu0 0
        %3467 = vmatpush1.bf16.msra.mxu0 0
        %3468 = vmatprep.subr.bf16.mxu0 0
        %3469 = vmatpush1.bf16.msra.mxu0 0
        %3470 = vmatprep.subr.bf16.mxu0 0
        %3471 = vmatpush1.bf16.msra.mxu0 0
        %3472 = vmatprep.subr.bf16.mxu0 0
        %3473 = vmatpush1.bf16.msra.mxu0 0
        %3474 = vmatprep.subr.bf16.mxu0 0
        %3475 = vmatpush1.bf16.msra.mxu0 0
        %3476 = vmatprep.subr.bf16.mxu0 0
        %3477 = vmatpush1.bf16.msra.mxu0 0
        %3478 = vmatprep.subr.bf16.mxu0 0
        %3479 = vmatpush1.bf16.msra.mxu0 0
        %3480 = vmatprep.subr.bf16.mxu0 0
        %3481 = vmatpush1.bf16.msra.mxu0 0
        %3482 = vmatprep.subr.bf16.mxu0 0
        %3483 = vmatpush1.bf16.msra.mxu0 0
        %3484 = vmatprep.subr.bf16.mxu0 0
        %3485 = vmatpush1.bf16.msra.mxu0 0
        %3486 = vmatprep.mubr.bf16.mxu0 0
        %3487 = vmatmul.mubr.bf16.gmra.mrb[0].mxu0 %v3443
        %v3488 = vpop.f32.mrb[0].mxu0
        %v3489 = vadd.f32 0.0, %v3488
        %v3490 = vpop.f32.mrb[0].mxu0
        %v3491 = vpop.f32.mrb[0].mxu0
        %v3492 = vadd.f32 0.0, %v3491
        %v3493 = vpop.f32.mrb[0].mxu0
        %3494 = vmatprep.mubr.bf16.mxu0 0
        %3495 = vmatmul.mubr.bf16.gmra.mrb[0].mxu0 %v3446
        %v3496 = vpop.f32.mrb[0].mxu0
        %v3497 = vadd.f32 0.0, %v3496
        %v3498 = vpop.f32.mrb[0].mxu0
        %v3499 = vpop.f32.mrb[0].mxu0
        %v3500 = vadd.f32 0.0, %v3499
        %v3501 = vpop.f32.mrb[0].mxu0
        %3502 = vmatprep.mubr.bf16.mxu0 0
        %3503 = vmatmul.mubr.bf16.gmra.mrb[0].mxu0 %v3449
        %v3504 = vpop.f32.mrb[0].mxu0
        %v3505 = vadd.f32 0.0, %v3504
        %v3506 = vpop.f32.mrb[0].mxu0
        %v3507 = vpop.f32.mrb[0].mxu0
        %v3508 = vadd.f32 0.0, %v3507
        %v3509 = vpop.f32.mrb[0].mxu0
        %3510 = vmatprep.mubr.bf16.mxu0 0
        %3511 = vmatmul.mubr.bf16.gmra.mrb[0].mxu0 %v3452
        %v3512 = vpop.f32.mrb[0].mxu0
        %v3513 = vadd.f32 0.0, %v3512
        %v3514 = vpop.f32.mrb[0].mxu0
        %v3515 = vpop.f32.mrb[0].mxu0
        %v3516 = vadd.f32 0.0, %v3515
        %v3517 = vpop.f32.mrb[0].mxu0
        %3518 = vdwg.mxu0
        %v3519 = vadd.f32 %v3422, %v3489
        %v3520 = vadd.f32 %v3423, %v3492
        %v3521 = vadd.f32 %v3424, %v3497
        %v3522 = vadd.f32 %v3425, %v3500
        %v3523 = vadd.f32 %v3426, %v3505
        %v3524 = vadd.f32 %v3427, %v3508
        %v3525 = vadd.f32 %v3428, %v3513
        %v3526 = vadd.f32 %v3429, %v3516
        %3527 = vst.msk [vmem:[#allocation3] sm:$0xff] %vm324, %v3519
        %3528 = vst.msk [vmem:[#allocation3 + $0x8] sm:$0xff] %vm324, %v3520
        %3529 = vst.msk [vmem:[#allocation3 + $0x10] sm:$0xff] %vm324, %v3521
        %3530 = vst.msk [vmem:[#allocation3 + $0x18] sm:$0xff] %vm324, %v3522
        %3531 = vst.msk [vmem:[#allocation3 + $0x20] sm:$0xff] %vm324, %v3523
        %3532 = vst.msk [vmem:[#allocation3 + $0x28] sm:$0xff] %vm324, %v3524
        %3533 = vst.msk [vmem:[#allocation3 + $0x30] sm:$0xff] %vm324, %v3525
        %3534 = vst.msk [vmem:[#allocation3 + $0x38] sm:$0xff] %vm324, %v3526
        %v3535 = vld [vmem:[#allocation2] sm:$0xff]
        %v3536 = vld [vmem:[#allocation2 + $0x10] sm:$0xff]
        %v3537 = vld [vmem:[#allocation2 + $0x20] sm:$0xff]
        %v3538 = vld [vmem:[#allocation2 + $0x30] sm:$0xff]
        %v3543 = vunpack.c.l.b16 %v3535
        %v3544 = vunpack.c.h.b16 %v3535
        %v3545 = vunpack.c.l.b16 %v3536
        %v3546 = vunpack.c.h.b16 %v3536
        %v3547 = vunpack.c.l.b16 %v3537
        %v3548 = vunpack.c.h.b16 %v3537
        %v3549 = vunpack.c.l.b16 %v3538
        %v3550 = vunpack.c.h.b16 %v3538
        %v3551 = vld [vmem:[#allocation2 + $0x8] sm:$0xff]
        %v3552 = vld [vmem:[#allocation2 + $0x18] sm:$0xff]
        %v3553 = vld [vmem:[#allocation2 + $0x28] sm:$0xff]
        %v3554 = vld [vmem:[#allocation2 + $0x38] sm:$0xff]
        %v3559 = vunpack.c.l.b16 %v3551
        %v3560 = vunpack.c.h.b16 %v3551
        %v3561 = vunpack.c.l.b16 %v3552
        %v3562 = vunpack.c.h.b16 %v3552
        %v3563 = vunpack.c.l.b16 %v3553
        %v3564 = vunpack.c.h.b16 %v3553
        %v3565 = vunpack.c.l.b16 %v3554
        %v3566 = vunpack.c.h.b16 %v3554
        %v3567 = vpack.c.b16 %v3543, %v3543
        %3568 = vrot.lane.b32.xlu0 %v3567, 80
        %v3569 = vpop.permute.xlu0 %3568
        %3570 = vrot.lane.b32.xlu0 %v3567, 16
        %v3571 = vpop.permute.xlu0 %3570
        %v3573 = vsel %vm491, %v3569, 0
        %v3576 = vsel %vm491, %v3571, 0
        %3578 = vmatprep.subr.bf16.mxu0 0
        %3579 = vmatpush1.bf16.xpose.msra.mxu0 %v3576
        %3580 = vmatprep.subr.bf16.mxu0 0
        %3581 = vmatpush1.bf16.xpose.msra.mxu0 0
        %3582 = vmatprep.subr.bf16.mxu0 0
        %3583 = vmatpush1.bf16.xpose.msra.mxu0 0
        %3584 = vmatprep.subr.bf16.mxu0 0
        %3585 = vmatpush1.bf16.xpose.msra.mxu0 0
        %3586 = vmatprep.subr.bf16.mxu0 0
        %3587 = vmatpush1.bf16.xpose.msra.mxu0 0
        %3588 = vmatprep.subr.bf16.mxu0 0
        %3589 = vmatpush1.bf16.xpose.msra.mxu0 0
        %3590 = vmatprep.subr.bf16.mxu0 0
        %3591 = vmatpush1.bf16.xpose.msra.mxu0 0
        %3592 = vmatprep.subr.bf16.mxu0 0
        %3593 = vmatpush1.bf16.xpose.msra.mxu0 0
        %3594 = vmatprep.subr.bf16.mxu0 0
        %3595 = vmatpush1.bf16.xpose.msra.mxu0 0
        %3596 = vmatprep.subr.bf16.mxu0 0
        %3597 = vmatpush1.bf16.xpose.msra.mxu0 0
        %3598 = vmatprep.subr.bf16.mxu0 0
        %3599 = vmatpush1.bf16.xpose.msra.mxu0 0
        %3600 = vmatprep.subr.bf16.mxu0 0
        %3601 = vmatpush1.bf16.xpose.msra.mxu0 0
        %3602 = vmatprep.subr.bf16.mxu0 0
        %3603 = vmatpush1.bf16.xpose.msra.mxu0 0
        %3604 = vmatprep.subr.bf16.mxu0 0
        %3605 = vmatpush1.bf16.xpose.msra.mxu0 0
        %3606 = vmatprep.subr.bf16.mxu0 0
        %3607 = vmatpush1.bf16.xpose.msra.mxu0 0
        %3608 = vmatprep.subr.bf16.mxu0 0
        %3609 = vmatpush1.bf16.xpose.msra.mxu0 0
        %3610 = vmatprep.mubr.bf16.mxu0 0
        %3611 = vmatmul.mubr.bf16.gmra.mrb[0].mxu0 %v3573
        %v3612 = vpop.f32.mrb[0].mxu0
        %v3613 = vadd.f32 0.0, %v3612
        %v3614 = vpop.f32.mrb[0].mxu0
        %v3615 = vpop.f32.mrb[0].mxu0
        %v3616 = vpop.f32.mrb[0].mxu0
        %3617 = vdwg.mxu0
        %v3618 = vpack.c.b16 %v3544, %v3544
        %3619 = vrot.lane.b32.xlu0 %v3618, 80
        %v3620 = vpop.permute.xlu0 %3619
        %3621 = vrot.lane.b32.xlu0 %v3618, 16
        %v3622 = vpop.permute.xlu0 %3621
        %v3624 = vsel %vm491, %v3620, 0
        %v3627 = vsel %vm491, %v3622, 0
        %3629 = vmatprep.subr.bf16.mxu0 0
        %3630 = vmatpush1.bf16.xpose.msra.mxu0 %v3627
        %3631 = vmatprep.subr.bf16.mxu0 0
        %3632 = vmatpush1.bf16.xpose.msra.mxu0 0
        %3633 = vmatprep.subr.bf16.mxu0 0
        %3634 = vmatpush1.bf16.xpose.msra.mxu0 0
        %3635 = vmatprep.subr.bf16.mxu0 0
        %3636 = vmatpush1.bf16.xpose.msra.mxu0 0
        %3637 = vmatprep.subr.bf16.mxu0 0
        %3638 = vmatpush1.bf16.xpose.msra.mxu0 0
        %3639 = vmatprep.subr.bf16.mxu0 0
        %3640 = vmatpush1.bf16.xpose.msra.mxu0 0
        %3641 = vmatprep.subr.bf16.mxu0 0
        %3642 = vmatpush1.bf16.xpose.msra.mxu0 0
        %3643 = vmatprep.subr.bf16.mxu0 0
        %3644 = vmatpush1.bf16.xpose.msra.mxu0 0
        %3645 = vmatprep.subr.bf16.mxu0 0
        %3646 = vmatpush1.bf16.xpose.msra.mxu0 0
        %3647 = vmatprep.subr.bf16.mxu0 0
        %3648 = vmatpush1.bf16.xpose.msra.mxu0 0
        %3649 = vmatprep.subr.bf16.mxu0 0
        %3650 = vmatpush1.bf16.xpose.msra.mxu0 0
        %3651 = vmatprep.subr.bf16.mxu0 0
        %3652 = vmatpush1.bf16.xpose.msra.mxu0 0
        %3653 = vmatprep.subr.bf16.mxu0 0
        %3654 = vmatpush1.bf16.xpose.msra.mxu0 0
        %3655 = vmatprep.subr.bf16.mxu0 0
        %3656 = vmatpush1.bf16.xpose.msra.mxu0 0
        %3657 = vmatprep.subr.bf16.mxu0 0
        %3658 = vmatpush1.bf16.xpose.msra.mxu0 0
        %3659 = vmatprep.subr.bf16.mxu0 0
        %3660 = vmatpush1.bf16.xpose.msra.mxu0 0
        %3661 = vmatprep.mubr.bf16.mxu0 0
        %3662 = vmatmul.mubr.bf16.gmra.mrb[0].mxu0 %v3624
        %v3663 = vpop.f32.mrb[0].mxu0
        %v3664 = vadd.f32 0.0, %v3663
        %v3665 = vpop.f32.mrb[0].mxu0
        %v3666 = vpop.f32.mrb[0].mxu0
        %v3667 = vpop.f32.mrb[0].mxu0
        %3668 = vdwg.mxu0
        %v3669 = vpack.c.b16 %v3545, %v3545
        %3670 = vrot.lane.b32.xlu0 %v3669, 80
        %v3671 = vpop.permute.xlu0 %3670
        %3672 = vrot.lane.b32.xlu0 %v3669, 16
        %v3673 = vpop.permute.xlu0 %3672
        %v3675 = vsel %vm491, %v3671, 0
        %v3678 = vsel %vm491, %v3673, 0
        %3680 = vmatprep.subr.bf16.mxu0 0
        %3681 = vmatpush1.bf16.xpose.msra.mxu0 %v3678
        %3682 = vmatprep.subr.bf16.mxu0 0
        %3683 = vmatpush1.bf16.xpose.msra.mxu0 0
        %3684 = vmatprep.subr.bf16.mxu0 0
        %3685 = vmatpush1.bf16.xpose.msra.mxu0 0
        %3686 = vmatprep.subr.bf16.mxu0 0
        %3687 = vmatpush1.bf16.xpose.msra.mxu0 0
        %3688 = vmatprep.subr.bf16.mxu0 0
        %3689 = vmatpush1.bf16.xpose.msra.mxu0 0
        %3690 = vmatprep.subr.bf16.mxu0 0
        %3691 = vmatpush1.bf16.xpose.msra.mxu0 0
        %3692 = vmatprep.subr.bf16.mxu0 0
        %3693 = vmatpush1.bf16.xpose.msra.mxu0 0
        %3694 = vmatprep.subr.bf16.mxu0 0
        %3695 = vmatpush1.bf16.xpose.msra.mxu0 0
        %3696 = vmatprep.subr.bf16.mxu0 0
        %3697 = vmatpush1.bf16.xpose.msra.mxu0 0
        %3698 = vmatprep.subr.bf16.mxu0 0
        %3699 = vmatpush1.bf16.xpose.msra.mxu0 0
        %3700 = vmatprep.subr.bf16.mxu0 0
        %3701 = vmatpush1.bf16.xpose.msra.mxu0 0
        %3702 = vmatprep.subr.bf16.mxu0 0
        %3703 = vmatpush1.bf16.xpose.msra.mxu0 0
        %3704 = vmatprep.subr.bf16.mxu0 0
        %3705 = vmatpush1.bf16.xpose.msra.mxu0 0
        %3706 = vmatprep.subr.bf16.mxu0 0
        %3707 = vmatpush1.bf16.xpose.msra.mxu0 0
        %3708 = vmatprep.subr.bf16.mxu0 0
        %3709 = vmatpush1.bf16.xpose.msra.mxu0 0
        %3710 = vmatprep.subr.bf16.mxu0 0
        %3711 = vmatpush1.bf16.xpose.msra.mxu0 0
        %3712 = vmatprep.mubr.bf16.mxu0 0
        %3713 = vmatmul.mubr.bf16.gmra.mrb[0].mxu0 %v3675
        %v3714 = vpop.f32.mrb[0].mxu0
        %v3715 = vadd.f32 0.0, %v3714
        %v3716 = vpop.f32.mrb[0].mxu0
        %v3717 = vpop.f32.mrb[0].mxu0
        %v3718 = vpop.f32.mrb[0].mxu0
        %3719 = vdwg.mxu0
        %v3720 = vpack.c.b16 %v3546, %v3546
        %3721 = vrot.lane.b32.xlu0 %v3720, 80
        %v3722 = vpop.permute.xlu0 %3721
        %3723 = vrot.lane.b32.xlu0 %v3720, 16
        %v3724 = vpop.permute.xlu0 %3723
        %v3726 = vsel %vm491, %v3722, 0
        %v3729 = vsel %vm491, %v3724, 0
        %3731 = vmatprep.subr.bf16.mxu0 0
        %3732 = vmatpush1.bf16.xpose.msra.mxu0 %v3729
        %3733 = vmatprep.subr.bf16.mxu0 0
        %3734 = vmatpush1.bf16.xpose.msra.mxu0 0
        %3735 = vmatprep.subr.bf16.mxu0 0
        %3736 = vmatpush1.bf16.xpose.msra.mxu0 0
        %3737 = vmatprep.subr.bf16.mxu0 0
        %3738 = vmatpush1.bf16.xpose.msra.mxu0 0
        %3739 = vmatprep.subr.bf16.mxu0 0
        %3740 = vmatpush1.bf16.xpose.msra.mxu0 0
        %3741 = vmatprep.subr.bf16.mxu0 0
        %3742 = vmatpush1.bf16.xpose.msra.mxu0 0
        %3743 = vmatprep.subr.bf16.mxu0 0
        %3744 = vmatpush1.bf16.xpose.msra.mxu0 0
        %3745 = vmatprep.subr.bf16.mxu0 0
        %3746 = vmatpush1.bf16.xpose.msra.mxu0 0
        %3747 = vmatprep.subr.bf16.mxu0 0
        %3748 = vmatpush1.bf16.xpose.msra.mxu0 0
        %3749 = vmatprep.subr.bf16.mxu0 0
        %3750 = vmatpush1.bf16.xpose.msra.mxu0 0
        %3751 = vmatprep.subr.bf16.mxu0 0
        %3752 = vmatpush1.bf16.xpose.msra.mxu0 0
        %3753 = vmatprep.subr.bf16.mxu0 0
        %3754 = vmatpush1.bf16.xpose.msra.mxu0 0
        %3755 = vmatprep.subr.bf16.mxu0 0
        %3756 = vmatpush1.bf16.xpose.msra.mxu0 0
        %3757 = vmatprep.subr.bf16.mxu0 0
        %3758 = vmatpush1.bf16.xpose.msra.mxu0 0
        %3759 = vmatprep.subr.bf16.mxu0 0
        %3760 = vmatpush1.bf16.xpose.msra.mxu0 0
        %3761 = vmatprep.subr.bf16.mxu0 0
        %3762 = vmatpush1.bf16.xpose.msra.mxu0 0
        %3763 = vmatprep.mubr.bf16.mxu0 0
        %3764 = vmatmul.mubr.bf16.gmra.mrb[0].mxu0 %v3726
        %v3765 = vpop.f32.mrb[0].mxu0
        %v3766 = vadd.f32 0.0, %v3765
        %v3767 = vpop.f32.mrb[0].mxu0
        %v3768 = vpop.f32.mrb[0].mxu0
        %v3769 = vpop.f32.mrb[0].mxu0
        %3770 = vdwg.mxu0
        %v3771 = vpack.c.b16 %v3547, %v3547
        %3772 = vrot.lane.b32.xlu0 %v3771, 80
        %v3773 = vpop.permute.xlu0 %3772
        %3774 = vrot.lane.b32.xlu0 %v3771, 16
        %v3775 = vpop.permute.xlu0 %3774
        %v3777 = vsel %vm491, %v3773, 0
        %v3780 = vsel %vm491, %v3775, 0
        %3782 = vmatprep.subr.bf16.mxu0 0
        %3783 = vmatpush1.bf16.xpose.msra.mxu0 %v3780
        %3784 = vmatprep.subr.bf16.mxu0 0
        %3785 = vmatpush1.bf16.xpose.msra.mxu0 0
        %3786 = vmatprep.subr.bf16.mxu0 0
        %3787 = vmatpush1.bf16.xpose.msra.mxu0 0
        %3788 = vmatprep.subr.bf16.mxu0 0
        %3789 = vmatpush1.bf16.xpose.msra.mxu0 0
        %3790 = vmatprep.subr.bf16.mxu0 0
        %3791 = vmatpush1.bf16.xpose.msra.mxu0 0
        %3792 = vmatprep.subr.bf16.mxu0 0
        %3793 = vmatpush1.bf16.xpose.msra.mxu0 0
        %3794 = vmatprep.subr.bf16.mxu0 0
        %3795 = vmatpush1.bf16.xpose.msra.mxu0 0
        %3796 = vmatprep.subr.bf16.mxu0 0
        %3797 = vmatpush1.bf16.xpose.msra.mxu0 0
        %3798 = vmatprep.subr.bf16.mxu0 0
        %3799 = vmatpush1.bf16.xpose.msra.mxu0 0
        %3800 = vmatprep.subr.bf16.mxu0 0
        %3801 = vmatpush1.bf16.xpose.msra.mxu0 0
        %3802 = vmatprep.subr.bf16.mxu0 0
        %3803 = vmatpush1.bf16.xpose.msra.mxu0 0
        %3804 = vmatprep.subr.bf16.mxu0 0
        %3805 = vmatpush1.bf16.xpose.msra.mxu0 0
        %3806 = vmatprep.subr.bf16.mxu0 0
        %3807 = vmatpush1.bf16.xpose.msra.mxu0 0
        %3808 = vmatprep.subr.bf16.mxu0 0
        %3809 = vmatpush1.bf16.xpose.msra.mxu0 0
        %3810 = vmatprep.subr.bf16.mxu0 0
        %3811 = vmatpush1.bf16.xpose.msra.mxu0 0
        %3812 = vmatprep.subr.bf16.mxu0 0
        %3813 = vmatpush1.bf16.xpose.msra.mxu0 0
        %3814 = vmatprep.mubr.bf16.mxu0 0
        %3815 = vmatmul.mubr.bf16.gmra.mrb[0].mxu0 %v3777
        %v3816 = vpop.f32.mrb[0].mxu0
        %v3817 = vadd.f32 0.0, %v3816
        %v3818 = vpop.f32.mrb[0].mxu0
        %v3819 = vpop.f32.mrb[0].mxu0
        %v3820 = vpop.f32.mrb[0].mxu0
        %3821 = vdwg.mxu0
        %v3822 = vpack.c.b16 %v3548, %v3548
        %3823 = vrot.lane.b32.xlu0 %v3822, 80
        %v3824 = vpop.permute.xlu0 %3823
        %3825 = vrot.lane.b32.xlu0 %v3822, 16
        %v3826 = vpop.permute.xlu0 %3825
        %v3828 = vsel %vm491, %v3824, 0
        %v3831 = vsel %vm491, %v3826, 0
        %3833 = vmatprep.subr.bf16.mxu0 0
        %3834 = vmatpush1.bf16.xpose.msra.mxu0 %v3831
        %3835 = vmatprep.subr.bf16.mxu0 0
        %3836 = vmatpush1.bf16.xpose.msra.mxu0 0
        %3837 = vmatprep.subr.bf16.mxu0 0
        %3838 = vmatpush1.bf16.xpose.msra.mxu0 0
        %3839 = vmatprep.subr.bf16.mxu0 0
        %3840 = vmatpush1.bf16.xpose.msra.mxu0 0
        %3841 = vmatprep.subr.bf16.mxu0 0
        %3842 = vmatpush1.bf16.xpose.msra.mxu0 0
        %3843 = vmatprep.subr.bf16.mxu0 0
        %3844 = vmatpush1.bf16.xpose.msra.mxu0 0
        %3845 = vmatprep.subr.bf16.mxu0 0
        %3846 = vmatpush1.bf16.xpose.msra.mxu0 0
        %3847 = vmatprep.subr.bf16.mxu0 0
        %3848 = vmatpush1.bf16.xpose.msra.mxu0 0
        %3849 = vmatprep.subr.bf16.mxu0 0
        %3850 = vmatpush1.bf16.xpose.msra.mxu0 0
        %3851 = vmatprep.subr.bf16.mxu0 0
        %3852 = vmatpush1.bf16.xpose.msra.mxu0 0
        %3853 = vmatprep.subr.bf16.mxu0 0
        %3854 = vmatpush1.bf16.xpose.msra.mxu0 0
        %3855 = vmatprep.subr.bf16.mxu0 0
        %3856 = vmatpush1.bf16.xpose.msra.mxu0 0
        %3857 = vmatprep.subr.bf16.mxu0 0
        %3858 = vmatpush1.bf16.xpose.msra.mxu0 0
        %3859 = vmatprep.subr.bf16.mxu0 0
        %3860 = vmatpush1.bf16.xpose.msra.mxu0 0
        %3861 = vmatprep.subr.bf16.mxu0 0
        %3862 = vmatpush1.bf16.xpose.msra.mxu0 0
        %3863 = vmatprep.subr.bf16.mxu0 0
        %3864 = vmatpush1.bf16.xpose.msra.mxu0 0
        %3865 = vmatprep.mubr.bf16.mxu0 0
        %3866 = vmatmul.mubr.bf16.gmra.mrb[0].mxu0 %v3828
        %v3867 = vpop.f32.mrb[0].mxu0
        %v3868 = vadd.f32 0.0, %v3867
        %v3869 = vpop.f32.mrb[0].mxu0
        %v3870 = vpop.f32.mrb[0].mxu0
        %v3871 = vpop.f32.mrb[0].mxu0
        %3872 = vdwg.mxu0
        %v3873 = vpack.c.b16 %v3549, %v3549
        %3874 = vrot.lane.b32.xlu0 %v3873, 80
        %v3875 = vpop.permute.xlu0 %3874
        %3876 = vrot.lane.b32.xlu0 %v3873, 16
        %v3877 = vpop.permute.xlu0 %3876
        %v3879 = vsel %vm491, %v3875, 0
        %v3882 = vsel %vm491, %v3877, 0
        %3884 = vmatprep.subr.bf16.mxu0 0
        %3885 = vmatpush1.bf16.xpose.msra.mxu0 %v3882
        %3886 = vmatprep.subr.bf16.mxu0 0
        %3887 = vmatpush1.bf16.xpose.msra.mxu0 0
        %3888 = vmatprep.subr.bf16.mxu0 0
        %3889 = vmatpush1.bf16.xpose.msra.mxu0 0
        %3890 = vmatprep.subr.bf16.mxu0 0
        %3891 = vmatpush1.bf16.xpose.msra.mxu0 0
        %3892 = vmatprep.subr.bf16.mxu0 0
        %3893 = vmatpush1.bf16.xpose.msra.mxu0 0
        %3894 = vmatprep.subr.bf16.mxu0 0
        %3895 = vmatpush1.bf16.xpose.msra.mxu0 0
        %3896 = vmatprep.subr.bf16.mxu0 0
        %3897 = vmatpush1.bf16.xpose.msra.mxu0 0
        %3898 = vmatprep.subr.bf16.mxu0 0
        %3899 = vmatpush1.bf16.xpose.msra.mxu0 0
        %3900 = vmatprep.subr.bf16.mxu0 0
        %3901 = vmatpush1.bf16.xpose.msra.mxu0 0
        %3902 = vmatprep.subr.bf16.mxu0 0
        %3903 = vmatpush1.bf16.xpose.msra.mxu0 0
        %3904 = vmatprep.subr.bf16.mxu0 0
        %3905 = vmatpush1.bf16.xpose.msra.mxu0 0
        %3906 = vmatprep.subr.bf16.mxu0 0
        %3907 = vmatpush1.bf16.xpose.msra.mxu0 0
        %3908 = vmatprep.subr.bf16.mxu0 0
        %3909 = vmatpush1.bf16.xpose.msra.mxu0 0
        %3910 = vmatprep.subr.bf16.mxu0 0
        %3911 = vmatpush1.bf16.xpose.msra.mxu0 0
        %3912 = vmatprep.subr.bf16.mxu0 0
        %3913 = vmatpush1.bf16.xpose.msra.mxu0 0
        %3914 = vmatprep.subr.bf16.mxu0 0
        %3915 = vmatpush1.bf16.xpose.msra.mxu0 0
        %3916 = vmatprep.mubr.bf16.mxu0 0
        %3917 = vmatmul.mubr.bf16.gmra.mrb[0].mxu0 %v3879
        %v3918 = vpop.f32.mrb[0].mxu0
        %v3919 = vadd.f32 0.0, %v3918
        %v3920 = vpop.f32.mrb[0].mxu0
        %v3921 = vpop.f32.mrb[0].mxu0
        %v3922 = vpop.f32.mrb[0].mxu0
        %3923 = vdwg.mxu0
        %v3924 = vpack.c.b16 %v3550, %v3550
        %3925 = vrot.lane.b32.xlu0 %v3924, 80
        %v3926 = vpop.permute.xlu0 %3925
        %3927 = vrot.lane.b32.xlu0 %v3924, 16
        %v3928 = vpop.permute.xlu0 %3927
        %v3930 = vsel %vm491, %v3926, 0
        %v3933 = vsel %vm491, %v3928, 0
        %3935 = vmatprep.subr.bf16.mxu0 0
        %3936 = vmatpush1.bf16.xpose.msra.mxu0 %v3933
        %3937 = vmatprep.subr.bf16.mxu0 0
        %3938 = vmatpush1.bf16.xpose.msra.mxu0 0
        %3939 = vmatprep.subr.bf16.mxu0 0
        %3940 = vmatpush1.bf16.xpose.msra.mxu0 0
        %3941 = vmatprep.subr.bf16.mxu0 0
        %3942 = vmatpush1.bf16.xpose.msra.mxu0 0
        %3943 = vmatprep.subr.bf16.mxu0 0
        %3944 = vmatpush1.bf16.xpose.msra.mxu0 0
        %3945 = vmatprep.subr.bf16.mxu0 0
        %3946 = vmatpush1.bf16.xpose.msra.mxu0 0
        %3947 = vmatprep.subr.bf16.mxu0 0
        %3948 = vmatpush1.bf16.xpose.msra.mxu0 0
        %3949 = vmatprep.subr.bf16.mxu0 0
        %3950 = vmatpush1.bf16.xpose.msra.mxu0 0
        %3951 = vmatprep.subr.bf16.mxu0 0
        %3952 = vmatpush1.bf16.xpose.msra.mxu0 0
        %3953 = vmatprep.subr.bf16.mxu0 0
        %3954 = vmatpush1.bf16.xpose.msra.mxu0 0
        %3955 = vmatprep.subr.bf16.mxu0 0
        %3956 = vmatpush1.bf16.xpose.msra.mxu0 0
        %3957 = vmatprep.subr.bf16.mxu0 0
        %3958 = vmatpush1.bf16.xpose.msra.mxu0 0
        %3959 = vmatprep.subr.bf16.mxu0 0
        %3960 = vmatpush1.bf16.xpose.msra.mxu0 0
        %3961 = vmatprep.subr.bf16.mxu0 0
        %3962 = vmatpush1.bf16.xpose.msra.mxu0 0
        %3963 = vmatprep.subr.bf16.mxu0 0
        %3964 = vmatpush1.bf16.xpose.msra.mxu0 0
        %3965 = vmatprep.subr.bf16.mxu0 0
        %3966 = vmatpush1.bf16.xpose.msra.mxu0 0
        %3967 = vmatprep.mubr.bf16.mxu0 0
        %3968 = vmatmul.mubr.bf16.gmra.mrb[0].mxu0 %v3930
        %v3969 = vpop.f32.mrb[0].mxu0
        %v3970 = vadd.f32 0.0, %v3969
        %v3971 = vpop.f32.mrb[0].mxu0
        %v3972 = vpop.f32.mrb[0].mxu0
        %v3973 = vpop.f32.mrb[0].mxu0
        %3974 = vdwg.mxu0
        %v3975 = vsel %vm874, %v3613, -inf
        %3976 = vmax.xlane.f32.xlu0 %v3975
        %v3977 = vpop.xlane.xlu0 %3976
        %v3978 = vsel %vm874, %v3664, -inf
        %3979 = vmax.xlane.f32.xlu0 %v3978
        %v3980 = vpop.xlane.xlu0 %3979
        %v3981 = vsel %vm874, %v3715, -inf
        %3982 = vmax.xlane.f32.xlu0 %v3981
        %v3983 = vpop.xlane.xlu0 %3982
        %v3984 = vsel %vm874, %v3766, -inf
        %3985 = vmax.xlane.f32.xlu0 %v3984
        %v3986 = vpop.xlane.xlu0 %3985
        %v3987 = vsel %vm874, %v3817, -inf
        %3988 = vmax.xlane.f32.xlu0 %v3987
        %v3989 = vpop.xlane.xlu0 %3988
        %v3990 = vsel %vm874, %v3868, -inf
        %3991 = vmax.xlane.f32.xlu0 %v3990
        %v3992 = vpop.xlane.xlu0 %3991
        %v3993 = vsel %vm874, %v3919, -inf
        %3994 = vmax.xlane.f32.xlu0 %v3993
        %v3995 = vpop.xlane.xlu0 %3994
        %v3996 = vsel %vm874, %v3970, -inf
        %3997 = vmax.xlane.f32.xlu0 %v3996
        %v3998 = vpop.xlane.xlu0 %3997
        %v3999 = vsub.f32 %v3613, %v3977
        %v4000 = vsub.f32 %v3664, %v3980
        %v4001 = vsub.f32 %v3715, %v3983
        %v4002 = vsub.f32 %v3766, %v3986
        %v4003 = vsub.f32 %v3817, %v3989
        %v4004 = vsub.f32 %v3868, %v3992
        %v4005 = vsub.f32 %v3919, %v3995
        %v4006 = vsub.f32 %v3970, %v3998
        %v4007 = vmul.f32 %v3999, 1.442695
        %v4008 = vpow.pop %v4007
        %v4009 = vmul.f32 %v4000, 1.442695
        %v4010 = vpow.pop %v4009
        %v4011 = vmul.f32 %v4001, 1.442695
        %v4012 = vpow.pop %v4011
        %v4013 = vmul.f32 %v4002, 1.442695
        %v4014 = vpow.pop %v4013
        %v4015 = vmul.f32 %v4003, 1.442695
        %v4016 = vpow.pop %v4015
        %v4017 = vmul.f32 %v4004, 1.442695
        %v4018 = vpow.pop %v4017
        %v4019 = vmul.f32 %v4005, 1.442695
        %v4020 = vpow.pop %v4019
        %v4021 = vmul.f32 %v4006, 1.442695
        %v4022 = vpow.pop %v4021
        %v4023 = vsel %vm874, %v4008, 0.0
        %4024 = vadd.xlane.f32.xlu0 %v4023
        %v4025 = vpop.xlane.xlu0 %4024
        %v4026 = vsel %vm874, %v4010, 0.0
        %4027 = vadd.xlane.f32.xlu0 %v4026
        %v4028 = vpop.xlane.xlu0 %4027
        %v4029 = vsel %vm874, %v4012, 0.0
        %4030 = vadd.xlane.f32.xlu0 %v4029
        %v4031 = vpop.xlane.xlu0 %4030
        %v4032 = vsel %vm874, %v4014, 0.0
        %4033 = vadd.xlane.f32.xlu0 %v4032
        %v4034 = vpop.xlane.xlu0 %4033
        %v4035 = vsel %vm874, %v4016, 0.0
        %4036 = vadd.xlane.f32.xlu0 %v4035
        %v4037 = vpop.xlane.xlu0 %4036
        %v4038 = vsel %vm874, %v4018, 0.0
        %4039 = vadd.xlane.f32.xlu0 %v4038
        %v4040 = vpop.xlane.xlu0 %4039
        %v4041 = vsel %vm874, %v4020, 0.0
        %4042 = vadd.xlane.f32.xlu0 %v4041
        %v4043 = vpop.xlane.xlu0 %4042
        %v4044 = vsel %vm874, %v4022, 0.0
        %4045 = vadd.xlane.f32.xlu0 %v4044
        %v4046 = vpop.xlane.xlu0 %4045
        %v4047 = vrcp.pop %v4025
        %v4048 = vrcp.pop %v4028
        %v4049 = vrcp.pop %v4031
        %v4050 = vrcp.pop %v4034
        %v4051 = vrcp.pop %v4037
        %v4052 = vrcp.pop %v4040
        %v4053 = vrcp.pop %v4043
        %v4054 = vrcp.pop %v4046
        %v4055 = vmul.f32 %v4008, %v4047
        %v4056 = vmul.f32 %v4010, %v4048
        %v4057 = vmul.f32 %v4012, %v4049
        %v4058 = vmul.f32 %v4014, %v4050
        %v4059 = vmul.f32 %v4016, %v4051
        %v4060 = vmul.f32 %v4018, %v4052
        %v4061 = vmul.f32 %v4020, %v4053
        %v4062 = vmul.f32 %v4022, %v4054
        %v4063 = vpack.c.bf16 %v4055, %v4055
        %v4064 = vpack.c.bf16 %v4056, %v4056
        %v4065 = vpack.c.bf16 %v4057, %v4057
        %v4066 = vpack.c.bf16 %v4058, %v4058
        %v4067 = vpack.c.bf16 %v4059, %v4059
        %v4068 = vpack.c.bf16 %v4060, %v4060
        %v4069 = vpack.c.bf16 %v4061, %v4061
        %v4070 = vpack.c.bf16 %v4062, %v4062
        %v4071 = vpack.c.b16 %v3559, %v3559
        %4072 = vrot.lane.b32.xlu0 %v4071, 80
        %v4073 = vpop.permute.xlu0 %4072
        %v4075 = vsel %vm874, %v4063, 0
        %v4078 = vsel %vm974, %v4073, 0
        %4080 = vmatprep.subr.bf16.mxu0 0
        %4081 = vmatpush1.bf16.msra.mxu0 %v4078
        %4082 = vmatprep.subr.bf16.mxu0 0
        %4083 = vmatpush1.bf16.msra.mxu0 0
        %4084 = vmatprep.subr.bf16.mxu0 0
        %4085 = vmatpush1.bf16.msra.mxu0 0
        %4086 = vmatprep.subr.bf16.mxu0 0
        %4087 = vmatpush1.bf16.msra.mxu0 0
        %4088 = vmatprep.subr.bf16.mxu0 0
        %4089 = vmatpush1.bf16.msra.mxu0 0
        %4090 = vmatprep.subr.bf16.mxu0 0
        %4091 = vmatpush1.bf16.msra.mxu0 0
        %4092 = vmatprep.subr.bf16.mxu0 0
        %4093 = vmatpush1.bf16.msra.mxu0 0
        %4094 = vmatprep.subr.bf16.mxu0 0
        %4095 = vmatpush1.bf16.msra.mxu0 0
        %4096 = vmatprep.subr.bf16.mxu0 0
        %4097 = vmatpush1.bf16.msra.mxu0 0
        %4098 = vmatprep.subr.bf16.mxu0 0
        %4099 = vmatpush1.bf16.msra.mxu0 0
        %4100 = vmatprep.subr.bf16.mxu0 0
        %4101 = vmatpush1.bf16.msra.mxu0 0
        %4102 = vmatprep.subr.bf16.mxu0 0
        %4103 = vmatpush1.bf16.msra.mxu0 0
        %4104 = vmatprep.subr.bf16.mxu0 0
        %4105 = vmatpush1.bf16.msra.mxu0 0
        %4106 = vmatprep.subr.bf16.mxu0 0
        %4107 = vmatpush1.bf16.msra.mxu0 0
        %4108 = vmatprep.subr.bf16.mxu0 0
        %4109 = vmatpush1.bf16.msra.mxu0 0
        %4110 = vmatprep.subr.bf16.mxu0 0
        %4111 = vmatpush1.bf16.msra.mxu0 0
        %4112 = vmatprep.mubr.bf16.mxu0 0
        %4113 = vmatmul.mubr.bf16.gmra.mrb[0].mxu0 %v4075
        %v4114 = vpop.f32.mrb[0].mxu0
        %v4115 = vadd.f32 0.0, %v4114
        %v4116 = vpop.f32.mrb[0].mxu0
        %v4117 = vpop.f32.mrb[0].mxu0
        %v4118 = vpop.f32.mrb[0].mxu0
        %4119 = vdwg.mxu0
        %v4120 = vpack.c.b16 %v3560, %v3560
        %4121 = vrot.lane.b32.xlu0 %v4120, 80
        %v4122 = vpop.permute.xlu0 %4121
        %v4124 = vsel %vm874, %v4064, 0
        %v4127 = vsel %vm974, %v4122, 0
        %4129 = vmatprep.subr.bf16.mxu0 0
        %4130 = vmatpush1.bf16.msra.mxu0 %v4127
        %4131 = vmatprep.subr.bf16.mxu0 0
        %4132 = vmatpush1.bf16.msra.mxu0 0
        %4133 = vmatprep.subr.bf16.mxu0 0
        %4134 = vmatpush1.bf16.msra.mxu0 0
        %4135 = vmatprep.subr.bf16.mxu0 0
        %4136 = vmatpush1.bf16.msra.mxu0 0
        %4137 = vmatprep.subr.bf16.mxu0 0
        %4138 = vmatpush1.bf16.msra.mxu0 0
        %4139 = vmatprep.subr.bf16.mxu0 0
        %4140 = vmatpush1.bf16.msra.mxu0 0
        %4141 = vmatprep.subr.bf16.mxu0 0
        %4142 = vmatpush1.bf16.msra.mxu0 0
        %4143 = vmatprep.subr.bf16.mxu0 0
        %4144 = vmatpush1.bf16.msra.mxu0 0
        %4145 = vmatprep.subr.bf16.mxu0 0
        %4146 = vmatpush1.bf16.msra.mxu0 0
        %4147 = vmatprep.subr.bf16.mxu0 0
        %4148 = vmatpush1.bf16.msra.mxu0 0
        %4149 = vmatprep.subr.bf16.mxu0 0
        %4150 = vmatpush1.bf16.msra.mxu0 0
        %4151 = vmatprep.subr.bf16.mxu0 0
        %4152 = vmatpush1.bf16.msra.mxu0 0
        %4153 = vmatprep.subr.bf16.mxu0 0
        %4154 = vmatpush1.bf16.msra.mxu0 0
        %4155 = vmatprep.subr.bf16.mxu0 0
        %4156 = vmatpush1.bf16.msra.mxu0 0
        %4157 = vmatprep.subr.bf16.mxu0 0
        %4158 = vmatpush1.bf16.msra.mxu0 0
        %4159 = vmatprep.subr.bf16.mxu0 0
        %4160 = vmatpush1.bf16.msra.mxu0 0
        %4161 = vmatprep.mubr.bf16.mxu0 0
        %4162 = vmatmul.mubr.bf16.gmra.mrb[0].mxu0 %v4124
        %v4163 = vpop.f32.mrb[0].mxu0
        %v4164 = vadd.f32 0.0, %v4163
        %v4165 = vpop.f32.mrb[0].mxu0
        %v4166 = vpop.f32.mrb[0].mxu0
        %v4167 = vpop.f32.mrb[0].mxu0
        %4168 = vdwg.mxu0
        %v4169 = vpack.c.b16 %v3561, %v3561
        %4170 = vrot.lane.b32.xlu0 %v4169, 80
        %v4171 = vpop.permute.xlu0 %4170
        %v4173 = vsel %vm874, %v4065, 0
        %v4176 = vsel %vm974, %v4171, 0
        %4178 = vmatprep.subr.bf16.mxu0 0
        %4179 = vmatpush1.bf16.msra.mxu0 %v4176
        %4180 = vmatprep.subr.bf16.mxu0 0
        %4181 = vmatpush1.bf16.msra.mxu0 0
        %4182 = vmatprep.subr.bf16.mxu0 0
        %4183 = vmatpush1.bf16.msra.mxu0 0
        %4184 = vmatprep.subr.bf16.mxu0 0
        %4185 = vmatpush1.bf16.msra.mxu0 0
        %4186 = vmatprep.subr.bf16.mxu0 0
        %4187 = vmatpush1.bf16.msra.mxu0 0
        %4188 = vmatprep.subr.bf16.mxu0 0
        %4189 = vmatpush1.bf16.msra.mxu0 0
        %4190 = vmatprep.subr.bf16.mxu0 0
        %4191 = vmatpush1.bf16.msra.mxu0 0
        %4192 = vmatprep.subr.bf16.mxu0 0
        %4193 = vmatpush1.bf16.msra.mxu0 0
        %4194 = vmatprep.subr.bf16.mxu0 0
        %4195 = vmatpush1.bf16.msra.mxu0 0
        %4196 = vmatprep.subr.bf16.mxu0 0
        %4197 = vmatpush1.bf16.msra.mxu0 0
        %4198 = vmatprep.subr.bf16.mxu0 0
        %4199 = vmatpush1.bf16.msra.mxu0 0
        %4200 = vmatprep.subr.bf16.mxu0 0
        %4201 = vmatpush1.bf16.msra.mxu0 0
        %4202 = vmatprep.subr.bf16.mxu0 0
        %4203 = vmatpush1.bf16.msra.mxu0 0
        %4204 = vmatprep.subr.bf16.mxu0 0
        %4205 = vmatpush1.bf16.msra.mxu0 0
        %4206 = vmatprep.subr.bf16.mxu0 0
        %4207 = vmatpush1.bf16.msra.mxu0 0
        %4208 = vmatprep.subr.bf16.mxu0 0
        %4209 = vmatpush1.bf16.msra.mxu0 0
        %4210 = vmatprep.mubr.bf16.mxu0 0
        %4211 = vmatmul.mubr.bf16.gmra.mrb[0].mxu0 %v4173
        %v4212 = vpop.f32.mrb[0].mxu0
        %v4213 = vadd.f32 0.0, %v4212
        %v4214 = vpop.f32.mrb[0].mxu0
        %v4215 = vpop.f32.mrb[0].mxu0
        %v4216 = vpop.f32.mrb[0].mxu0
        %4217 = vdwg.mxu0
        %v4218 = vpack.c.b16 %v3562, %v3562
        %4219 = vrot.lane.b32.xlu0 %v4218, 80
        %v4220 = vpop.permute.xlu0 %4219
        %v4222 = vsel %vm874, %v4066, 0
        %v4225 = vsel %vm974, %v4220, 0
        %4227 = vmatprep.subr.bf16.mxu0 0
        %4228 = vmatpush1.bf16.msra.mxu0 %v4225
        %4229 = vmatprep.subr.bf16.mxu0 0
        %4230 = vmatpush1.bf16.msra.mxu0 0
        %4231 = vmatprep.subr.bf16.mxu0 0
        %4232 = vmatpush1.bf16.msra.mxu0 0
        %4233 = vmatprep.subr.bf16.mxu0 0
        %4234 = vmatpush1.bf16.msra.mxu0 0
        %4235 = vmatprep.subr.bf16.mxu0 0
        %4236 = vmatpush1.bf16.msra.mxu0 0
        %4237 = vmatprep.subr.bf16.mxu0 0
        %4238 = vmatpush1.bf16.msra.mxu0 0
        %4239 = vmatprep.subr.bf16.mxu0 0
        %4240 = vmatpush1.bf16.msra.mxu0 0
        %4241 = vmatprep.subr.bf16.mxu0 0
        %4242 = vmatpush1.bf16.msra.mxu0 0
        %4243 = vmatprep.subr.bf16.mxu0 0
        %4244 = vmatpush1.bf16.msra.mxu0 0
        %4245 = vmatprep.subr.bf16.mxu0 0
        %4246 = vmatpush1.bf16.msra.mxu0 0
        %4247 = vmatprep.subr.bf16.mxu0 0
        %4248 = vmatpush1.bf16.msra.mxu0 0
        %4249 = vmatprep.subr.bf16.mxu0 0
        %4250 = vmatpush1.bf16.msra.mxu0 0
        %4251 = vmatprep.subr.bf16.mxu0 0
        %4252 = vmatpush1.bf16.msra.mxu0 0
        %4253 = vmatprep.subr.bf16.mxu0 0
        %4254 = vmatpush1.bf16.msra.mxu0 0
        %4255 = vmatprep.subr.bf16.mxu0 0
        %4256 = vmatpush1.bf16.msra.mxu0 0
        %4257 = vmatprep.subr.bf16.mxu0 0
        %4258 = vmatpush1.bf16.msra.mxu0 0
        %4259 = vmatprep.mubr.bf16.mxu0 0
        %4260 = vmatmul.mubr.bf16.gmra.mrb[0].mxu0 %v4222
        %v4261 = vpop.f32.mrb[0].mxu0
        %v4262 = vadd.f32 0.0, %v4261
        %v4263 = vpop.f32.mrb[0].mxu0
        %v4264 = vpop.f32.mrb[0].mxu0
        %v4265 = vpop.f32.mrb[0].mxu0
        %4266 = vdwg.mxu0
        %v4267 = vpack.c.b16 %v3563, %v3563
        %4268 = vrot.lane.b32.xlu0 %v4267, 80
        %v4269 = vpop.permute.xlu0 %4268
        %v4271 = vsel %vm874, %v4067, 0
        %v4274 = vsel %vm974, %v4269, 0
        %4276 = vmatprep.subr.bf16.mxu0 0
        %4277 = vmatpush1.bf16.msra.mxu0 %v4274
        %4278 = vmatprep.subr.bf16.mxu0 0
        %4279 = vmatpush1.bf16.msra.mxu0 0
        %4280 = vmatprep.subr.bf16.mxu0 0
        %4281 = vmatpush1.bf16.msra.mxu0 0
        %4282 = vmatprep.subr.bf16.mxu0 0
        %4283 = vmatpush1.bf16.msra.mxu0 0
        %4284 = vmatprep.subr.bf16.mxu0 0
        %4285 = vmatpush1.bf16.msra.mxu0 0
        %4286 = vmatprep.subr.bf16.mxu0 0
        %4287 = vmatpush1.bf16.msra.mxu0 0
        %4288 = vmatprep.subr.bf16.mxu0 0
        %4289 = vmatpush1.bf16.msra.mxu0 0
        %4290 = vmatprep.subr.bf16.mxu0 0
        %4291 = vmatpush1.bf16.msra.mxu0 0
        %4292 = vmatprep.subr.bf16.mxu0 0
        %4293 = vmatpush1.bf16.msra.mxu0 0
        %4294 = vmatprep.subr.bf16.mxu0 0
        %4295 = vmatpush1.bf16.msra.mxu0 0
        %4296 = vmatprep.subr.bf16.mxu0 0
        %4297 = vmatpush1.bf16.msra.mxu0 0
        %4298 = vmatprep.subr.bf16.mxu0 0
        %4299 = vmatpush1.bf16.msra.mxu0 0
        %4300 = vmatprep.subr.bf16.mxu0 0
        %4301 = vmatpush1.bf16.msra.mxu0 0
        %4302 = vmatprep.subr.bf16.mxu0 0
        %4303 = vmatpush1.bf16.msra.mxu0 0
        %4304 = vmatprep.subr.bf16.mxu0 0
        %4305 = vmatpush1.bf16.msra.mxu0 0
        %4306 = vmatprep.subr.bf16.mxu0 0
        %4307 = vmatpush1.bf16.msra.mxu0 0
        %4308 = vmatprep.mubr.bf16.mxu0 0
        %4309 = vmatmul.mubr.bf16.gmra.mrb[0].mxu0 %v4271
        %v4310 = vpop.f32.mrb[0].mxu0
        %v4311 = vadd.f32 0.0, %v4310
        %v4312 = vpop.f32.mrb[0].mxu0
        %v4313 = vpop.f32.mrb[0].mxu0
        %v4314 = vpop.f32.mrb[0].mxu0
        %4315 = vdwg.mxu0
        %v4316 = vpack.c.b16 %v3564, %v3564
        %4317 = vrot.lane.b32.xlu0 %v4316, 80
        %v4318 = vpop.permute.xlu0 %4317
        %v4320 = vsel %vm874, %v4068, 0
        %v4323 = vsel %vm974, %v4318, 0
        %4325 = vmatprep.subr.bf16.mxu0 0
        %4326 = vmatpush1.bf16.msra.mxu0 %v4323
        %4327 = vmatprep.subr.bf16.mxu0 0
        %4328 = vmatpush1.bf16.msra.mxu0 0
        %4329 = vmatprep.subr.bf16.mxu0 0
        %4330 = vmatpush1.bf16.msra.mxu0 0
        %4331 = vmatprep.subr.bf16.mxu0 0
        %4332 = vmatpush1.bf16.msra.mxu0 0
        %4333 = vmatprep.subr.bf16.mxu0 0
        %4334 = vmatpush1.bf16.msra.mxu0 0
        %4335 = vmatprep.subr.bf16.mxu0 0
        %4336 = vmatpush1.bf16.msra.mxu0 0
        %4337 = vmatprep.subr.bf16.mxu0 0
        %4338 = vmatpush1.bf16.msra.mxu0 0
        %4339 = vmatprep.subr.bf16.mxu0 0
        %4340 = vmatpush1.bf16.msra.mxu0 0
        %4341 = vmatprep.subr.bf16.mxu0 0
        %4342 = vmatpush1.bf16.msra.mxu0 0
        %4343 = vmatprep.subr.bf16.mxu0 0
        %4344 = vmatpush1.bf16.msra.mxu0 0
        %4345 = vmatprep.subr.bf16.mxu0 0
        %4346 = vmatpush1.bf16.msra.mxu0 0
        %4347 = vmatprep.subr.bf16.mxu0 0
        %4348 = vmatpush1.bf16.msra.mxu0 0
        %4349 = vmatprep.subr.bf16.mxu0 0
        %4350 = vmatpush1.bf16.msra.mxu0 0
        %4351 = vmatprep.subr.bf16.mxu0 0
        %4352 = vmatpush1.bf16.msra.mxu0 0
        %4353 = vmatprep.subr.bf16.mxu0 0
        %4354 = vmatpush1.bf16.msra.mxu0 0
        %4355 = vmatprep.subr.bf16.mxu0 0
        %4356 = vmatpush1.bf16.msra.mxu0 0
        %4357 = vmatprep.mubr.bf16.mxu0 0
        %4358 = vmatmul.mubr.bf16.gmra.mrb[0].mxu0 %v4320
        %v4359 = vpop.f32.mrb[0].mxu0
        %v4360 = vadd.f32 0.0, %v4359
        %v4361 = vpop.f32.mrb[0].mxu0
        %v4362 = vpop.f32.mrb[0].mxu0
        %v4363 = vpop.f32.mrb[0].mxu0
        %4364 = vdwg.mxu0
        %v4365 = vpack.c.b16 %v3565, %v3565
        %4366 = vrot.lane.b32.xlu0 %v4365, 80
        %v4367 = vpop.permute.xlu0 %4366
        %v4369 = vsel %vm874, %v4069, 0
        %v4372 = vsel %vm974, %v4367, 0
        %4374 = vmatprep.subr.bf16.mxu0 0
        %4375 = vmatpush1.bf16.msra.mxu0 %v4372
        %4376 = vmatprep.subr.bf16.mxu0 0
        %4377 = vmatpush1.bf16.msra.mxu0 0
        %4378 = vmatprep.subr.bf16.mxu0 0
        %4379 = vmatpush1.bf16.msra.mxu0 0
        %4380 = vmatprep.subr.bf16.mxu0 0
        %4381 = vmatpush1.bf16.msra.mxu0 0
        %4382 = vmatprep.subr.bf16.mxu0 0
        %4383 = vmatpush1.bf16.msra.mxu0 0
        %4384 = vmatprep.subr.bf16.mxu0 0
        %4385 = vmatpush1.bf16.msra.mxu0 0
        %4386 = vmatprep.subr.bf16.mxu0 0
        %4387 = vmatpush1.bf16.msra.mxu0 0
        %4388 = vmatprep.subr.bf16.mxu0 0
        %4389 = vmatpush1.bf16.msra.mxu0 0
        %4390 = vmatprep.subr.bf16.mxu0 0
        %4391 = vmatpush1.bf16.msra.mxu0 0
        %4392 = vmatprep.subr.bf16.mxu0 0
        %4393 = vmatpush1.bf16.msra.mxu0 0
        %4394 = vmatprep.subr.bf16.mxu0 0
        %4395 = vmatpush1.bf16.msra.mxu0 0
        %4396 = vmatprep.subr.bf16.mxu0 0
        %4397 = vmatpush1.bf16.msra.mxu0 0
        %4398 = vmatprep.subr.bf16.mxu0 0
        %4399 = vmatpush1.bf16.msra.mxu0 0
        %4400 = vmatprep.subr.bf16.mxu0 0
        %4401 = vmatpush1.bf16.msra.mxu0 0
        %4402 = vmatprep.subr.bf16.mxu0 0
        %4403 = vmatpush1.bf16.msra.mxu0 0
        %4404 = vmatprep.subr.bf16.mxu0 0
        %4405 = vmatpush1.bf16.msra.mxu0 0
        %4406 = vmatprep.mubr.bf16.mxu0 0
        %4407 = vmatmul.mubr.bf16.gmra.mrb[0].mxu0 %v4369
        %v4408 = vpop.f32.mrb[0].mxu0
        %v4409 = vadd.f32 0.0, %v4408
        %v4410 = vpop.f32.mrb[0].mxu0
        %v4411 = vpop.f32.mrb[0].mxu0
        %v4412 = vpop.f32.mrb[0].mxu0
        %4413 = vdwg.mxu0
        %v4414 = vpack.c.b16 %v3566, %v3566
        %4415 = vrot.lane.b32.xlu0 %v4414, 80
        %v4416 = vpop.permute.xlu0 %4415
        %v4418 = vsel %vm874, %v4070, 0
        %v4421 = vsel %vm974, %v4416, 0
        %4423 = vmatprep.subr.bf16.mxu0 0
        %4424 = vmatpush1.bf16.msra.mxu0 %v4421
        %4425 = vmatprep.subr.bf16.mxu0 0
        %4426 = vmatpush1.bf16.msra.mxu0 0
        %4427 = vmatprep.subr.bf16.mxu0 0
        %4428 = vmatpush1.bf16.msra.mxu0 0
        %4429 = vmatprep.subr.bf16.mxu0 0
        %4430 = vmatpush1.bf16.msra.mxu0 0
        %4431 = vmatprep.subr.bf16.mxu0 0
        %4432 = vmatpush1.bf16.msra.mxu0 0
        %4433 = vmatprep.subr.bf16.mxu0 0
        %4434 = vmatpush1.bf16.msra.mxu0 0
        %4435 = vmatprep.subr.bf16.mxu0 0
        %4436 = vmatpush1.bf16.msra.mxu0 0
        %4437 = vmatprep.subr.bf16.mxu0 0
        %4438 = vmatpush1.bf16.msra.mxu0 0
        %4439 = vmatprep.subr.bf16.mxu0 0
        %4440 = vmatpush1.bf16.msra.mxu0 0
        %4441 = vmatprep.subr.bf16.mxu0 0
        %4442 = vmatpush1.bf16.msra.mxu0 0
        %4443 = vmatprep.subr.bf16.mxu0 0
        %4444 = vmatpush1.bf16.msra.mxu0 0
        %4445 = vmatprep.subr.bf16.mxu0 0
        %4446 = vmatpush1.bf16.msra.mxu0 0
        %4447 = vmatprep.subr.bf16.mxu0 0
        %4448 = vmatpush1.bf16.msra.mxu0 0
        %4449 = vmatprep.subr.bf16.mxu0 0
        %4450 = vmatpush1.bf16.msra.mxu0 0
        %4451 = vmatprep.subr.bf16.mxu0 0
        %4452 = vmatpush1.bf16.msra.mxu0 0
        %4453 = vmatprep.subr.bf16.mxu0 0
        %4454 = vmatpush1.bf16.msra.mxu0 0
        %4455 = vmatprep.mubr.bf16.mxu0 0
        %4456 = vmatmul.mubr.bf16.gmra.mrb[0].mxu0 %v4418
        %v4457 = vpop.f32.mrb[0].mxu0
        %v4458 = vadd.f32 0.0, %v4457
        %v4459 = vpop.f32.mrb[0].mxu0
        %v4460 = vpop.f32.mrb[0].mxu0
        %v4461 = vpop.f32.mrb[0].mxu0
        %4462 = vdwg.mxu0
        %v4463 = vld [vmem:[#allocation3] sm:$0xff]
        %v4464 = vld [vmem:[#allocation3 + $0x8] sm:$0xff]
        %v4465 = vld [vmem:[#allocation3 + $0x10] sm:$0xff]
        %v4466 = vld [vmem:[#allocation3 + $0x18] sm:$0xff]
        %v4467 = vld [vmem:[#allocation3 + $0x20] sm:$0xff]
        %v4468 = vld [vmem:[#allocation3 + $0x28] sm:$0xff]
        %v4469 = vld [vmem:[#allocation3 + $0x30] sm:$0xff]
        %v4470 = vld [vmem:[#allocation3 + $0x38] sm:$0xff]
        %v4471 = vpack.c.bf16 %v4164, %v4115
        %v4472 = vpack.c.bf16 %v4262, %v4213
        %v4473 = vpack.c.bf16 %v4360, %v4311
        %v4474 = vpack.c.bf16 %v4458, %v4409
        %v4475 = vld [vmem:[#allocation9 + $0x18] sm:$0xf]
        %v4476 = vld [vmem:[#allocation9 + $0x1c] sm:$0xf]
        %v4479 = vunpack.c.l.b16 %v4475
        %v4480 = vunpack.c.l.b16 %v4476
        %v4481 = vpack.c.b16 %v4480, %v4479
        %v4484 = vsel %vm491, %v4471, 0
        %v4487 = vsel %vm491, %v4472, 0
        %v4490 = vsel %vm491, %v4473, 0
        %v4493 = vsel %vm491, %v4474, 0
        %4495 = vmatprep.subr.bf16.mxu0 0
        %4496 = vmatpush1.bf16.msra.mxu0 %v4481
        %4497 = vmatprep.subr.bf16.mxu0 0
        %4498 = vmatpush1.bf16.msra.mxu0 0
        %4499 = vmatprep.subr.bf16.mxu0 0
        %4500 = vmatpush1.bf16.msra.mxu0 0
        %4501 = vmatprep.subr.bf16.mxu0 0
        %4502 = vmatpush1.bf16.msra.mxu0 0
        %4503 = vmatprep.subr.bf16.mxu0 0
        %4504 = vmatpush1.bf16.msra.mxu0 0
        %4505 = vmatprep.subr.bf16.mxu0 0
        %4506 = vmatpush1.bf16.msra.mxu0 0
        %4507 = vmatprep.subr.bf16.mxu0 0
        %4508 = vmatpush1.bf16.msra.mxu0 0
        %4509 = vmatprep.subr.bf16.mxu0 0
        %4510 = vmatpush1.bf16.msra.mxu0 0
        %4511 = vmatprep.subr.bf16.mxu0 0
        %4512 = vmatpush1.bf16.msra.mxu0 0
        %4513 = vmatprep.subr.bf16.mxu0 0
        %4514 = vmatpush1.bf16.msra.mxu0 0
        %4515 = vmatprep.subr.bf16.mxu0 0
        %4516 = vmatpush1.bf16.msra.mxu0 0
        %4517 = vmatprep.subr.bf16.mxu0 0
        %4518 = vmatpush1.bf16.msra.mxu0 0
        %4519 = vmatprep.subr.bf16.mxu0 0
        %4520 = vmatpush1.bf16.msra.mxu0 0
        %4521 = vmatprep.subr.bf16.mxu0 0
        %4522 = vmatpush1.bf16.msra.mxu0 0
        %4523 = vmatprep.subr.bf16.mxu0 0
        %4524 = vmatpush1.bf16.msra.mxu0 0
        %4525 = vmatprep.subr.bf16.mxu0 0
        %4526 = vmatpush1.bf16.msra.mxu0 0
        %4527 = vmatprep.mubr.bf16.mxu0 0
        %4528 = vmatmul.mubr.bf16.gmra.mrb[0].mxu0 %v4484
        %v4529 = vpop.f32.mrb[0].mxu0
        %v4530 = vadd.f32 0.0, %v4529
        %v4531 = vpop.f32.mrb[0].mxu0
        %v4532 = vpop.f32.mrb[0].mxu0
        %v4533 = vadd.f32 0.0, %v4532
        %v4534 = vpop.f32.mrb[0].mxu0
        %4535 = vmatprep.mubr.bf16.mxu0 0
        %4536 = vmatmul.mubr.bf16.gmra.mrb[0].mxu0 %v4487
        %v4537 = vpop.f32.mrb[0].mxu0
        %v4538 = vadd.f32 0.0, %v4537
        %v4539 = vpop.f32.mrb[0].mxu0
        %v4540 = vpop.f32.mrb[0].mxu0
        %v4541 = vadd.f32 0.0, %v4540
        %v4542 = vpop.f32.mrb[0].mxu0
        %4543 = vmatprep.mubr.bf16.mxu0 0
        %4544 = vmatmul.mubr.bf16.gmra.mrb[0].mxu0 %v4490
        %v4545 = vpop.f32.mrb[0].mxu0
        %v4546 = vadd.f32 0.0, %v4545
        %v4547 = vpop.f32.mrb[0].mxu0
        %v4548 = vpop.f32.mrb[0].mxu0
        %v4549 = vadd.f32 0.0, %v4548
        %v4550 = vpop.f32.mrb[0].mxu0
        %4551 = vmatprep.mubr.bf16.mxu0 0
        %4552 = vmatmul.mubr.bf16.gmra.mrb[0].mxu0 %v4493
        %v4553 = vpop.f32.mrb[0].mxu0
        %v4554 = vadd.f32 0.0, %v4553
        %v4555 = vpop.f32.mrb[0].mxu0
        %v4556 = vpop.f32.mrb[0].mxu0
        %v4557 = vadd.f32 0.0, %v4556
        %v4558 = vpop.f32.mrb[0].mxu0
        %4559 = vdwg.mxu0
        %v4560 = vadd.f32 %v4463, %v4530
        %v4561 = vadd.f32 %v4464, %v4533
        %v4562 = vadd.f32 %v4465, %v4538
        %v4563 = vadd.f32 %v4466, %v4541
        %v4564 = vadd.f32 %v4467, %v4546
        %v4565 = vadd.f32 %v4468, %v4549
        %v4566 = vadd.f32 %v4469, %v4554
        %v4567 = vadd.f32 %v4470, %v4557
        %4568 = vst.msk [vmem:[#allocation3] sm:$0xff] %vm324, %v4560
        %4569 = vst.msk [vmem:[#allocation3 + $0x8] sm:$0xff] %vm324, %v4561
        %4570 = vst.msk [vmem:[#allocation3 + $0x10] sm:$0xff] %vm324, %v4562
        %4571 = vst.msk [vmem:[#allocation3 + $0x18] sm:$0xff] %vm324, %v4563
        %4572 = vst.msk [vmem:[#allocation3 + $0x20] sm:$0xff] %vm324, %v4564
        %4573 = vst.msk [vmem:[#allocation3 + $0x28] sm:$0xff] %vm324, %v4565
        %4574 = vst.msk [vmem:[#allocation3 + $0x30] sm:$0xff] %vm324, %v4566
        %4575 = vst.msk [vmem:[#allocation3 + $0x38] sm:$0xff] %vm324, %v4567
        %v4576 = vld [vmem:[#allocation3] sm:$0xff]
        %v4577 = vld [vmem:[#allocation3 + $0x8] sm:$0xff]
        %v4578 = vld [vmem:[#allocation3 + $0x10] sm:$0xff]
        %v4579 = vld [vmem:[#allocation3 + $0x18] sm:$0xff]
        %v4580 = vld [vmem:[#allocation3 + $0x20] sm:$0xff]
        %v4581 = vld [vmem:[#allocation3 + $0x28] sm:$0xff]
        %v4582 = vld [vmem:[#allocation3 + $0x30] sm:$0xff]
        %v4583 = vld [vmem:[#allocation3 + $0x38] sm:$0xff]
        %4584 = vst.msk [vmem:[%s244] sm:$0xff] %vm324, %v4576
        %4585 = vst.msk [vmem:[%s244 + $0x8] sm:$0xff] %vm324, %v4577
        %4586 = vst.msk [vmem:[%s244 + $0x10] sm:$0xff] %vm324, %v4578
        %4587 = vst.msk [vmem:[%s244 + $0x18] sm:$0xff] %vm324, %v4579
        %4588 = vst.msk [vmem:[%s244 + $0x20] sm:$0xff] %vm324, %v4580
        %4589 = vst.msk [vmem:[%s244 + $0x28] sm:$0xff] %vm324, %v4581
        %4590 = vst.msk [vmem:[%s244 + $0x30] sm:$0xff] %vm324, %v4582
        %4591 = vst.msk [vmem:[%s244 + $0x38] sm:$0xff] %vm324, %v4583
        %s4592 = sand.u32 %s119, 1
        %s4593 = scalar_lea.sflag [#allocation6], %s4592
        %s4594 = sand.u32 %s119, 1
        %s4595 = smul.addr %s4594, 64
        %s4596 = scalar_lea.vmem [#allocation10], %s4595
        // Predicated region
        $region49: #{tpu_custom_call.1} parent=35 // pred_check
          %p4597 = pneg %p129
        $region50: #{tpu_custom_call.1} parent=35 // pred_check_branch
          %4599 = sbr.rel (%p4597) target = $region52
        $region51: #{tpu_custom_call.1} parent=35 // pred_region
          %s4600 = smul.u32 8, %s22
          %s4602 = ssub.s32 1024, 1024
          %4603 = vsyncadd %s4593, %s4602
          %s4604 = smul.addr %s4600, 128
          %s4605 = scalar_lea.hbm %s4, %s4604
          %s4606 = sshll.u32 %s4596, 4
          %s4607 = int_to_ptr.vmem [resolvable:$true] %s4606
          %4612 = dma.vmem_to_hbm [thread:$0]  %s4607, 1024, %s4605, %s4593, 128, 128, 8
        $region52: #{tpu_custom_call.1} parent=35 // pred_fallthru
          _
      $region36: #{tpu_custom_call.1} parent=5 // pred_fallthru
        _
      %p4613 = scmp.le.s32.totalorder 2, %s17
      // Predicated region
      $region53: #{tpu_custom_call.1} parent=5 // pred_check
        %p4614 = pneg %p4613
      $region54: #{tpu_custom_call.1} parent=5 // pred_check_branch
        %4616 = sbr.rel (%p4614) target = $region56
      $region55: #{tpu_custom_call.1} parent=5 // pred_region
        %s4617 = ssub.s32 %s17, 2
        // Predicated region
        $region57: #{tpu_custom_call.1} parent=55 // pred_check
          %p4618 = pneg %p135
        $region58: #{tpu_custom_call.1} parent=55 // pred_check_branch
          %4620 = sbr.rel (%p4618) target = $region60
        $region59: #{tpu_custom_call.1} parent=55 // pred_region
          %s4621 = sand.u32 %s120, 1
          %s4622 = scalar_lea.sflag [#allocation6], %s4621
          %s4623 = sand.u32 %s120, 1
          %s4624 = smul.addr %s4623, 64
          %s4625 = scalar_lea.vmem [#allocation10], %s4624
          %4626 = dma.done %s4622, 1024
        $region60: #{tpu_custom_call.1} parent=55 // pred_fallthru
          _
      $region56: #{tpu_custom_call.1} parent=5 // pred_fallthru
        _
    $region6: #{tpu_custom_call.1} parent=1 // loop_footer
      %s21 = sadd.s32 1, %s17
    $region7: #{tpu_custom_call.1} parent=1 // loop_footer_branch
      %16 = sbr.rel target = $region3
    $region8: #{tpu_custom_call.1} parent=1 // loop_exit
      _
    %4627 = vsyncpa [#allocation5], 1
    %s4628 = scalar_lea.sflag [#allocation5], 1
    %4629 = vsyncpa %s4628, 1
    %4630 = vsyncpa [#allocation8], 1
    %4631 = vsyncpa [#allocation6], 1
    %s4632 = scalar_lea.sflag [#allocation6], 1
    %4633 = vsyncpa %s4632, 1

</llo_original>
